<compile_context>
chip_gen: v6e
topology: v6e:2x2x1
jax: 0.10.0
libtpu: 0.0.40
codegen_flags: <defaults>
</compile_context>

<pallas_src>
import functools

import numpy as np
import jax
import jax.numpy as jnp
from jax.experimental import pallas as pl
from jax.experimental.pallas import tpu as pltpu


# ----------------------------------------------------------------------------
# Sinusoid positional-encoding table (same math as the PyTorch module).
# ----------------------------------------------------------------------------
def _get_sinusoid_encoding_table(n_position: int, d_hid: int) -> np.ndarray:
    def angle_vec(pos):
        return [pos / np.power(10000, 2 * (j // 2) / d_hid) for j in range(d_hid)]

    table = np.array([angle_vec(p) for p in range(n_position)], dtype=np.float64)
    table[:, 0::2] = np.sin(table[:, 0::2])
    table[:, 1::2] = np.cos(table[:, 1::2])
    return table.astype(np.float32)                      # [n_position, d_hid]


# ----------------------------------------------------------------------------
# Shared layer-norm math (eps=1e-6 matches nn.LayerNorm(d_model, eps=1e-06)).
# ----------------------------------------------------------------------------
def _layer_norm(y, gamma, beta, eps=1e-6):
    mu = jnp.mean(y, axis=-1, keepdims=True)
    yc = y - mu
    var = jnp.mean(yc * yc, axis=-1, keepdims=True)
    return yc * jax.lax.rsqrt(var + eps) * gamma + beta


# ----------------------------------------------------------------------------
# Probe: single-buffer constant-index operands via pipeline_mode=pl.Buffered(1)
# (review item).  Falls back cleanly if the installed JAX does not support it.
# ----------------------------------------------------------------------------
_SINGLE_BUFFER_SUPPORTED = None


def _probe_single_buffer():
    if not hasattr(pl, "Buffered"):
        return False
    try:
        def _copy(x_ref, o_ref):
            o_ref[...] = x_ref[...] * 2.0

        fn = pl.pallas_call(
            _copy,
            out_shape=jax.ShapeDtypeStruct((8, 128), jnp.float32),
            grid=(2,),
            in_specs=[pl.BlockSpec((8, 128), lambda i: (0, 0),
                                   pipeline_mode=pl.Buffered(1))],
            out_specs=pl.BlockSpec((8, 128), lambda i: (0, 0)),
        )
        jax.block_until_ready(fn(jnp.ones((8, 128), jnp.float32)))
        return True
    except Exception:
        return False


def _use_single_buffer():
    global _SINGLE_BUFFER_SUPPORTED
    if _SINGLE_BUFFER_SUPPORTED is None:
        _SINGLE_BUFFER_SUPPORTED = _probe_single_buffer()
    return _SINGLE_BUFFER_SUPPORTED


def _const_spec(shape):
    """BlockSpec for an operand whose block index never changes."""
    idx_map = lambda *_: (0,) * len(shape)
    if _use_single_buffer():
        return pl.BlockSpec(shape, idx_map, pipeline_mode=pl.Buffered(1))
    return pl.BlockSpec(shape, idx_map)


def _vmem_limit_bytes(estimate_bytes):
    # Explicit per-call limit (review item): generous floor (32 MiB, the
    # v6e/v7x scoped default and above v5e's 16 MiB default), capped below
    # v7x's 64 MiB physical VMEM.
    return int(min(max(2 * estimate_bytes + (4 << 20), 32 << 20), 60 << 20))


def _compiler_params(dim_sems, estimate_bytes):
    return pltpu.CompilerParams(dimension_semantics=dim_sems,
                                vmem_limit_bytes=_vmem_limit_bytes(estimate_bytes))


# ----------------------------------------------------------------------------
# Tile sizing for the elementwise PE+LN kernel (conservative 12 MiB budget so
# the default scoped VMEM on v5e is also fine; limit raised explicitly anyway).
# ----------------------------------------------------------------------------
def _seq_tile(S, D, dtype_bytes=4, vmem_budget_bytes=12 * 1024 * 1024):
    if S % 8 != 0:
        return S                                          # full-dim block fallback
    max_rows = max(8, vmem_budget_bytes // (6 * D * dtype_bytes))
    ts = min(S, 512, (max_rows // 8) * 8)
    while ts > 8 and S % ts != 0:
        ts -= 8
    if S % ts != 0:
        ts = 8
    return ts


# ----------------------------------------------------------------------------
# Kernel 1: positional-encoding add + (dropout = identity) + LayerNorm.
# ----------------------------------------------------------------------------
def _pe_ln_kernel(x_ref, pos_ref, g_ref, b_ref, o_ref):
    x = x_ref[0]                                          # [ts, D]
    y = x + pos_ref[...]                                  # [ts, D]
    o_ref[0] = _layer_norm(y, g_ref[...], b_ref[...]).astype(o_ref.dtype)


def pe_layernorm(x, pos_table, gamma, beta):
    B, S, D = x.shape
    assert S <= pos_table.shape[0]
    ts = _seq_tile(S, D)
    if S % 8 != 0:
        pos_table = jax.lax.slice(pos_table, (0, 0), (S, D))
    n_s = S // ts
    est = 6 * ts * D * 4 + 4 * D * 4
    # Seq axis outer so the pos-table tile is reused across the batch axis.
    return pl.pallas_call(
        _pe_ln_kernel,
        out_shape=jax.ShapeDtypeStruct((B, S, D), x.dtype),
        grid_spec=pltpu.PrefetchScalarGridSpec(
            num_scalar_prefetch=0,
            grid=(n_s, B),
            in_specs=[
                pl.BlockSpec((1, ts, D), lambda s, b: (b, s, 0)),   # x tile
                pl.BlockSpec((ts, D), lambda s, b: (s, 0)),          # pos tile
                _const_spec((1, D)),                                  # gamma
                _const_spec((1, D)),                                  # beta
            ],
            out_specs=pl.BlockSpec((1, ts, D), lambda s, b: (b, s, 0)),
        ),
        compiler_params=_compiler_params(("parallel", "parallel"), est),
        input_output_aliases={0: 0},
    )(x, pos_table, gamma, beta)


# ----------------------------------------------------------------------------
# Kernel 2: one full EncoderLayer
#   MHA (fused per-head QKV + softmax + out-proj) + residual + LN1
#   FFN (w1/ReLU/w2) + residual + LN2
# processed per batch element.  src_mask=None path only.
# TODO(synk): masked_fill path for src_mask != None is not implemented.
# ----------------------------------------------------------------------------
def _encoder_layer_kernel(x_ref, wqkv_ref, wo_ref, ln1_g_ref, ln1_b_ref,
                          w1_ref, b1_ref, w2_ref, b2_ref, ln2_g_ref, ln2_b_ref,
                          o_ref, *, n_head, d_k, scale, compute_dtype):
    x = x_ref[0]                                          # [S, D]  (f32 stream)
    S, D = x.shape
    xf = x.astype(jnp.float32)
    xc = x.astype(compute_dtype)                          # MXU input dtype

    def head_body(h, y_acc):
        w_h = wqkv_ref[h]                                 # [D, 3*d_k]  (leading-axis index)
        qkv = jnp.dot(xc, w_h, preferred_element_type=jnp.float32)   # one MXU pass per head
        qh = qkv[:, 0 * d_k:1 * d_k] * scale
        kh = qkv[:, 1 * d_k:2 * d_k]
        vh = qkv[:, 2 * d_k:3 * d_k]
        # q @ k^T (kept in f32: logits feed exp)
        logits = jax.lax.dot_general(qh, kh, (((1,), (1,)), ((), ())),
                                     preferred_element_type=jnp.float32)  # [S, S]
        m = jnp.max(logits, axis=-1, keepdims=True)
        p = jnp.exp(logits - m)
        denom = jnp.sum(p, axis=-1, keepdims=True)
        inv = pl.reciprocal(denom, approx=True)           # EUP, not a VALU divide
        inv = inv * (2.0 - denom * inv)                   # one Newton step -> f32 accuracy
        p = p * inv
        ctx = jnp.dot(p.astype(compute_dtype), vh.astype(compute_dtype),
                      preferred_element_type=jnp.float32)              # [S, d_k]
        # Accumulate directly into the model dim: ctx_h @ wo[h] (no concat).
        return y_acc + jnp.dot(ctx.astype(compute_dtype), wo_ref[h],
                               preferred_element_type=jnp.float32)      # [S, D]

    y = jax.lax.fori_loop(0, n_head, head_body,
                          jnp.zeros((S, D), jnp.float32),
                          unroll=bool(n_head <= 8))
    y = y + xf                                            # residual
    y = _layer_norm(y, ln1_g_ref[...], ln1_b_ref[...])    # LN1 (f32)

    # FFN + residual + LN2.
    yc = y.astype(compute_dtype)
    h1 = jnp.dot(yc, w1_ref[...], preferred_element_type=jnp.float32) + b1_ref[...]
    h1 = jnp.maximum(h1, 0.0)                             # ReLU
    z = (jnp.dot(h1.astype(compute_dtype), w2_ref[...],
                 preferred_element_type=jnp.float32) + b2_ref[...] + y)
    o_ref[0] = _layer_norm(z, ln2_g_ref[...], ln2_b_ref[...]).astype(o_ref.dtype)


def _layer_vmem_estimate(S, D, d_inner, n_head, compute_dtype):
    cb = np.dtype(compute_dtype).itemsize
    d_k = D // n_head
    wfac = 1 if _use_single_buffer() else 2
    stream = 2 * 2 * S * D * 4                                        # x in/out, double-buffered
    weights = wfac * cb * (n_head * D * 3 * d_k + n_head * d_k * D + 2 * D * d_inner)
    smalls = wfac * 4 * (d_inner + 5 * D)
    interm = 4 * (S * 3 * d_k + S * S + 2 * S * D + S * d_inner)
    return stream + weights + smalls + interm


def encoder_layer(x, layer, *, n_head, compute_dtype):
    B, S, D = x.shape
    d_k = D // n_head
    d_inner = layer["w1"].shape[1]

    # Host-side weight prep: fused per-head QKV [H, D, 3*d_k], per-head wo
    # [H, d_k, D] -> no lane-sliced weights inside the kernel.
    def heads(w):                                          # [D, D] -> [H, D, d_k]
        return w.reshape(D, n_head, d_k).transpose(1, 0, 2)

    wqkv = jnp.concatenate([heads(layer["wq"]), heads(layer["wk"]),
                            heads(layer["wv"])], axis=-1).astype(compute_dtype)
    wo_h = layer["wo"].reshape(n_head, d_k, D).astype(compute_dtype)
    w1 = layer["w1"].astype(compute_dtype)
    w2 = layer["w2"].astype(compute_dtype)

    kernel = functools.partial(_encoder_layer_kernel, n_head=n_head, d_k=d_k,
                               scale=1.0 / (d_k ** 0.5), compute_dtype=compute_dtype)
    est = _layer_vmem_estimate(S, D, d_inner, n_head, compute_dtype)

    return pl.pallas_call(
        kernel,
        out_shape=jax.ShapeDtypeStruct((B, S, D), x.dtype),
        grid_spec=pltpu.PrefetchScalarGridSpec(
            num_scalar_prefetch=0,
            grid=(B,),
            in_specs=[
                pl.BlockSpec((1, S, D), lambda b: (b, 0, 0)),          # x
                _const_spec((n_head, D, 3 * d_k)),                      # fused QKV weights
                _const_spec((n_head, d_k, D)),                          # per-head out-proj
                _const_spec((1, D)), _const_spec((1, D)),               # LN1 gamma/beta
                _const_spec((D, d_inner)), _const_spec((1, d_inner)),   # w1, b1
                _const_spec((d_inner, D)), _const_spec((1, D)),         # w2, b2
                _const_spec((1, D)), _const_spec((1, D)),               # LN2 gamma/beta
            ],
            out_specs=pl.BlockSpec((1, S, D), lambda b: (b, 0, 0)),
        ),
        compiler_params=_compiler_params(("parallel",), est),
        input_output_aliases={0: 0},
    )(x, wqkv, wo_h, layer["ln1_g"], layer["ln1_b"],
      w1, layer["b1"], w2, layer["b2"], layer["ln2_g"], layer["ln2_b"])


# ----------------------------------------------------------------------------
# Full Encoder forward (src_mask=None, return_attns=False path).
# ----------------------------------------------------------------------------
def make_encoder_forward(n_head, compute_dtype=jnp.float32):
    _use_single_buffer()      # run the Buffered(1) probe eagerly, outside tracing

    @jax.jit
    def forward(params, src_seq):
        # TODO(synk): nn.Embedding gather is data-dependent; done with XLA's
        # jnp.take (a scalar-prefetch + pl.Element kernel only pays off for
        # very large vocabs).
        x = jnp.take(params["emb"], src_seq, axis=0)                  # [B, S, D]
        # dropout(position_enc(emb)) then layer_norm; dropout == identity (eval).
        x = pe_layernorm(x, params["pos_table"], params["ln0_g"], params["ln0_b"])
        for layer in params["layers"]:
            x = encoder_layer(x, layer, n_head=n_head, compute_dtype=compute_dtype)
        return x

    return forward


# ----------------------------------------------------------------------------
# Pure-JAX reference (same semantics; matmul_dtype mirrors the kernel's MXU
# input dtype so the bf16 path can be checked fairly).
# ----------------------------------------------------------------------------
def encoder_reference(params, src_seq, n_head, matmul_dtype=jnp.float32):
    hp = jax.lax.Precision.HIGHEST

    def mm(a, b):
        return jnp.matmul(a.astype(matmul_dtype), b.astype(matmul_dtype),
                          precision=hp, preferred_element_type=jnp.float32)

    x = jnp.take(params["emb"], src_seq, axis=0)
    S = src_seq.shape[1]
    x = x + params["pos_table"][:S]
    x = _layer_norm(x, params["ln0_g"], params["ln0_b"])
    for layer in params["layers"]:
        B, S, D = x.shape
        d_k = D // n_head
        residual = x
        q = mm(x, layer["wq"]) / (d_k ** 0.5)
        k = mm(x, layer["wk"])
        v = mm(x, layer["wv"])
        q = q.reshape(B, S, n_head, d_k).transpose(0, 2, 1, 3)
        k = k.reshape(B, S, n_head, d_k).transpose(0, 2, 1, 3)
        v = v.reshape(B, S, n_head, d_k).transpose(0, 2, 1, 3)
        attn = jax.nn.softmax(
            jnp.einsum("bhqd,bhkd->bhqk", q, k, precision=hp), axis=-1)
        ctx = jnp.einsum("bhqk,bhkd->bhqd",
                         attn.astype(matmul_dtype), v.astype(matmul_dtype),
                         precision=hp, preferred_element_type=jnp.float32)
        ctx = ctx.transpose(0, 2, 1, 3).reshape(B, S, D)
        x = _layer_norm(mm(ctx, layer["wo"]) + residual,
                        layer["ln1_g"], layer["ln1_b"])
        residual = x
        h = jax.nn.relu(mm(x, layer["w1"]) + layer["b1"])
        x = _layer_norm(mm(h, layer["w2"]) + layer["b2"] + residual,
                        layer["ln2_g"], layer["ln2_b"])
    return x


if __name__ == "__main__":
    # Small shapes consistent with the module.
    B, S = 2, 8
    n_src_vocab = 64
    d_model = d_word_vec = 32
    d_inner = 64
    n_layers = 2
    n_head = 4
    n_position = 200

    key = jax.random.PRNGKey(0)
    keys = iter(jax.random.split(key, 64))

    def dense(k, fan_in, fan_out):
        return (jax.random.normal(k, (fan_in, fan_out), jnp.float32)
                / np.float32(np.sqrt(fan_in)))

    def ln_pair():
        g = 1.0 + 0.1 * jax.random.normal(next(keys), (1, d_model), jnp.float32)
        b = 0.1 * jax.random.normal(next(keys), (1, d_model), jnp.float32)
        return g, b

    ln0_g, ln0_b = ln_pair()
    layers = []
    for _ in range(n_layers):
        ln1_g, ln1_b = ln_pair()
        ln2_g, ln2_b = ln_pair()
        layers.append(dict(
            wq=dense(next(keys), d_model, d_model),
            wk=dense(next(keys), d_model, d_model),
            wv=dense(next(keys), d_model, d_model),
            wo=dense(next(keys), d_model, d_model),
            ln1_g=ln1_g, ln1_b=ln1_b,
            w1=dense(next(keys), d_model, d_inner),
            b1=0.1 * jax.random.normal(next(keys), (1, d_inner), jnp.float32),
            w2=dense(next(keys), d_inner, d_model),
            b2=0.1 * jax.random.normal(next(keys), (1, d_model), jnp.float32),
            ln2_g=ln2_g, ln2_b=ln2_b,
        ))

    params = dict(
        emb=0.5 * jax.random.normal(next(keys), (n_src_vocab, d_word_vec), jnp.float32),
        pos_table=jnp.asarray(_get_sinusoid_encoding_table(n_position, d_word_vec)),
        ln0_g=ln0_g, ln0_b=ln0_b,
        layers=layers,
    )
    src_seq = jax.random.randint(next(keys), (B, S), 0, n_src_vocab, dtype=jnp.int32)

    # f32 MXU-input path: strict functional check against the f32 reference.
    forward_f32 = make_encoder_forward(n_head, compute_dtype=jnp.float32)
    out_f32 = jax.block_until_ready(forward_f32(params, src_seq))
    ref_f32 = jax.block_until_ready(encoder_reference(params, src_seq, n_head))
    np.testing.assert_allclose(np.asarray(out_f32), np.asarray(ref_f32),
                               rtol=2e-3, atol=2e-3)

    # bf16 MXU-input path (the v6e/v7x recommendation): checked against a
    # reference that also feeds bf16 matmul inputs with f32 accumulation.
    forward_bf16 = make_encoder_forward(n_head, compute_dtype=jnp.bfloat16)
    out_bf16 = jax.block_until_ready(forward_bf16(params, src_seq))
    ref_bf16 = jax.block_until_ready(
        encoder_reference(params, src_seq, n_head, matmul_dtype=jnp.bfloat16))
    np.testing.assert_allclose(np.asarray(out_bf16), np.asarray(ref_bf16),
                               rtol=2e-2, atol=2e-2)

    print("KERNEL_OK")
</pallas_src>

<mosaic_0001>
module attributes {stable_mosaic.version = 11 : i64} {
  func.func @_copy(%arg0: i32, %arg1: memref<8x128xf32, #tpu.memory_space<vmem>>, %arg2: memref<8x128xf32, #tpu.memory_space<vmem>>) attributes {dimension_semantics = [#tpu.dimension_semantics<arbitrary>], iteration_bounds = array<i64: 2>, scalar_prefetch = 0 : i64, scratch_operands = 0 : i64, tpu.core_type = #tpu.core_type<tc>, window_params = [{pipeline_mode = #tpu.pipeline_mode<synchronous>, transform_indices = @transform_0, window_bounds = array<i64: 8, 128>}, {pipeline_mode = #tpu.pipeline_mode<synchronous>, transform_indices = @transform_1, window_bounds = array<i64: 8, 128>}]} {
    %c0 = arith.constant 0 : index
    %c0_0 = arith.constant 0 : index
    %0 = vector.load %arg1[%c0, %c0_0] : memref<8x128xf32, #tpu.memory_space<vmem>>, vector<8x128xf32>
    %cst = arith.constant 2.000000e+00 : f32
    %1 = vector.broadcast %cst : f32 to vector<8x128xf32>
    %2 = arith.mulf %0, %1 : vector<8x128xf32>
    %c0_1 = arith.constant 0 : index
    %c0_2 = arith.constant 0 : index
    %3 = vector.load %arg2[%c0_1, %c0_2] : memref<8x128xf32, #tpu.memory_space<vmem>>, vector<8x128xf32>
    tpu.vector_store %arg2[%c0_1, %c0_2], %2 {strides = array<i32>} : memref<8x128xf32, #tpu.memory_space<vmem>>, vector<8x128xf32>,
    return
  }
  func.func @transform_0(%arg0: i32) -> (i32, i32) {
    %c0_i32 = arith.constant 0 : i32
    %c0_i32_0 = arith.constant 0 : i32
    %c0_i32_1 = arith.constant 0 : i32
    return %c0_i32, %c0_i32_0 : i32, i32
  }
  func.func @transform_1(%arg0: i32) -> (i32, i32) {
    %c0_i32 = arith.constant 0 : i32
    %c0_i32_0 = arith.constant 0 : i32
    %c0_i32_1 = arith.constant 0 : i32
    return %c0_i32, %c0_i32_0 : i32, i32
  }
}

module attributes {stable_mosaic.version = 11 : i64} {
  func.func @_encoder_layer_kernel(%arg0: i32, %arg1: memref<1x8x32xf32, #tpu.memory_space<vmem>>, %arg2: memref<4x32x24xf32, #tpu.memory_space<vmem>>, %arg3: memref<4x8x32xf32, #tpu.memory_space<vmem>>, %arg4: memref<1x32xf32, #tpu.memory_space<vmem>>, %arg5: memref<1x32xf32, #tpu.memory_space<vmem>>, %arg6: memref<32x64xf32, #tpu.memory_space<vmem>>, %arg7: memref<1x64xf32, #tpu.memory_space<vmem>>, %arg8: memref<64x32xf32, #tpu.memory_space<vmem>>, %arg9: memref<1x32xf32, #tpu.memory_space<vmem>>, %arg10: memref<1x32xf32, #tpu.memory_space<vmem>>, %arg11: memref<1x32xf32, #tpu.memory_space<vmem>>, %arg12: memref<1x8x32xf32, #tpu.memory_space<vmem>>) attributes {dimension_semantics = [#tpu.dimension_semantics<parallel>], iteration_bounds = array<i64: 2>, scalar_prefetch = 0 : i64, scratch_operands = 0 : i64, tpu.core_type = #tpu.core_type<tc>, window_params = [{transform_indices = @transform_0, window_bounds = array<i64: 1, 8, 32>}, {pipeline_mode = #tpu.pipeline_mode<synchronous>, transform_indices = @transform_1, window_bounds = array<i64: 4, 32, 24>}, {pipeline_mode = #tpu.pipeline_mode<synchronous>, transform_indices = @transform_2, window_bounds = array<i64: 4, 8, 32>}, {pipeline_mode = #tpu.pipeline_mode<synchronous>, transform_indices = @transform_3, window_bounds = array<i64: 1, 32>}, {pipeline_mode = #tpu.pipeline_mode<synchronous>, transform_indices = @transform_4, window_bounds = array<i64: 1, 32>}, {pipeline_mode = #tpu.pipeline_mode<synchronous>, transform_indices = @transform_5, window_bounds = array<i64: 32, 64>}, {pipeline_mode = #tpu.pipeline_mode<synchronous>, transform_indices = @transform_6, window_bounds = array<i64: 1, 64>}, {pipeline_mode = #tpu.pipeline_mode<synchronous>, transform_indices = @transform_7, window_bounds = array<i64: 64, 32>}, {pipeline_mode = #tpu.pipeline_mode<synchronous>, transform_indices = @transform_8, window_bounds = array<i64: 1, 32>}, {pipeline_mode = #tpu.pipeline_mode<synchronous>, transform_indices = @transform_9, window_bounds = array<i64: 1, 32>}, {pipeline_mode = #tpu.pipeline_mode<synchronous>, transform_indices = @transform_10, window_bounds = array<i64: 1, 32>}, {transform_indices = @transform_11, window_bounds = array<i64: 1, 8, 32>}]} {
    %c0 = arith.constant 0 : index
    %c0_0 = arith.constant 0 : index
    %c0_1 = arith.constant 0 : index
    %0 = vector.load %arg1[%c0, %c0_0, %c0_1] : memref<1x8x32xf32, #tpu.memory_space<vmem>>, vector<1x8x32xf32>
    %1 = vector.shape_cast %0 : vector<1x8x32xf32> to vector<8x32xf32>
    %cst = arith.constant 0.000000e+00 : f32
    %2 = vector.broadcast %cst : f32 to vector<8x32xf32>
    %c0_i32 = arith.constant 0 : i32
    %3 = arith.index_cast %c0_i32 : i32 to index
    %c0_2 = arith.constant 0 : index
    %c0_3 = arith.constant 0 : index
    %4 = vector.load %arg2[%3, %c0_2, %c0_3] : memref<4x32x24xf32, #tpu.memory_space<vmem>>, vector<1x32x24xf32>
    %5 = vector.shape_cast %4 : vector<1x32x24xf32> to vector<32x24xf32>
    %cst_4 = arith.constant dense<0.000000e+00> : vector<8x24xf32>
    %6 = tpu.matmul %1, %5, %cst_4 {dimension_numbers = #tpu.dot_dimension_numbers<[1], [0], [0], [1], [0, 0, 1, 1], [], []>} : vector<8x32xf32>, vector<32x24xf32>, vector<8x24xf32> -> vector<8x24xf32>
    %7 = vector.extract_strided_slice %6 {offsets = [0, 0], sizes = [8, 8], strides = [1, 1]} : vector<8x24xf32> to vector<8x8xf32>
    %cst_5 = arith.constant 0.353553385 : f32
    %8 = vector.broadcast %cst_5 : f32 to vector<8x8xf32>
    %9 = arith.mulf %7, %8 : vector<8x8xf32>
    %10 = vector.extract_strided_slice %6 {offsets = [0, 8], sizes = [8, 8], strides = [1, 1]} : vector<8x24xf32> to vector<8x8xf32>
    %11 = vector.extract_strided_slice %6 {offsets = [0, 16], sizes = [8, 8], strides = [1, 1]} : vector<8x24xf32> to vector<8x8xf32>
    %cst_6 = arith.constant dense<0.000000e+00> : vector<8x8xf32>
    %12 = tpu.matmul %9, %10, %cst_6 {dimension_numbers = #tpu.dot_dimension_numbers<[1], [1], [0], [0], [0, 0, 1, 0], [], []>} : vector<8x8xf32>, vector<8x8xf32>, vector<8x8xf32> -> vector<8x8xf32>
    %cst_7 = arith.constant dense<0xFF800000> : vector<8xf32>
    %13 = vector.multi_reduction <maximumf>, %12, %cst_7 [1] : vector<8x8xf32> to vector<8xf32>
    %14 = vector.shape_cast %13 : vector<8xf32> to vector<8x1xf32>
    %15 = vector.broadcast %14 : vector<8x1xf32> to vector<8x8xf32>
    %16 = arith.subf %12, %15 : vector<8x8xf32>
    %17 = math.exp %16 : vector<8x8xf32>
    %cst_8 = arith.constant dense<0.000000e+00> : vector<8xf32>
    %18 = vector.multi_reduction <add>, %17, %cst_8 [1] : vector<8x8xf32> to vector<8xf32>
    %19 = vector.shape_cast %18 : vector<8xf32> to vector<8x1xf32>
    %20 = tpu.reciprocal %19 {approx = true} : vector<8x1xf32> -> vector<8x1xf32>
    %21 = arith.mulf %19, %20 : vector<8x1xf32>
    %cst_9 = arith.constant 2.000000e+00 : f32
    %22 = vector.broadcast %cst_9 : f32 to vector<8x1xf32>
    %23 = arith.subf %22, %21 : vector<8x1xf32>
    %24 = arith.mulf %20, %23 : vector<8x1xf32>
    %25 = vector.broadcast %24 : vector<8x1xf32> to vector<8x8xf32>
    %26 = arith.mulf %17, %25 : vector<8x8xf32>
    %cst_10 = arith.constant dense<0.000000e+00> : vector<8x8xf32>
    %27 = tpu.matmul %26, %11, %cst_10 {dimension_numbers = #tpu.dot_dimension_numbers<[1], [0], [0], [1], [0, 0, 1, 1], [], []>} : vector<8x8xf32>, vector<8x8xf32>, vector<8x8xf32> -> vector<8x8xf32>
    %28 = arith.index_cast %c0_i32 : i32 to index
    %c0_11 = arith.constant 0 : index
    %c0_12 = arith.constant 0 : index
    %29 = vector.load %arg3[%28, %c0_11, %c0_12] : memref<4x8x32xf32, #tpu.memory_space<vmem>>, vector<1x8x32xf32>
    %30 = vector.shape_cast %29 : vector<1x8x32xf32> to vector<8x32xf32>
    %cst_13 = arith.constant dense<0.000000e+00> : vector<8x32xf32>
    %31 = tpu.matmul %27, %30, %cst_13 {dimension_numbers = #tpu.dot_dimension_numbers<[1], [0], [0], [1], [0, 0, 1, 1], [], []>} : vector<8x8xf32>, vector<8x32xf32>, vector<8x32xf32> -> vector<8x32xf32>
    %32 = arith.addf %2, %31 : vector<8x32xf32>
    %c1_i32 = arith.constant 1 : i32
    %33 = arith.index_cast %c1_i32 : i32 to index
    %c0_14 = arith.constant 0 : index
    %c0_15 = arith.constant 0 : index
    %34 = vector.load %arg2[%33, %c0_14, %c0_15] : memref<4x32x24xf32, #tpu.memory_space<vmem>>, vector<1x32x24xf32>
    %35 = vector.shape_cast %34 : vector<1x32x24xf32> to vector<32x24xf32>
    %cst_16 = arith.constant dense<0.000000e+00> : vector<8x24xf32>
    %36 = tpu.matmul %1, %35, %cst_16 {dimension_numbers = #tpu.dot_dimension_numbers<[1], [0], [0], [1], [0, 0, 1, 1], [], []>} : vector<8x32xf32>, vector<32x24xf32>, vector<8x24xf32> -> vector<8x24xf32>
    %37 = vector.extract_strided_slice %36 {offsets = [0, 0], sizes = [8, 8], strides = [1, 1]} : vector<8x24xf32> to vector<8x8xf32>
    %cst_17 = arith.constant 0.353553385 : f32
    %38 = vector.broadcast %cst_17 : f32 to vector<8x8xf32>
    %39 = arith.mulf %37, %38 : vector<8x8xf32>
    %40 = vector.extract_strided_slice %36 {offsets = [0, 8], sizes = [8, 8], strides = [1, 1]} : vector<8x24xf32> to vector<8x8xf32>
    %41 = vector.extract_strided_slice %36 {offsets = [0, 16], sizes = [8, 8], strides = [1, 1]} : vector<8x24xf32> to vector<8x8xf32>
    %cst_18 = arith.constant dense<0.000000e+00> : vector<8x8xf32>
    %42 = tpu.matmul %39, %40, %cst_18 {dimension_numbers = #tpu.dot_dimension_numbers<[1], [1], [0], [0], [0, 0, 1, 0], [], []>} : vector<8x8xf32>, vector<8x8xf32>, vector<8x8xf32> -> vector<8x8xf32>
    %cst_19 = arith.constant dense<0xFF800000> : vector<8xf32>
    %43 = vector.multi_reduction <maximumf>, %42, %cst_19 [1] : vector<8x8xf32> to vector<8xf32>
    %44 = vector.shape_cast %43 : vector<8xf32> to vector<8x1xf32>
    %45 = vector.broadcast %44 : vector<8x1xf32> to vector<8x8xf32>
    %46 = arith.subf %42, %45 : vector<8x8xf32>
    %47 = math.exp %46 : vector<8x8xf32>
    %cst_20 = arith.constant dense<0.000000e+00> : vector<8xf32>
    %48 = vector.multi_reduction <add>, %47, %cst_20 [1] : vector<8x8xf32> to vector<8xf32>
    %49 = vector.shape_cast %48 : vector<8xf32> to vector<8x1xf32>
    %50 = tpu.reciprocal %49 {approx = true} : vector<8x1xf32> -> vector<8x1xf32>
    %51 = arith.mulf %49, %50 : vector<8x1xf32>
    %cst_21 = arith.constant 2.000000e+00 : f32
    %52 = vector.broadcast %cst_21 : f32 to vector<8x1xf32>
    %53 = arith.subf %52, %51 : vector<8x1xf32>
    %54 = arith.mulf %50, %53 : vector<8x1xf32>
    %55 = vector.broadcast %54 : vector<8x1xf32> to vector<8x8xf32>
    %56 = arith.mulf %47, %55 : vector<8x8xf32>
    %cst_22 = arith.constant dense<0.000000e+00> : vector<8x8xf32>
    %57 = tpu.matmul %56, %41, %cst_22 {dimension_numbers = #tpu.dot_dimension_numbers<[1], [0], [0], [1], [0, 0, 1, 1], [], []>} : vector<8x8xf32>, vector<8x8xf32>, vector<8x8xf32> -> vector<8x8xf32>
    %58 = arith.index_cast %c1_i32 : i32 to index
    %c0_23 = arith.constant 0 : index
    %c0_24 = arith.constant 0 : index
    %59 = vector.load %arg3[%58, %c0_23, %c0_24] : memref<4x8x32xf32, #tpu.memory_space<vmem>>, vector<1x8x32xf32>
    %60 = vector.shape_cast %59 : vector<1x8x32xf32> to vector<8x32xf32>
    %cst_25 = arith.constant dense<0.000000e+00> : vector<8x32xf32>
    %61 = tpu.matmul %57, %60, %cst_25 {dimension_numbers = #tpu.dot_dimension_numbers<[1], [0], [0], [1], [0, 0, 1, 1], [], []>} : vector<8x8xf32>, vector<8x32xf32>, vector<8x32xf32> -> vector<8x32xf32>
    %62 = arith.addf %32, %61 : vector<8x32xf32>
    %c2_i32 = arith.constant 2 : i32
    %63 = arith.index_cast %c2_i32 : i32 to index
    %c0_26 = arith.constant 0 : index
    %c0_27 = arith.constant 0 : index
    %64 = vector.load %arg2[%63, %c0_26, %c0_27] : memref<4x32x24xf32, #tpu.memory_space<vmem>>, vector<1x32x24xf32>
    %65 = vector.shape_cast %64 : vector<1x32x24xf32> to vector<32x24xf32>
    %cst_28 = arith.constant dense<0.000000e+00> : vector<8x24xf32>
    %66 = tpu.matmul %1, %65, %cst_28 {dimension_numbers = #tpu.dot_dimension_numbers<[1], [0], [0], [1], [0, 0, 1, 1], [], []>} : vector<8x32xf32>, vector<32x24xf32>, vector<8x24xf32> -> vector<8x24xf32>
    %67 = vector.extract_strided_slice %66 {offsets = [0, 0], sizes = [8, 8], strides = [1, 1]} : vector<8x24xf32> to vector<8x8xf32>
    %cst_29 = arith.constant 0.353553385 : f32
    %68 = vector.broadcast %cst_29 : f32 to vector<8x8xf32>
    %69 = arith.mulf %67, %68 : vector<8x8xf32>
    %70 = vector.extract_strided_slice %66 {offsets = [0, 8], sizes = [8, 8], strides = [1, 1]} : vector<8x24xf32> to vector<8x8xf32>
    %71 = vector.extract_strided_slice %66 {offsets = [0, 16], sizes = [8, 8], strides = [1, 1]} : vector<8x24xf32> to vector<8x8xf32>
    %cst_30 = arith.constant dense<0.000000e+00> : vector<8x8xf32>
    %72 = tpu.matmul %69, %70, %cst_30 {dimension_numbers = #tpu.dot_dimension_numbers<[1], [1], [0], [0], [0, 0, 1, 0], [], []>} : vector<8x8xf32>, vector<8x8xf32>, vector<8x8xf32> -> vector<8x8xf32>
    %cst_31 = arith.constant dense<0xFF800000> : vector<8xf32>
    %73 = vector.multi_reduction <maximumf>, %72, %cst_31 [1] : vector<8x8xf32> to vector<8xf32>
    %74 = vector.shape_cast %73 : vector<8xf32> to vector<8x1xf32>
    %75 = vector.broadcast %74 : vector<8x1xf32> to vector<8x8xf32>
    %76 = arith.subf %72, %75 : vector<8x8xf32>
    %77 = math.exp %76 : vector<8x8xf32>
    %cst_32 = arith.constant dense<0.000000e+00> : vector<8xf32>
    %78 = vector.multi_reduction <add>, %77, %cst_32 [1] : vector<8x8xf32> to vector<8xf32>
    %79 = vector.shape_cast %78 : vector<8xf32> to vector<8x1xf32>
    %80 = tpu.reciprocal %79 {approx = true} : vector<8x1xf32> -> vector<8x1xf32>
    %81 = arith.mulf %79, %80 : vector<8x1xf32>
    %cst_33 = arith.constant 2.000000e+00 : f32
    %82 = vector.broadcast %cst_33 : f32 to vector<8x1xf32>
    %83 = arith.subf %82, %81 : vector<8x1xf32>
    %84 = arith.mulf %80, %83 : vector<8x1xf32>
    %85 = vector.broadcast %84 : vector<8x1xf32> to vector<8x8xf32>
    %86 = arith.mulf %77, %85 : vector<8x8xf32>
    %cst_34 = arith.constant dense<0.000000e+00> : vector<8x8xf32>
    %87 = tpu.matmul %86, %71, %cst_34 {dimension_numbers = #tpu.dot_dimension_numbers<[1], [0], [0], [1], [0, 0, 1, 1], [], []>} : vector<8x8xf32>, vector<8x8xf32>, vector<8x8xf32> -> vector<8x8xf32>
    %88 = arith.index_cast %c2_i32 : i32 to index
    %c0_35 = arith.constant 0 : index
    %c0_36 = arith.constant 0 : index
    %89 = vector.load %arg3[%88, %c0_35, %c0_36] : memref<4x8x32xf32, #tpu.memory_space<vmem>>, vector<1x8x32xf32>
    %90 = vector.shape_cast %89 : vector<1x8x32xf32> to vector<8x32xf32>
    %cst_37 = arith.constant dense<0.000000e+00> : vector<8x32xf32>
    %91 = tpu.matmul %87, %90, %cst_37 {dimension_numbers = #tpu.dot_dimension_numbers<[1], [0], [0], [1], [0, 0, 1, 1], [], []>} : vector<8x8xf32>, vector<8x32xf32>, vector<8x32xf32> -> vector<8x32xf32>
    %92 = arith.addf %62, %91 : vector<8x32xf32>
    %c3_i32 = arith.constant 3 : i32
    %93 = arith.index_cast %c3_i32 : i32 to index
    %c0_38 = arith.constant 0 : index
    %c0_39 = arith.constant 0 : index
    %94 = vector.load %arg2[%93, %c0_38, %c0_39] : memref<4x32x24xf32, #tpu.memory_space<vmem>>, vector<1x32x24xf32>
    %95 = vector.shape_cast %94 : vector<1x32x24xf32> to vector<32x24xf32>
    %cst_40 = arith.constant dense<0.000000e+00> : vector<8x24xf32>
    %96 = tpu.matmul %1, %95, %cst_40 {dimension_numbers = #tpu.dot_dimension_numbers<[1], [0], [0], [1], [0, 0, 1, 1], [], []>} : vector<8x32xf32>, vector<32x24xf32>, vector<8x24xf32> -> vector<8x24xf32>
    %97 = vector.extract_strided_slice %96 {offsets = [0, 0], sizes = [8, 8], strides = [1, 1]} : vector<8x24xf32> to vector<8x8xf32>
    %cst_41 = arith.constant 0.353553385 : f32
    %98 = vector.broadcast %cst_41 : f32 to vector<8x8xf32>
    %99 = arith.mulf %97, %98 : vector<8x8xf32>
    %100 = vector.extract_strided_slice %96 {offsets = [0, 8], sizes = [8, 8], strides = [1, 1]} : vector<8x24xf32> to vector<8x8xf32>
    %101 = vector.extract_strided_slice %96 {offsets = [0, 16], sizes = [8, 8], strides = [1, 1]} : vector<8x24xf32> to vector<8x8xf32>
    %cst_42 = arith.constant dense<0.000000e+00> : vector<8x8xf32>
    %102 = tpu.matmul %99, %100, %cst_42 {dimension_numbers = #tpu.dot_dimension_numbers<[1], [1], [0], [0], [0, 0, 1, 0], [], []>} : vector<8x8xf32>, vector<8x8xf32>, vector<8x8xf32> -> vector<8x8xf32>
    %cst_43 = arith.constant dense<0xFF800000> : vector<8xf32>
    %103 = vector.multi_reduction <maximumf>, %102, %cst_43 [1] : vector<8x8xf32> to vector<8xf32>
    %104 = vector.shape_cast %103 : vector<8xf32> to vector<8x1xf32>
    %105 = vector.broadcast %104 : vector<8x1xf32> to vector<8x8xf32>
    %106 = arith.subf %102, %105 : vector<8x8xf32>
    %107 = math.exp %106 : vector<8x8xf32>
    %cst_44 = arith.constant dense<0.000000e+00> : vector<8xf32>
    %108 = vector.multi_reduction <add>, %107, %cst_44 [1] : vector<8x8xf32> to vector<8xf32>
    %109 = vector.shape_cast %108 : vector<8xf32> to vector<8x1xf32>
    %110 = tpu.reciprocal %109 {approx = true} : vector<8x1xf32> -> vector<8x1xf32>
    %111 = arith.mulf %109, %110 : vector<8x1xf32>
    %cst_45 = arith.constant 2.000000e+00 : f32
    %112 = vector.broadcast %cst_45 : f32 to vector<8x1xf32>
    %113 = arith.subf %112, %111 : vector<8x1xf32>
    %114 = arith.mulf %110, %113 : vector<8x1xf32>
    %115 = vector.broadcast %114 : vector<8x1xf32> to vector<8x8xf32>
    %116 = arith.mulf %107, %115 : vector<8x8xf32>
    %cst_46 = arith.constant dense<0.000000e+00> : vector<8x8xf32>
    %117 = tpu.matmul %116, %101, %cst_46 {dimension_numbers = #tpu.dot_dimension_numbers<[1], [0], [0], [1], [0, 0, 1, 1], [], []>} : vector<8x8xf32>, vector<8x8xf32>, vector<8x8xf32> -> vector<8x8xf32>
    %118 = arith.index_cast %c3_i32 : i32 to index
    %c0_47 = arith.constant 0 : index
    %c0_48 = arith.constant 0 : index
    %119 = vector.load %arg3[%118, %c0_47, %c0_48] : memref<4x8x32xf32, #tpu.memory_space<vmem>>, vector<1x8x32xf32>
    %120 = vector.shape_cast %119 : vector<1x8x32xf32> to vector<8x32xf32>
    %cst_49 = arith.constant dense<0.000000e+00> : vector<8x32xf32>
    %121 = tpu.matmul %117, %120, %cst_49 {dimension_numbers = #tpu.dot_dimension_numbers<[1], [0], [0], [1], [0, 0, 1, 1], [], []>} : vector<8x8xf32>, vector<8x32xf32>, vector<8x32xf32> -> vector<8x32xf32>
    %122 = arith.addf %92, %121 : vector<8x32xf32>
    %c4_i32 = arith.constant 4 : i32
    %123 = arith.addf %122, %1 : vector<8x32xf32>
    %c0_50 = arith.constant 0 : index
    %c0_51 = arith.constant 0 : index
    %124 = vector.load %arg4[%c0_50, %c0_51] : memref<1x32xf32, #tpu.memory_space<vmem>>, vector<1x32xf32>
    %c0_52 = arith.constant 0 : index
    %c0_53 = arith.constant 0 : index
    %125 = vector.load %arg5[%c0_52, %c0_53] : memref<1x32xf32, #tpu.memory_space<vmem>>, vector<1x32xf32>
    %cst_54 = arith.constant dense<0.000000e+00> : vector<8xf32>
    %126 = vector.multi_reduction <add>, %123, %cst_54 [1] : vector<8x32xf32> to vector<8xf32>
    %127 = vector.shape_cast %126 : vector<8xf32> to vector<8x1xf32>
    %cst_55 = arith.constant 3.200000e+01 : f32
    %128 = vector.broadcast %cst_55 : f32 to vector<8x1xf32>
    %129 = arith.divf %127, %128 : vector<8x1xf32>
    %130 = vector.broadcast %129 : vector<8x1xf32> to vector<8x32xf32>
    %131 = arith.subf %123, %130 : vector<8x32xf32>
    %132 = arith.mulf %131, %131 : vector<8x32xf32>
    %cst_56 = arith.constant dense<0.000000e+00> : vector<8xf32>
    %133 = vector.multi_reduction <add>, %132, %cst_56 [1] : vector<8x32xf32> to vector<8xf32>
    %134 = vector.shape_cast %133 : vector<8xf32> to vector<8x1xf32>
    %cst_57 = arith.constant 3.200000e+01 : f32
    %135 = vector.broadcast %cst_57 : f32 to vector<8x1xf32>
    %136 = arith.divf %134, %135 : vector<8x1xf32>
    %cst_58 = arith.constant 9.99999997E-7 : f32
    %137 = vector.broadcast %cst_58 : f32 to vector<8x1xf32>
    %138 = arith.addf %136, %137 : vector<8x1xf32>
    %139 = math.rsqrt %138 : vector<8x1xf32>
    %140 = vector.broadcast %139 : vector<8x1xf32> to vector<8x32xf32>
    %141 = arith.mulf %131, %140 : vector<8x32xf32>
    %142 = vector.broadcast %124 : vector<1x32xf32> to vector<8x32xf32>
    %143 = arith.mulf %141, %142 : vector<8x32xf32>
    %144 = vector.broadcast %125 : vector<1x32xf32> to vector<8x32xf32>
    %145 = arith.addf %143, %144 : vector<8x32xf32>
    %c0_59 = arith.constant 0 : index
    %c0_60 = arith.constant 0 : index
    %146 = vector.load %arg6[%c0_59, %c0_60] : memref<32x64xf32, #tpu.memory_space<vmem>>, vector<32x64xf32>
    %cst_61 = arith.constant dense<0.000000e+00> : vector<8x64xf32>
    %147 = tpu.matmul %145, %146, %cst_61 {dimension_numbers = #tpu.dot_dimension_numbers<[1], [0], [0], [1], [0, 0, 1, 1], [], []>} : vector<8x32xf32>, vector<32x64xf32>, vector<8x64xf32> -> vector<8x64xf32>
    %c0_62 = arith.constant 0 : index
    %c0_63 = arith.constant 0 : index
    %148 = vector.load %arg7[%c0_62, %c0_63] : memref<1x64xf32, #tpu.memory_space<vmem>>, vector<1x64xf32>
    %149 = vector.broadcast %148 : vector<1x64xf32> to vector<8x64xf32>
    %150 = arith.addf %147, %149 : vector<8x64xf32>
    %cst_64 = arith.constant 0.000000e+00 : f32
    %151 = vector.broadcast %cst_64 : f32 to vector<8x64xf32>
    %152 = arith.maximumf %150, %151 : vector<8x64xf32>
    %c0_65 = arith.constant 0 : index
    %c0_66 = arith.constant 0 : index
    %153 = vector.load %arg8[%c0_65, %c0_66] : memref<64x32xf32, #tpu.memory_space<vmem>>, vector<64x32xf32>
    %cst_67 = arith.constant dense<0.000000e+00> : vector<8x32xf32>
    %154 = tpu.matmul %152, %153, %cst_67 {dimension_numbers = #tpu.dot_dimension_numbers<[1], [0], [0], [1], [0, 0, 1, 1], [], []>} : vector<8x64xf32>, vector<64x32xf32>, vector<8x32xf32> -> vector<8x32xf32>
    %c0_68 = arith.constant 0 : index
    %c0_69 = arith.constant 0 : index
    %155 = vector.load %arg9[%c0_68, %c0_69] : memref<1x32xf32, #tpu.memory_space<vmem>>, vector<1x32xf32>
    %156 = vector.broadcast %155 : vector<1x32xf32> to vector<8x32xf32>
    %157 = arith.addf %154, %156 : vector<8x32xf32>
    %158 = arith.addf %157, %145 : vector<8x32xf32>
    %c0_70 = arith.constant 0 : index
    %c0_71 = arith.constant 0 : index
    %159 = vector.load %arg10[%c0_70, %c0_71] : memref<1x32xf32, #tpu.memory_space<vmem>>, vector<1x32xf32>
    %c0_72 = arith.constant 0 : index
    %c0_73 = arith.constant 0 : index
    %160 = vector.load %arg11[%c0_72, %c0_73] : memref<1x32xf32, #tpu.memory_space<vmem>>, vector<1x32xf32>
    %cst_74 = arith.constant dense<0.000000e+00> : vector<8xf32>
    %161 = vector.multi_reduction <add>, %158, %cst_74 [1] : vector<8x32xf32> to vector<8xf32>
    %162 = vector.shape_cast %161 : vector<8xf32> to vector<8x1xf32>
    %cst_75 = arith.constant 3.200000e+01 : f32
    %163 = vector.broadcast %cst_75 : f32 to vector<8x1xf32>
    %164 = arith.divf %162, %163 : vector<8x1xf32>
    %165 = vector.broadcast %164 : vector<8x1xf32> to vector<8x32xf32>
    %166 = arith.subf %158, %165 : vector<8x32xf32>
    %167 = arith.mulf %166, %166 : vector<8x32xf32>
    %cst_76 = arith.constant dense<0.000000e+00> : vector<8xf32>
    %168 = vector.multi_reduction <add>, %167, %cst_76 [1] : vector<8x32xf32> to vector<8xf32>
    %169 = vector.shape_cast %168 : vector<8xf32> to vector<8x1xf32>
    %cst_77 = arith.constant 3.200000e+01 : f32
    %170 = vector.broadcast %cst_77 : f32 to vector<8x1xf32>
    %171 = arith.divf %169, %170 : vector<8x1xf32>
    %cst_78 = arith.constant 9.99999997E-7 : f32
    %172 = vector.broadcast %cst_78 : f32 to vector<8x1xf32>
    %173 = arith.addf %171, %172 : vector<8x1xf32>
    %174 = math.rsqrt %173 : vector<8x1xf32>
    %175 = vector.broadcast %174 : vector<8x1xf32> to vector<8x32xf32>
    %176 = arith.mulf %166, %175 : vector<8x32xf32>
    %177 = vector.broadcast %159 : vector<1x32xf32> to vector<8x32xf32>
    %178 = arith.mulf %176, %177 : vector<8x32xf32>
    %179 = vector.broadcast %160 : vector<1x32xf32> to vector<8x32xf32>
    %180 = arith.addf %178, %179 : vector<8x32xf32>
    %c0_79 = arith.constant 0 : index
    %c0_80 = arith.constant 0 : index
    %c0_81 = arith.constant 0 : index
    %181 = vector.load %arg12[%c0_79, %c0_80, %c0_81] : memref<1x8x32xf32, #tpu.memory_space<vmem>>, vector<1x8x32xf32>
    %182 = vector.shape_cast %181 : vector<1x8x32xf32> to vector<8x32xf32>
    %183 = vector.shape_cast %180 : vector<8x32xf32> to vector<1x8x32xf32>
    tpu.vector_store %arg12[%c0_79, %c0_80, %c0_81], %183 {strides = array<i32>} : memref<1x8x32xf32, #tpu.memory_space<vmem>>, vector<1x8x32xf32>,
    return
  }
  func.func @transform_0(%arg0: i32) -> (i32, i32, i32) {
    %c0_i32 = arith.constant 0 : i32
    %c0_i32_0 = arith.constant 0 : i32
    %c0_i32_1 = arith.constant 0 : i32
    return %arg0, %c0_i32, %c0_i32_0 : i32, i32, i32
  }
  func.func @transform_1(%arg0: i32) -> (i32, i32, i32) {
    %c0_i32 = arith.constant 0 : i32
    %c0_i32_0 = arith.constant 0 : i32
    %c0_i32_1 = arith.constant 0 : i32
    %c0_i32_2 = arith.constant 0 : i32
    return %c0_i32, %c0_i32_0, %c0_i32_1 : i32, i32, i32
  }
  func.func @transform_2(%arg0: i32) -> (i32, i32, i32) {
    %c0_i32 = arith.constant 0 : i32
    %c0_i32_0 = arith.constant 0 : i32
    %c0_i32_1 = arith.constant 0 : i32
    %c0_i32_2 = arith.constant 0 : i32
    return %c0_i32, %c0_i32_0, %c0_i32_1 : i32, i32, i32
  }
  func.func @transform_3(%arg0: i32) -> (i32, i32) {
    %c0_i32 = arith.constant 0 : i32
    %c0_i32_0 = arith.constant 0 : i32
    %c0_i32_1 = arith.constant 0 : i32
    return %c0_i32, %c0_i32_0 : i32, i32
  }
  func.func @transform_4(%arg0: i32) -> (i32, i32) {
    %c0_i32 = arith.constant 0 : i32
    %c0_i32_0 = arith.constant 0 : i32
    %c0_i32_1 = arith.constant 0 : i32
    return %c0_i32, %c0_i32_0 : i32, i32
  }
  func.func @transform_5(%arg0: i32) -> (i32, i32) {
    %c0_i32 = arith.constant 0 : i32
    %c0_i32_0 = arith.constant 0 : i32
    %c0_i32_1 = arith.constant 0 : i32
    return %c0_i32, %c0_i32_0 : i32, i32
  }
  func.func @transform_6(%arg0: i32) -> (i32, i32) {
    %c0_i32 = arith.constant 0 : i32
    %c0_i32_0 = arith.constant 0 : i32
    %c0_i32_1 = arith.constant 0 : i32
    return %c0_i32, %c0_i32_0 : i32, i32
  }
  func.func @transform_7(%arg0: i32) -> (i32, i32) {
    %c0_i32 = arith.constant 0 : i32
    %c0_i32_0 = arith.constant 0 : i32
    %c0_i32_1 = arith.constant 0 : i32
    return %c0_i32, %c0_i32_0 : i32, i32
  }
  func.func @transform_8(%arg0: i32) -> (i32, i32) {
    %c0_i32 = arith.constant 0 : i32
    %c0_i32_0 = arith.constant 0 : i32
    %c0_i32_1 = arith.constant 0 : i32
    return %c0_i32, %c0_i32_0 : i32, i32
  }
  func.func @transform_9(%arg0: i32) -> (i32, i32) {
    %c0_i32 = arith.constant 0 : i32
    %c0_i32_0 = arith.constant 0 : i32
    %c0_i32_1 = arith.constant 0 : i32
    return %c0_i32, %c0_i32_0 : i32, i32
  }
  func.func @transform_10(%arg0: i32) -> (i32, i32) {
    %c0_i32 = arith.constant 0 : i32
    %c0_i32_0 = arith.constant 0 : i32
    %c0_i32_1 = arith.constant 0 : i32
    return %c0_i32, %c0_i32_0 : i32, i32
  }
  func.func @transform_11(%arg0: i32) -> (i32, i32, i32) {
    %c0_i32 = arith.constant 0 : i32
    %c0_i32_0 = arith.constant 0 : i32
    %c0_i32_1 = arith.constant 0 : i32
    return %arg0, %c0_i32, %c0_i32_0 : i32, i32, i32
  }
}

module attributes {stable_mosaic.version = 11 : i64} {
  func.func @_pe_ln_kernel(%arg0: i32, %arg1: i32, %arg2: memref<1x8x32xf32, #tpu.memory_space<vmem>>, %arg3: memref<8x32xf32, #tpu.memory_space<vmem>>, %arg4: memref<1x32xf32, #tpu.memory_space<vmem>>, %arg5: memref<1x32xf32, #tpu.memory_space<vmem>>, %arg6: memref<1x8x32xf32, #tpu.memory_space<vmem>>) attributes {dimension_semantics = [#tpu.dimension_semantics<parallel>, #tpu.dimension_semantics<parallel>], iteration_bounds = array<i64: 1, 2>, scalar_prefetch = 0 : i64, scratch_operands = 0 : i64, tpu.core_type = #tpu.core_type<tc>, window_params = [{transform_indices = @transform_0, window_bounds = array<i64: 1, 8, 32>}, {transform_indices = @transform_1, window_bounds = array<i64: 8, 32>}, {pipeline_mode = #tpu.pipeline_mode<synchronous>, transform_indices = @transform_2, window_bounds = array<i64: 1, 32>}, {pipeline_mode = #tpu.pipeline_mode<synchronous>, transform_indices = @transform_3, window_bounds = array<i64: 1, 32>}, {transform_indices = @transform_4, window_bounds = array<i64: 1, 8, 32>}]} {
    %c0 = arith.constant 0 : index
    %c0_0 = arith.constant 0 : index
    %c0_1 = arith.constant 0 : index
    %0 = vector.load %arg2[%c0, %c0_0, %c0_1] : memref<1x8x32xf32, #tpu.memory_space<vmem>>, vector<1x8x32xf32>
    %1 = vector.shape_cast %0 : vector<1x8x32xf32> to vector<8x32xf32>
    %c0_2 = arith.constant 0 : index
    %c0_3 = arith.constant 0 : index
    %2 = vector.load %arg3[%c0_2, %c0_3] : memref<8x32xf32, #tpu.memory_space<vmem>>, vector<8x32xf32>
    %3 = arith.addf %1, %2 : vector<8x32xf32>
    %c0_4 = arith.constant 0 : index
    %c0_5 = arith.constant 0 : index
    %4 = vector.load %arg4[%c0_4, %c0_5] : memref<1x32xf32, #tpu.memory_space<vmem>>, vector<1x32xf32>
    %c0_6 = arith.constant 0 : index
    %c0_7 = arith.constant 0 : index
    %5 = vector.load %arg5[%c0_6, %c0_7] : memref<1x32xf32, #tpu.memory_space<vmem>>, vector<1x32xf32>
    %cst = arith.constant dense<0.000000e+00> : vector<8xf32>
    %6 = vector.multi_reduction <add>, %3, %cst [1] : vector<8x32xf32> to vector<8xf32>
    %7 = vector.shape_cast %6 : vector<8xf32> to vector<8x1xf32>
    %cst_8 = arith.constant 3.200000e+01 : f32
    %8 = vector.broadcast %cst_8 : f32 to vector<8x1xf32>
    %9 = arith.divf %7, %8 : vector<8x1xf32>
    %10 = vector.broadcast %9 : vector<8x1xf32> to vector<8x32xf32>
    %11 = arith.subf %3, %10 : vector<8x32xf32>
    %12 = arith.mulf %11, %11 : vector<8x32xf32>
    %cst_9 = arith.constant dense<0.000000e+00> : vector<8xf32>
    %13 = vector.multi_reduction <add>, %12, %cst_9 [1] : vector<8x32xf32> to vector<8xf32>
    %14 = vector.shape_cast %13 : vector<8xf32> to vector<8x1xf32>
    %cst_10 = arith.constant 3.200000e+01 : f32
    %15 = vector.broadcast %cst_10 : f32 to vector<8x1xf32>
    %16 = arith.divf %14, %15 : vector<8x1xf32>
    %cst_11 = arith.constant 9.99999997E-7 : f32
    %17 = vector.broadcast %cst_11 : f32 to vector<8x1xf32>
    %18 = arith.addf %16, %17 : vector<8x1xf32>
    %19 = math.rsqrt %18 : vector<8x1xf32>
    %20 = vector.broadcast %19 : vector<8x1xf32> to vector<8x32xf32>
    %21 = arith.mulf %11, %20 : vector<8x32xf32>
    %22 = vector.broadcast %4 : vector<1x32xf32> to vector<8x32xf32>
    %23 = arith.mulf %21, %22 : vector<8x32xf32>
    %24 = vector.broadcast %5 : vector<1x32xf32> to vector<8x32xf32>
    %25 = arith.addf %23, %24 : vector<8x32xf32>
    %c0_12 = arith.constant 0 : index
    %c0_13 = arith.constant 0 : index
    %c0_14 = arith.constant 0 : index
    %26 = vector.load %arg6[%c0_12, %c0_13, %c0_14] : memref<1x8x32xf32, #tpu.memory_space<vmem>>, vector<1x8x32xf32>
    %27 = vector.shape_cast %26 : vector<1x8x32xf32> to vector<8x32xf32>
    %28 = vector.shape_cast %25 : vector<8x32xf32> to vector<1x8x32xf32>
    tpu.vector_store %arg6[%c0_12, %c0_13, %c0_14], %28 {strides = array<i32>} : memref<1x8x32xf32, #tpu.memory_space<vmem>>, vector<1x8x32xf32>,
    return
  }
  func.func @transform_0(%arg0: i32, %arg1: i32) -> (i32, i32, i32) {
    %c0_i32 = arith.constant 0 : i32
    %c0_i32_0 = arith.constant 0 : i32
    return %arg1, %arg0, %c0_i32 : i32, i32, i32
  }
  func.func @transform_1(%arg0: i32, %arg1: i32) -> (i32, i32) {
    %c0_i32 = arith.constant 0 : i32
    %c0_i32_0 = arith.constant 0 : i32
    return %arg0, %c0_i32 : i32, i32
  }
  func.func @transform_2(%arg0: i32, %arg1: i32) -> (i32, i32) {
    %c0_i32 = arith.constant 0 : i32
    %c0_i32_0 = arith.constant 0 : i32
    %c0_i32_1 = arith.constant 0 : i32
    return %c0_i32, %c0_i32_0 : i32, i32
  }
  func.func @transform_3(%arg0: i32, %arg1: i32) -> (i32, i32) {
    %c0_i32 = arith.constant 0 : i32
    %c0_i32_0 = arith.constant 0 : i32
    %c0_i32_1 = arith.constant 0 : i32
    return %c0_i32, %c0_i32_0 : i32, i32
  }
  func.func @transform_4(%arg0: i32, %arg1: i32) -> (i32, i32, i32) {
    %c0_i32 = arith.constant 0 : i32
    %c0_i32_0 = arith.constant 0 : i32
    return %arg1, %arg0, %c0_i32 : i32, i32, i32
  }
}

module attributes {stable_mosaic.version = 11 : i64} {
  func.func @_encoder_layer_kernel(%arg0: i32, %arg1: memref<1x8x32xf32, #tpu.memory_space<vmem>>, %arg2: memref<4x32x24xf32, #tpu.memory_space<vmem>>, %arg3: memref<4x8x32xf32, #tpu.memory_space<vmem>>, %arg4: memref<1x32xf32, #tpu.memory_space<vmem>>, %arg5: memref<1x32xf32, #tpu.memory_space<vmem>>, %arg6: memref<32x64xf32, #tpu.memory_space<vmem>>, %arg7: memref<1x64xf32, #tpu.memory_space<vmem>>, %arg8: memref<64x32xf32, #tpu.memory_space<vmem>>, %arg9: memref<1x32xf32, #tpu.memory_space<vmem>>, %arg10: memref<1x32xf32, #tpu.memory_space<vmem>>, %arg11: memref<1x32xf32, #tpu.memory_space<vmem>>, %arg12: memref<1x8x32xf32, #tpu.memory_space<vmem>>) attributes {dimension_semantics = [#tpu.dimension_semantics<parallel>], iteration_bounds = array<i64: 2>, scalar_prefetch = 0 : i64, scratch_operands = 0 : i64, tpu.core_type = #tpu.core_type<tc>, window_params = [{transform_indices = @transform_0, window_bounds = array<i64: 1, 8, 32>}, {pipeline_mode = #tpu.pipeline_mode<synchronous>, transform_indices = @transform_1, window_bounds = array<i64: 4, 32, 24>}, {pipeline_mode = #tpu.pipeline_mode<synchronous>, transform_indices = @transform_2, window_bounds = array<i64: 4, 8, 32>}, {pipeline_mode = #tpu.pipeline_mode<synchronous>, transform_indices = @transform_3, window_bounds = array<i64: 1, 32>}, {pipeline_mode = #tpu.pipeline_mode<synchronous>, transform_indices = @transform_4, window_bounds = array<i64: 1, 32>}, {pipeline_mode = #tpu.pipeline_mode<synchronous>, transform_indices = @transform_5, window_bounds = array<i64: 32, 64>}, {pipeline_mode = #tpu.pipeline_mode<synchronous>, transform_indices = @transform_6, window_bounds = array<i64: 1, 64>}, {pipeline_mode = #tpu.pipeline_mode<synchronous>, transform_indices = @transform_7, window_bounds = array<i64: 64, 32>}, {pipeline_mode = #tpu.pipeline_mode<synchronous>, transform_indices = @transform_8, window_bounds = array<i64: 1, 32>}, {pipeline_mode = #tpu.pipeline_mode<synchronous>, transform_indices = @transform_9, window_bounds = array<i64: 1, 32>}, {pipeline_mode = #tpu.pipeline_mode<synchronous>, transform_indices = @transform_10, window_bounds = array<i64: 1, 32>}, {transform_indices = @transform_11, window_bounds = array<i64: 1, 8, 32>}]} {
    %c0 = arith.constant 0 : index
    %c0_0 = arith.constant 0 : index
    %c0_1 = arith.constant 0 : index
    %0 = vector.load %arg1[%c0, %c0_0, %c0_1] : memref<1x8x32xf32, #tpu.memory_space<vmem>>, vector<1x8x32xf32>
    %1 = vector.shape_cast %0 : vector<1x8x32xf32> to vector<8x32xf32>
    %cst = arith.constant 0.000000e+00 : f32
    %2 = vector.broadcast %cst : f32 to vector<8x32xf32>
    %c0_i32 = arith.constant 0 : i32
    %3 = arith.index_cast %c0_i32 : i32 to index
    %c0_2 = arith.constant 0 : index
    %c0_3 = arith.constant 0 : index
    %4 = vector.load %arg2[%3, %c0_2, %c0_3] : memref<4x32x24xf32, #tpu.memory_space<vmem>>, vector<1x32x24xf32>
    %5 = vector.shape_cast %4 : vector<1x32x24xf32> to vector<32x24xf32>
    %cst_4 = arith.constant dense<0.000000e+00> : vector<8x24xf32>
    %6 = tpu.matmul %1, %5, %cst_4 {dimension_numbers = #tpu.dot_dimension_numbers<[1], [0], [0], [1], [0, 0, 1, 1], [], []>} : vector<8x32xf32>, vector<32x24xf32>, vector<8x24xf32> -> vector<8x24xf32>
    %7 = vector.extract_strided_slice %6 {offsets = [0, 0], sizes = [8, 8], strides = [1, 1]} : vector<8x24xf32> to vector<8x8xf32>
    %cst_5 = arith.constant 0.353553385 : f32
    %8 = vector.broadcast %cst_5 : f32 to vector<8x8xf32>
    %9 = arith.mulf %7, %8 : vector<8x8xf32>
    %10 = vector.extract_strided_slice %6 {offsets = [0, 8], sizes = [8, 8], strides = [1, 1]} : vector<8x24xf32> to vector<8x8xf32>
    %11 = vector.extract_strided_slice %6 {offsets = [0, 16], sizes = [8, 8], strides = [1, 1]} : vector<8x24xf32> to vector<8x8xf32>
    %cst_6 = arith.constant dense<0.000000e+00> : vector<8x8xf32>
    %12 = tpu.matmul %9, %10, %cst_6 {dimension_numbers = #tpu.dot_dimension_numbers<[1], [1], [0], [0], [0, 0, 1, 0], [], []>} : vector<8x8xf32>, vector<8x8xf32>, vector<8x8xf32> -> vector<8x8xf32>
    %cst_7 = arith.constant dense<0xFF800000> : vector<8xf32>
    %13 = vector.multi_reduction <maximumf>, %12, %cst_7 [1] : vector<8x8xf32> to vector<8xf32>
    %14 = vector.shape_cast %13 : vector<8xf32> to vector<8x1xf32>
    %15 = vector.broadcast %14 : vector<8x1xf32> to vector<8x8xf32>
    %16 = arith.subf %12, %15 : vector<8x8xf32>
    %17 = math.exp %16 : vector<8x8xf32>
    %cst_8 = arith.constant dense<0.000000e+00> : vector<8xf32>
    %18 = vector.multi_reduction <add>, %17, %cst_8 [1] : vector<8x8xf32> to vector<8xf32>
    %19 = vector.shape_cast %18 : vector<8xf32> to vector<8x1xf32>
    %20 = tpu.reciprocal %19 {approx = true} : vector<8x1xf32> -> vector<8x1xf32>
    %21 = arith.mulf %19, %20 : vector<8x1xf32>
    %cst_9 = arith.constant 2.000000e+00 : f32
    %22 = vector.broadcast %cst_9 : f32 to vector<8x1xf32>
    %23 = arith.subf %22, %21 : vector<8x1xf32>
    %24 = arith.mulf %20, %23 : vector<8x1xf32>
    %25 = vector.broadcast %24 : vector<8x1xf32> to vector<8x8xf32>
    %26 = arith.mulf %17, %25 : vector<8x8xf32>
    %cst_10 = arith.constant dense<0.000000e+00> : vector<8x8xf32>
    %27 = tpu.matmul %26, %11, %cst_10 {dimension_numbers = #tpu.dot_dimension_numbers<[1], [0], [0], [1], [0, 0, 1, 1], [], []>} : vector<8x8xf32>, vector<8x8xf32>, vector<8x8xf32> -> vector<8x8xf32>
    %28 = arith.index_cast %c0_i32 : i32 to index
    %c0_11 = arith.constant 0 : index
    %c0_12 = arith.constant 0 : index
    %29 = vector.load %arg3[%28, %c0_11, %c0_12] : memref<4x8x32xf32, #tpu.memory_space<vmem>>, vector<1x8x32xf32>
    %30 = vector.shape_cast %29 : vector<1x8x32xf32> to vector<8x32xf32>
    %cst_13 = arith.constant dense<0.000000e+00> : vector<8x32xf32>
    %31 = tpu.matmul %27, %30, %cst_13 {dimension_numbers = #tpu.dot_dimension_numbers<[1], [0], [0], [1], [0, 0, 1, 1], [], []>} : vector<8x8xf32>, vector<8x32xf32>, vector<8x32xf32> -> vector<8x32xf32>
    %32 = arith.addf %2, %31 : vector<8x32xf32>
    %c1_i32 = arith.constant 1 : i32
    %33 = arith.index_cast %c1_i32 : i32 to index
    %c0_14 = arith.constant 0 : index
    %c0_15 = arith.constant 0 : index
    %34 = vector.load %arg2[%33, %c0_14, %c0_15] : memref<4x32x24xf32, #tpu.memory_space<vmem>>, vector<1x32x24xf32>
    %35 = vector.shape_cast %34 : vector<1x32x24xf32> to vector<32x24xf32>
    %cst_16 = arith.constant dense<0.000000e+00> : vector<8x24xf32>
    %36 = tpu.matmul %1, %35, %cst_16 {dimension_numbers = #tpu.dot_dimension_numbers<[1], [0], [0], [1], [0, 0, 1, 1], [], []>} : vector<8x32xf32>, vector<32x24xf32>, vector<8x24xf32> -> vector<8x24xf32>
    %37 = vector.extract_strided_slice %36 {offsets = [0, 0], sizes = [8, 8], strides = [1, 1]} : vector<8x24xf32> to vector<8x8xf32>
    %cst_17 = arith.constant 0.353553385 : f32
    %38 = vector.broadcast %cst_17 : f32 to vector<8x8xf32>
    %39 = arith.mulf %37, %38 : vector<8x8xf32>
    %40 = vector.extract_strided_slice %36 {offsets = [0, 8], sizes = [8, 8], strides = [1, 1]} : vector<8x24xf32> to vector<8x8xf32>
    %41 = vector.extract_strided_slice %36 {offsets = [0, 16], sizes = [8, 8], strides = [1, 1]} : vector<8x24xf32> to vector<8x8xf32>
    %cst_18 = arith.constant dense<0.000000e+00> : vector<8x8xf32>
    %42 = tpu.matmul %39, %40, %cst_18 {dimension_numbers = #tpu.dot_dimension_numbers<[1], [1], [0], [0], [0, 0, 1, 0], [], []>} : vector<8x8xf32>, vector<8x8xf32>, vector<8x8xf32> -> vector<8x8xf32>
    %cst_19 = arith.constant dense<0xFF800000> : vector<8xf32>
    %43 = vector.multi_reduction <maximumf>, %42, %cst_19 [1] : vector<8x8xf32> to vector<8xf32>
    %44 = vector.shape_cast %43 : vector<8xf32> to vector<8x1xf32>
    %45 = vector.broadcast %44 : vector<8x1xf32> to vector<8x8xf32>
    %46 = arith.subf %42, %45 : vector<8x8xf32>
    %47 = math.exp %46 : vector<8x8xf32>
    %cst_20 = arith.constant dense<0.000000e+00> : vector<8xf32>
    %48 = vector.multi_reduction <add>, %47, %cst_20 [1] : vector<8x8xf32> to vector<8xf32>
    %49 = vector.shape_cast %48 : vector<8xf32> to vector<8x1xf32>
    %50 = tpu.reciprocal %49 {approx = true} : vector<8x1xf32> -> vector<8x1xf32>
    %51 = arith.mulf %49, %50 : vector<8x1xf32>
    %cst_21 = arith.constant 2.000000e+00 : f32
    %52 = vector.broadcast %cst_21 : f32 to vector<8x1xf32>
    %53 = arith.subf %52, %51 : vector<8x1xf32>
    %54 = arith.mulf %50, %53 : vector<8x1xf32>
    %55 = vector.broadcast %54 : vector<8x1xf32> to vector<8x8xf32>
    %56 = arith.mulf %47, %55 : vector<8x8xf32>
    %cst_22 = arith.constant dense<0.000000e+00> : vector<8x8xf32>
    %57 = tpu.matmul %56, %41, %cst_22 {dimension_numbers = #tpu.dot_dimension_numbers<[1], [0], [0], [1], [0, 0, 1, 1], [], []>} : vector<8x8xf32>, vector<8x8xf32>, vector<8x8xf32> -> vector<8x8xf32>
    %58 = arith.index_cast %c1_i32 : i32 to index
    %c0_23 = arith.constant 0 : index
    %c0_24 = arith.constant 0 : index
    %59 = vector.load %arg3[%58, %c0_23, %c0_24] : memref<4x8x32xf32, #tpu.memory_space<vmem>>, vector<1x8x32xf32>
    %60 = vector.shape_cast %59 : vector<1x8x32xf32> to vector<8x32xf32>
    %cst_25 = arith.constant dense<0.000000e+00> : vector<8x32xf32>
    %61 = tpu.matmul %57, %60, %cst_25 {dimension_numbers = #tpu.dot_dimension_numbers<[1], [0], [0], [1], [0, 0, 1, 1], [], []>} : vector<8x8xf32>, vector<8x32xf32>, vector<8x32xf32> -> vector<8x32xf32>
    %62 = arith.addf %32, %61 : vector<8x32xf32>
    %c2_i32 = arith.constant 2 : i32
    %63 = arith.index_cast %c2_i32 : i32 to index
    %c0_26 = arith.constant 0 : index
    %c0_27 = arith.constant 0 : index
    %64 = vector.load %arg2[%63, %c0_26, %c0_27] : memref<4x32x24xf32, #tpu.memory_space<vmem>>, vector<1x32x24xf32>
    %65 = vector.shape_cast %64 : vector<1x32x24xf32> to vector<32x24xf32>
    %cst_28 = arith.constant dense<0.000000e+00> : vector<8x24xf32>
    %66 = tpu.matmul %1, %65, %cst_28 {dimension_numbers = #tpu.dot_dimension_numbers<[1], [0], [0], [1], [0, 0, 1, 1], [], []>} : vector<8x32xf32>, vector<32x24xf32>, vector<8x24xf32> -> vector<8x24xf32>
    %67 = vector.extract_strided_slice %66 {offsets = [0, 0], sizes = [8, 8], strides = [1, 1]} : vector<8x24xf32> to vector<8x8xf32>
    %cst_29 = arith.constant 0.353553385 : f32
    %68 = vector.broadcast %cst_29 : f32 to vector<8x8xf32>
    %69 = arith.mulf %67, %68 : vector<8x8xf32>
    %70 = vector.extract_strided_slice %66 {offsets = [0, 8], sizes = [8, 8], strides = [1, 1]} : vector<8x24xf32> to vector<8x8xf32>
    %71 = vector.extract_strided_slice %66 {offsets = [0, 16], sizes = [8, 8], strides = [1, 1]} : vector<8x24xf32> to vector<8x8xf32>
    %cst_30 = arith.constant dense<0.000000e+00> : vector<8x8xf32>
    %72 = tpu.matmul %69, %70, %cst_30 {dimension_numbers = #tpu.dot_dimension_numbers<[1], [1], [0], [0], [0, 0, 1, 0], [], []>} : vector<8x8xf32>, vector<8x8xf32>, vector<8x8xf32> -> vector<8x8xf32>
    %cst_31 = arith.constant dense<0xFF800000> : vector<8xf32>
    %73 = vector.multi_reduction <maximumf>, %72, %cst_31 [1] : vector<8x8xf32> to vector<8xf32>
    %74 = vector.shape_cast %73 : vector<8xf32> to vector<8x1xf32>
    %75 = vector.broadcast %74 : vector<8x1xf32> to vector<8x8xf32>
    %76 = arith.subf %72, %75 : vector<8x8xf32>
    %77 = math.exp %76 : vector<8x8xf32>
    %cst_32 = arith.constant dense<0.000000e+00> : vector<8xf32>
    %78 = vector.multi_reduction <add>, %77, %cst_32 [1] : vector<8x8xf32> to vector<8xf32>
    %79 = vector.shape_cast %78 : vector<8xf32> to vector<8x1xf32>
    %80 = tpu.reciprocal %79 {approx = true} : vector<8x1xf32> -> vector<8x1xf32>
    %81 = arith.mulf %79, %80 : vector<8x1xf32>
    %cst_33 = arith.constant 2.000000e+00 : f32
    %82 = vector.broadcast %cst_33 : f32 to vector<8x1xf32>
    %83 = arith.subf %82, %81 : vector<8x1xf32>
    %84 = arith.mulf %80, %83 : vector<8x1xf32>
    %85 = vector.broadcast %84 : vector<8x1xf32> to vector<8x8xf32>
    %86 = arith.mulf %77, %85 : vector<8x8xf32>
    %cst_34 = arith.constant dense<0.000000e+00> : vector<8x8xf32>
    %87 = tpu.matmul %86, %71, %cst_34 {dimension_numbers = #tpu.dot_dimension_numbers<[1], [0], [0], [1], [0, 0, 1, 1], [], []>} : vector<8x8xf32>, vector<8x8xf32>, vector<8x8xf32> -> vector<8x8xf32>
    %88 = arith.index_cast %c2_i32 : i32 to index
    %c0_35 = arith.constant 0 : index
    %c0_36 = arith.constant 0 : index
    %89 = vector.load %arg3[%88, %c0_35, %c0_36] : memref<4x8x32xf32, #tpu.memory_space<vmem>>, vector<1x8x32xf32>
    %90 = vector.shape_cast %89 : vector<1x8x32xf32> to vector<8x32xf32>
    %cst_37 = arith.constant dense<0.000000e+00> : vector<8x32xf32>
    %91 = tpu.matmul %87, %90, %cst_37 {dimension_numbers = #tpu.dot_dimension_numbers<[1], [0], [0], [1], [0, 0, 1, 1], [], []>} : vector<8x8xf32>, vector<8x32xf32>, vector<8x32xf32> -> vector<8x32xf32>
    %92 = arith.addf %62, %91 : vector<8x32xf32>
    %c3_i32 = arith.constant 3 : i32
    %93 = arith.index_cast %c3_i32 : i32 to index
    %c0_38 = arith.constant 0 : index
    %c0_39 = arith.constant 0 : index
    %94 = vector.load %arg2[%93, %c0_38, %c0_39] : memref<4x32x24xf32, #tpu.memory_space<vmem>>, vector<1x32x24xf32>
    %95 = vector.shape_cast %94 : vector<1x32x24xf32> to vector<32x24xf32>
    %cst_40 = arith.constant dense<0.000000e+00> : vector<8x24xf32>
    %96 = tpu.matmul %1, %95, %cst_40 {dimension_numbers = #tpu.dot_dimension_numbers<[1], [0], [0], [1], [0, 0, 1, 1], [], []>} : vector<8x32xf32>, vector<32x24xf32>, vector<8x24xf32> -> vector<8x24xf32>
    %97 = vector.extract_strided_slice %96 {offsets = [0, 0], sizes = [8, 8], strides = [1, 1]} : vector<8x24xf32> to vector<8x8xf32>
    %cst_41 = arith.constant 0.353553385 : f32
    %98 = vector.broadcast %cst_41 : f32 to vector<8x8xf32>
    %99 = arith.mulf %97, %98 : vector<8x8xf32>
    %100 = vector.extract_strided_slice %96 {offsets = [0, 8], sizes = [8, 8], strides = [1, 1]} : vector<8x24xf32> to vector<8x8xf32>
    %101 = vector.extract_strided_slice %96 {offsets = [0, 16], sizes = [8, 8], strides = [1, 1]} : vector<8x24xf32> to vector<8x8xf32>
    %cst_42 = arith.constant dense<0.000000e+00> : vector<8x8xf32>
    %102 = tpu.matmul %99, %100, %cst_42 {dimension_numbers = #tpu.dot_dimension_numbers<[1], [1], [0], [0], [0, 0, 1, 0], [], []>} : vector<8x8xf32>, vector<8x8xf32>, vector<8x8xf32> -> vector<8x8xf32>
    %cst_43 = arith.constant dense<0xFF800000> : vector<8xf32>
    %103 = vector.multi_reduction <maximumf>, %102, %cst_43 [1] : vector<8x8xf32> to vector<8xf32>
    %104 = vector.shape_cast %103 : vector<8xf32> to vector<8x1xf32>
    %105 = vector.broadcast %104 : vector<8x1xf32> to vector<8x8xf32>
    %106 = arith.subf %102, %105 : vector<8x8xf32>
    %107 = math.exp %106 : vector<8x8xf32>
    %cst_44 = arith.constant dense<0.000000e+00> : vector<8xf32>
    %108 = vector.multi_reduction <add>, %107, %cst_44 [1] : vector<8x8xf32> to vector<8xf32>
    %109 = vector.shape_cast %108 : vector<8xf32> to vector<8x1xf32>
    %110 = tpu.reciprocal %109 {approx = true} : vector<8x1xf32> -> vector<8x1xf32>
    %111 = arith.mulf %109, %110 : vector<8x1xf32>
    %cst_45 = arith.constant 2.000000e+00 : f32
    %112 = vector.broadcast %cst_45 : f32 to vector<8x1xf32>
    %113 = arith.subf %112, %111 : vector<8x1xf32>
    %114 = arith.mulf %110, %113 : vector<8x1xf32>
    %115 = vector.broadcast %114 : vector<8x1xf32> to vector<8x8xf32>
    %116 = arith.mulf %107, %115 : vector<8x8xf32>
    %cst_46 = arith.constant dense<0.000000e+00> : vector<8x8xf32>
    %117 = tpu.matmul %116, %101, %cst_46 {dimension_numbers = #tpu.dot_dimension_numbers<[1], [0], [0], [1], [0, 0, 1, 1], [], []>} : vector<8x8xf32>, vector<8x8xf32>, vector<8x8xf32> -> vector<8x8xf32>
    %118 = arith.index_cast %c3_i32 : i32 to index
    %c0_47 = arith.constant 0 : index
    %c0_48 = arith.constant 0 : index
    %119 = vector.load %arg3[%118, %c0_47, %c0_48] : memref<4x8x32xf32, #tpu.memory_space<vmem>>, vector<1x8x32xf32>
    %120 = vector.shape_cast %119 : vector<1x8x32xf32> to vector<8x32xf32>
    %cst_49 = arith.constant dense<0.000000e+00> : vector<8x32xf32>
    %121 = tpu.matmul %117, %120, %cst_49 {dimension_numbers = #tpu.dot_dimension_numbers<[1], [0], [0], [1], [0, 0, 1, 1], [], []>} : vector<8x8xf32>, vector<8x32xf32>, vector<8x32xf32> -> vector<8x32xf32>
    %122 = arith.addf %92, %121 : vector<8x32xf32>
    %c4_i32 = arith.constant 4 : i32
    %123 = arith.addf %122, %1 : vector<8x32xf32>
    %c0_50 = arith.constant 0 : index
    %c0_51 = arith.constant 0 : index
    %124 = vector.load %arg4[%c0_50, %c0_51] : memref<1x32xf32, #tpu.memory_space<vmem>>, vector<1x32xf32>
    %c0_52 = arith.constant 0 : index
    %c0_53 = arith.constant 0 : index
    %125 = vector.load %arg5[%c0_52, %c0_53] : memref<1x32xf32, #tpu.memory_space<vmem>>, vector<1x32xf32>
    %cst_54 = arith.constant dense<0.000000e+00> : vector<8xf32>
    %126 = vector.multi_reduction <add>, %123, %cst_54 [1] : vector<8x32xf32> to vector<8xf32>
    %127 = vector.shape_cast %126 : vector<8xf32> to vector<8x1xf32>
    %cst_55 = arith.constant 3.200000e+01 : f32
    %128 = vector.broadcast %cst_55 : f32 to vector<8x1xf32>
    %129 = arith.divf %127, %128 : vector<8x1xf32>
    %130 = vector.broadcast %129 : vector<8x1xf32> to vector<8x32xf32>
    %131 = arith.subf %123, %130 : vector<8x32xf32>
    %132 = arith.mulf %131, %131 : vector<8x32xf32>
    %cst_56 = arith.constant dense<0.000000e+00> : vector<8xf32>
    %133 = vector.multi_reduction <add>, %132, %cst_56 [1] : vector<8x32xf32> to vector<8xf32>
    %134 = vector.shape_cast %133 : vector<8xf32> to vector<8x1xf32>
    %cst_57 = arith.constant 3.200000e+01 : f32
    %135 = vector.broadcast %cst_57 : f32 to vector<8x1xf32>
    %136 = arith.divf %134, %135 : vector<8x1xf32>
    %cst_58 = arith.constant 9.99999997E-7 : f32
    %137 = vector.broadcast %cst_58 : f32 to vector<8x1xf32>
    %138 = arith.addf %136, %137 : vector<8x1xf32>
    %139 = math.rsqrt %138 : vector<8x1xf32>
    %140 = vector.broadcast %139 : vector<8x1xf32> to vector<8x32xf32>
    %141 = arith.mulf %131, %140 : vector<8x32xf32>
    %142 = vector.broadcast %124 : vector<1x32xf32> to vector<8x32xf32>
    %143 = arith.mulf %141, %142 : vector<8x32xf32>
    %144 = vector.broadcast %125 : vector<1x32xf32> to vector<8x32xf32>
    %145 = arith.addf %143, %144 : vector<8x32xf32>
    %c0_59 = arith.constant 0 : index
    %c0_60 = arith.constant 0 : index
    %146 = vector.load %arg6[%c0_59, %c0_60] : memref<32x64xf32, #tpu.memory_space<vmem>>, vector<32x64xf32>
    %cst_61 = arith.constant dense<0.000000e+00> : vector<8x64xf32>
    %147 = tpu.matmul %145, %146, %cst_61 {dimension_numbers = #tpu.dot_dimension_numbers<[1], [0], [0], [1], [0, 0, 1, 1], [], []>} : vector<8x32xf32>, vector<32x64xf32>, vector<8x64xf32> -> vector<8x64xf32>
    %c0_62 = arith.constant 0 : index
    %c0_63 = arith.constant 0 : index
    %148 = vector.load %arg7[%c0_62, %c0_63] : memref<1x64xf32, #tpu.memory_space<vmem>>, vector<1x64xf32>
    %149 = vector.broadcast %148 : vector<1x64xf32> to vector<8x64xf32>
    %150 = arith.addf %147, %149 : vector<8x64xf32>
    %cst_64 = arith.constant 0.000000e+00 : f32
    %151 = vector.broadcast %cst_64 : f32 to vector<8x64xf32>
    %152 = arith.maximumf %150, %151 : vector<8x64xf32>
    %c0_65 = arith.constant 0 : index
    %c0_66 = arith.constant 0 : index
    %153 = vector.load %arg8[%c0_65, %c0_66] : memref<64x32xf32, #tpu.memory_space<vmem>>, vector<64x32xf32>
    %cst_67 = arith.constant dense<0.000000e+00> : vector<8x32xf32>
    %154 = tpu.matmul %152, %153, %cst_67 {dimension_numbers = #tpu.dot_dimension_numbers<[1], [0], [0], [1], [0, 0, 1, 1], [], []>} : vector<8x64xf32>, vector<64x32xf32>, vector<8x32xf32> -> vector<8x32xf32>
    %c0_68 = arith.constant 0 : index
    %c0_69 = arith.constant 0 : index
    %155 = vector.load %arg9[%c0_68, %c0_69] : memref<1x32xf32, #tpu.memory_space<vmem>>, vector<1x32xf32>
    %156 = vector.broadcast %155 : vector<1x32xf32> to vector<8x32xf32>
    %157 = arith.addf %154, %156 : vector<8x32xf32>
    %158 = arith.addf %157, %145 : vector<8x32xf32>
    %c0_70 = arith.constant 0 : index
    %c0_71 = arith.constant 0 : index
    %159 = vector.load %arg10[%c0_70, %c0_71] : memref<1x32xf32, #tpu.memory_space<vmem>>, vector<1x32xf32>
    %c0_72 = arith.constant 0 : index
    %c0_73 = arith.constant 0 : index
    %160 = vector.load %arg11[%c0_72, %c0_73] : memref<1x32xf32, #tpu.memory_space<vmem>>, vector<1x32xf32>
    %cst_74 = arith.constant dense<0.000000e+00> : vector<8xf32>
    %161 = vector.multi_reduction <add>, %158, %cst_74 [1] : vector<8x32xf32> to vector<8xf32>
    %162 = vector.shape_cast %161 : vector<8xf32> to vector<8x1xf32>
    %cst_75 = arith.constant 3.200000e+01 : f32
    %163 = vector.broadcast %cst_75 : f32 to vector<8x1xf32>
    %164 = arith.divf %162, %163 : vector<8x1xf32>
    %165 = vector.broadcast %164 : vector<8x1xf32> to vector<8x32xf32>
    %166 = arith.subf %158, %165 : vector<8x32xf32>
    %167 = arith.mulf %166, %166 : vector<8x32xf32>
    %cst_76 = arith.constant dense<0.000000e+00> : vector<8xf32>
    %168 = vector.multi_reduction <add>, %167, %cst_76 [1] : vector<8x32xf32> to vector<8xf32>
    %169 = vector.shape_cast %168 : vector<8xf32> to vector<8x1xf32>
    %cst_77 = arith.constant 3.200000e+01 : f32
    %170 = vector.broadcast %cst_77 : f32 to vector<8x1xf32>
    %171 = arith.divf %169, %170 : vector<8x1xf32>
    %cst_78 = arith.constant 9.99999997E-7 : f32
    %172 = vector.broadcast %cst_78 : f32 to vector<8x1xf32>
    %173 = arith.addf %171, %172 : vector<8x1xf32>
    %174 = math.rsqrt %173 : vector<8x1xf32>
    %175 = vector.broadcast %174 : vector<8x1xf32> to vector<8x32xf32>
    %176 = arith.mulf %166, %175 : vector<8x32xf32>
    %177 = vector.broadcast %159 : vector<1x32xf32> to vector<8x32xf32>
    %178 = arith.mulf %176, %177 : vector<8x32xf32>
    %179 = vector.broadcast %160 : vector<1x32xf32> to vector<8x32xf32>
    %180 = arith.addf %178, %179 : vector<8x32xf32>
    %c0_79 = arith.constant 0 : index
    %c0_80 = arith.constant 0 : index
    %c0_81 = arith.constant 0 : index
    %181 = vector.load %arg12[%c0_79, %c0_80, %c0_81] : memref<1x8x32xf32, #tpu.memory_space<vmem>>, vector<1x8x32xf32>
    %182 = vector.shape_cast %181 : vector<1x8x32xf32> to vector<8x32xf32>
    %183 = vector.shape_cast %180 : vector<8x32xf32> to vector<1x8x32xf32>
    tpu.vector_store %arg12[%c0_79, %c0_80, %c0_81], %183 {strides = array<i32>} : memref<1x8x32xf32, #tpu.memory_space<vmem>>, vector<1x8x32xf32>,
    return
  }
  func.func @transform_0(%arg0: i32) -> (i32, i32, i32) {
    %c0_i32 = arith.constant 0 : i32
    %c0_i32_0 = arith.constant 0 : i32
    %c0_i32_1 = arith.constant 0 : i32
    return %arg0, %c0_i32, %c0_i32_0 : i32, i32, i32
  }
  func.func @transform_1(%arg0: i32) -> (i32, i32, i32) {
    %c0_i32 = arith.constant 0 : i32
    %c0_i32_0 = arith.constant 0 : i32
    %c0_i32_1 = arith.constant 0 : i32
    %c0_i32_2 = arith.constant 0 : i32
    return %c0_i32, %c0_i32_0, %c0_i32_1 : i32, i32, i32
  }
  func.func @transform_2(%arg0: i32) -> (i32, i32, i32) {
    %c0_i32 = arith.constant 0 : i32
    %c0_i32_0 = arith.constant 0 : i32
    %c0_i32_1 = arith.constant 0 : i32
    %c0_i32_2 = arith.constant 0 : i32
    return %c0_i32, %c0_i32_0, %c0_i32_1 : i32, i32, i32
  }
  func.func @transform_3(%arg0: i32) -> (i32, i32) {
    %c0_i32 = arith.constant 0 : i32
    %c0_i32_0 = arith.constant 0 : i32
    %c0_i32_1 = arith.constant 0 : i32
    return %c0_i32, %c0_i32_0 : i32, i32
  }
  func.func @transform_4(%arg0: i32) -> (i32, i32) {
    %c0_i32 = arith.constant 0 : i32
    %c0_i32_0 = arith.constant 0 : i32
    %c0_i32_1 = arith.constant 0 : i32
    return %c0_i32, %c0_i32_0 : i32, i32
  }
  func.func @transform_5(%arg0: i32) -> (i32, i32) {
    %c0_i32 = arith.constant 0 : i32
    %c0_i32_0 = arith.constant 0 : i32
    %c0_i32_1 = arith.constant 0 : i32
    return %c0_i32, %c0_i32_0 : i32, i32
  }
  func.func @transform_6(%arg0: i32) -> (i32, i32) {
    %c0_i32 = arith.constant 0 : i32
    %c0_i32_0 = arith.constant 0 : i32
    %c0_i32_1 = arith.constant 0 : i32
    return %c0_i32, %c0_i32_0 : i32, i32
  }
  func.func @transform_7(%arg0: i32) -> (i32, i32) {
    %c0_i32 = arith.constant 0 : i32
    %c0_i32_0 = arith.constant 0 : i32
    %c0_i32_1 = arith.constant 0 : i32
    return %c0_i32, %c0_i32_0 : i32, i32
  }
  func.func @transform_8(%arg0: i32) -> (i32, i32) {
    %c0_i32 = arith.constant 0 : i32
    %c0_i32_0 = arith.constant 0 : i32
    %c0_i32_1 = arith.constant 0 : i32
    return %c0_i32, %c0_i32_0 : i32, i32
  }
  func.func @transform_9(%arg0: i32) -> (i32, i32) {
    %c0_i32 = arith.constant 0 : i32
    %c0_i32_0 = arith.constant 0 : i32
    %c0_i32_1 = arith.constant 0 : i32
    return %c0_i32, %c0_i32_0 : i32, i32
  }
  func.func @transform_10(%arg0: i32) -> (i32, i32) {
    %c0_i32 = arith.constant 0 : i32
    %c0_i32_0 = arith.constant 0 : i32
    %c0_i32_1 = arith.constant 0 : i32
    return %c0_i32, %c0_i32_0 : i32, i32
  }
  func.func @transform_11(%arg0: i32) -> (i32, i32, i32) {
    %c0_i32 = arith.constant 0 : i32
    %c0_i32_0 = arith.constant 0 : i32
    %c0_i32_1 = arith.constant 0 : i32
    return %arg0, %c0_i32, %c0_i32_0 : i32, i32, i32
  }
}

</mosaic_0001>

<llo_original>
// kernel: tpu_custom_call.1
$region0: #{tpu_custom_call.1}
  #allocation0 [shape = 'u32[]', space=smem, size = 0x4, offset = 0x4, fixed_abs, tag = 'smem constant byte address 0x4 - core index']
  #allocation1 [shape = 'u32[144,128]{1,0:T(1,128)}', space=vmem, size = 0x12000, scoped, tag = 'internal scratch']
  %s0 = inlined_call_operand.hbm [shape: f32[8,128], index: 0, kind: input, shape index: {}]
  %s1 = inlined_call_operand.hbm [shape: f32[8,128], index: 1, kind: output, shape index: {}]
  %s2 = sld [smem:[#allocation0]]
  $region41: #{tpu_custom_call.1} parent=0
    _
  %s4 = ssub.s32 1, %s2
  %s5 = scalar_select 0, %s4, %s2
  $region1: #{tpu_custom_call.1} parent=0
    #allocation2 [shape = 'u8[4096]{0}', space=vmem, size = 0x1000, scoped, tag = 'input window, operand 0, single buffered']
    #allocation3 [shape = 's32[2]{0}', space=sflag, size = 0x8, scoped, tag = 'scoped memory for tpu_custom_call.1']
    #allocation4 [shape = 's32[2]{0}', space=sflag, size = 0x8, scoped, tag = 'scoped memory for tpu_custom_call.1']
    #allocation5 [shape = 'u8[4096]{0}', space=vmem, size = 0x1000, scoped, tag = 'output window, operand 0, single buffered']
    %6 = vsyncpa [#allocation3], 0
    %7 = vsyncpa [#allocation4], 0
    loop: start=0, step=1, limit=4
    $region2: #{tpu_custom_call.1} parent=1 // loop_pre_header
      _
    $region3: #{tpu_custom_call.1} parent=1 // loop_header
      %s9 = sphi 0, %s13
      %p10 = scmp.ge.s32.totalorder %s9, 4
      %s17 = sphi 0, %s17
      %s19 = sphi 0, %s17
      %s20 = sphi 0, %s19
      %s34 = sphi 0, %s20
      %s38 = sphi 0, %s38
      %s40 = sphi 0, %s38
      %s41 = sphi 0, %s40
      %s55 = sphi 0, %s41
    $region4: #{tpu_custom_call.1} parent=1 // loop_header_branch
      %12 = sbr.rel (%p10) target = $region8
    $region5: #{tpu_custom_call.1} parent=1 // loop_body
      %s14 = ssub.s32 %s9, 1
      %s15 = ssub.s32 %s9, 2
      %s16 = sadd.s32 %s9, 1
      %s18 = sadd.s32 %s17, 1
      %p21 = scmp.eq.s32.totalorder %s9, 1
      %p22 = scmp.ne.s32.totalorder %s17, %s19
      %p23 = scmp.eq.s32.totalorder %s9, 0
      %p24 = por %p22, %p23
      %p25 = scmp.ne.s32.totalorder %s17, %s19
      %p26 = scmp.eq.s32.totalorder %s14, 1
      %p27 = por %p25, %p26
      %p28 = scmp.ne.s32.totalorder %s19, %s20
      %p29 = scmp.eq.s32.totalorder %s14, 0
      %p30 = por %p28, %p29
      %p31 = scmp.ne.s32.totalorder %s19, %s20
      %p32 = scmp.eq.s32.totalorder %s15, 1
      %p33 = por %p31, %p32
      %p35 = scmp.ne.s32.totalorder %s20, %s34
      %p36 = scmp.eq.s32.totalorder %s15, 0
      %p37 = por %p35, %p36
      %s39 = sadd.s32 %s38, 1
      %p42 = scmp.eq.s32.totalorder %s9, 1
      %p43 = scmp.ne.s32.totalorder %s38, %s40
      %p44 = scmp.eq.s32.totalorder %s9, 0
      %p45 = por %p43, %p44
      %p46 = scmp.ne.s32.totalorder %s38, %s40
      %p47 = scmp.eq.s32.totalorder %s14, 1
      %p48 = por %p46, %p47
      %p49 = scmp.ne.s32.totalorder %s40, %s41
      %p50 = scmp.eq.s32.totalorder %s14, 0
      %p51 = por %p49, %p50
      %p52 = scmp.ne.s32.totalorder %s40, %s41
      %p53 = scmp.eq.s32.totalorder %s15, 1
      %p54 = por %p52, %p53
      %p56 = scmp.ne.s32.totalorder %s41, %s55
      %p57 = scmp.eq.s32.totalorder %s15, 0
      %p58 = por %p56, %p57
      %p59 = scmp.le.s32.totalorder 1, %s9
      %p60 = scmp.lt.s32.totalorder %s9, 3
      %p61 = pnand %p59, %p60
      %p62 = pneg %p61
      // Predicated region
      $region9: #{tpu_custom_call.1} parent=5 // pred_check
        _
      $region10: #{tpu_custom_call.1} parent=5 // pred_check_branch
        %64 = sbr.rel (%p61) target = $region12
      $region11: #{tpu_custom_call.1} parent=5 // pred_region
        %s65 = ssub.s32 %s9, 1
        // Predicated region
        $region13: #{tpu_custom_call.1} parent=11 // pred_check
          %p66 = pneg %p30
        $region14: #{tpu_custom_call.1} parent=11 // pred_check_branch
          %68 = sbr.rel (%p66) target = $region16
        $region15: #{tpu_custom_call.1} parent=11 // pred_region
          %s70 = ssub.s32 128, 128
          %71 = vsyncadd [#allocation3], %s70
          %s73 = sshll.u32 [#allocation2], 4
          %s74 = int_to_ptr.vmem [resolvable:$true] %s73
          %76 = dma.hbm_to_vmem [thread:$0]  %s0, 128, %s74, [#allocation3]
        $region16: #{tpu_custom_call.1} parent=11 // pred_fallthru
          _
      $region12: #{tpu_custom_call.1} parent=5 // pred_fallthru
        _
      %p77 = scmp.lt.s32.totalorder %s9, 2
      // Predicated region
      $region17: #{tpu_custom_call.1} parent=5 // pred_check
        %p78 = pneg %p77
      $region18: #{tpu_custom_call.1} parent=5 // pred_check_branch
        %80 = sbr.rel (%p78) target = $region20
      $region19: #{tpu_custom_call.1} parent=5 // pred_region
        _
      $region20: #{tpu_custom_call.1} parent=5 // pred_fallthru
        _
      %p81 = scmp.le.s32.totalorder 1, %s9
      %p82 = scmp.lt.s32.totalorder %s9, 3
      %p83 = pnand %p81, %p82
      %p84 = pneg %p83
      // Predicated region
      $region21: #{tpu_custom_call.1} parent=5 // pred_check
        _
      $region22: #{tpu_custom_call.1} parent=5 // pred_check_branch
        %86 = sbr.rel (%p83) target = $region24
      $region23: #{tpu_custom_call.1} parent=5 // pred_region
        %s87 = ssub.s32 %s9, 1
        // Predicated region
        $region25: #{tpu_custom_call.1} parent=23 // pred_check
          %p88 = pneg %p30
        $region26: #{tpu_custom_call.1} parent=23 // pred_check_branch
          %90 = sbr.rel (%p88) target = $region28
        $region27: #{tpu_custom_call.1} parent=23 // pred_region
          %91 = dma.done [#allocation3], 128
        $region28: #{tpu_custom_call.1} parent=23 // pred_fallthru
          _
        %p92 = pneg %p30
        %p93 = pneg %p27
        %p94 = pneg %p51
        %p95 = pneg %p48
        %v96 = vld [vmem:[#allocation2] sm:$0xff]
        %v97 = vmul.f32 %v96, 2.0
        %98 = vst [vmem:[#allocation5] sm:$0xff] %v97
        // Predicated region
        $region29: #{tpu_custom_call.1} parent=23 // pred_check
          %p99 = pneg %p48
        $region30: #{tpu_custom_call.1} parent=23 // pred_check_branch
          %101 = sbr.rel (%p99) target = $region32
        $region31: #{tpu_custom_call.1} parent=23 // pred_region
          %s103 = ssub.s32 128, 128
          %104 = vsyncadd [#allocation4], %s103
          %s106 = sshll.u32 [#allocation5], 4
          %s107 = int_to_ptr.vmem [resolvable:$true] %s106
          %109 = dma.vmem_to_hbm [thread:$0]  %s107, 128, %s1, [#allocation4]
        $region32: #{tpu_custom_call.1} parent=23 // pred_fallthru
          _
        // Predicated region
        $region33: #{tpu_custom_call.1} parent=23 // pred_check
          %p110 = pneg %p48
        $region34: #{tpu_custom_call.1} parent=23 // pred_check_branch
          %112 = sbr.rel (%p110) target = $region36
        $region35: #{tpu_custom_call.1} parent=23 // pred_region
          %113 = dma.done [#allocation4], 128
        $region36: #{tpu_custom_call.1} parent=23 // pred_fallthru
          _
      $region24: #{tpu_custom_call.1} parent=5 // pred_fallthru
        _
      %p114 = scmp.le.s32.totalorder 2, %s9
      // Predicated region
      $region37: #{tpu_custom_call.1} parent=5 // pred_check
        %p115 = pneg %p114
      $region38: #{tpu_custom_call.1} parent=5 // pred_check_branch
        %117 = sbr.rel (%p115) target = $region40
      $region39: #{tpu_custom_call.1} parent=5 // pred_region
        %s118 = ssub.s32 %s9, 2
      $region40: #{tpu_custom_call.1} parent=5 // pred_fallthru
        _
    $region6: #{tpu_custom_call.1} parent=1 // loop_footer
      %s13 = sadd.s32 1, %s9
    $region7: #{tpu_custom_call.1} parent=1 // loop_footer_branch
      %8 = sbr.rel target = $region3
    $region8: #{tpu_custom_call.1} parent=1 // loop_exit
      _
    %119 = vsyncpa [#allocation3], 1
    %s120 = scalar_lea.sflag [#allocation3], 1
    %121 = vsyncpa %s120, 1
    %122 = vsyncpa [#allocation4], 1
    %s123 = scalar_lea.sflag [#allocation4], 1
    %124 = vsyncpa %s123, 1

// kernel: forward.3
$region0: #{forward.3}
  #allocation0 [shape = 'u32[]', space=smem, size = 0x4, offset = 0x4, fixed_abs, tag = 'smem constant byte address 0x4 - core index']
  #allocation1 [shape = 'u32[144,128]{1,0:T(1,128)}', space=vmem, size = 0x12000, scoped, tag = 'internal scratch']
  %s0 = inlined_call_operand.vmem [shape: f32[2,8,32], index: 0, kind: input, shape index: {}, may-alias: {0,4}]
  %s1 = inlined_call_operand.vmem [shape: f32[200,32], index: 1, kind: input, shape index: {}]
  %s2 = inlined_call_operand.vmem [shape: f32[1,32], index: 2, kind: input, shape index: {}]
  %s3 = inlined_call_operand.vmem [shape: f32[1,32], index: 3, kind: input, shape index: {}]
  %s4 = inlined_call_operand.vmem [shape: f32[2,8,32], index: 4, kind: output, shape index: {}, may-alias: {0,4}]
  %s5 = sld [smem:[#allocation0]]
  $region49: #{forward.3} parent=0
    _
  %s7 = ssub.s32 1, %s5
  %s8 = scalar_select 0, %s7, %s5
  loop: start=0, step=1, limit=4
  $region2: #{forward.3} parent=0 // loop_pre_header
    _
  $region3: #{forward.3} parent=0 // loop_header
    %s10 = sphi 0, %s14
    %p11 = scmp.ge.s32.totalorder %s10, 4
    %s17 = sphi 0, %s29
    %s18 = sphi 0, %s25
    %s19 = sphi 0, %s17
    %s20 = sphi 0, %s18
    %s21 = sphi 0, %s19
    %s22 = sphi 0, %s20
    %s34 = sphi 0, %s36
    %s37 = sphi 0, %s34
    %s38 = sphi 0, %s37
    %s54 = sphi 0, %s38
    %s60 = sphi 0, %s62
    %s63 = sphi 0, %s60
    %s64 = sphi 0, %s63
    %s80 = sphi 0, %s64
    %s84 = sphi 0, %s84
    %s86 = sphi 0, %s84
    %s87 = sphi 0, %s86
    %s101 = sphi 0, %s87
    %s105 = sphi 0, %s105
    %s107 = sphi 0, %s105
    %s108 = sphi 0, %s107
    %s122 = sphi 0, %s108
    %s130 = sphi 0, %s132
    %s133 = sphi 0, %s130
    %s134 = sphi 0, %s133
    %s150 = sphi 0, %s134
  $region4: #{forward.3} parent=0 // loop_header_branch
    %13 = sbr.rel (%p11) target = $region8
  $region5: #{forward.3} parent=0 // loop_body
    %s15 = ssub.s32 %s10, 1
    %s16 = ssub.s32 %s10, 2
    %s23 = sadd.s32 1, %s18
    %p24 = scmp.ge.s32.totalorder %s23, 2
    %s25 = scalar_select %p24, 0, %s23
    %s26 = sadd.s32 1, %s17
    %s27 = scalar_select %p24, %s26, %s17
    %p28 = scmp.ge.s32.totalorder %s27, 1
    %s29 = scalar_select %p28, 0, %s27
    %s30 = ssub.s32 %s18, %s25
    %s31 = ssub.s32 %s17, %s29
    %s32 = sor.u32 %s30, %s31
    %p33 = scmp.eq.s32.totalorder %s32, 0
    %s35 = sadd.s32 %s34, 1
    %s36 = scalar_select %p33, %s34, %s35
    %p39 = pneg %p33
    %p40 = scmp.eq.s32.totalorder %s10, 1
    %p41 = por %p39, %p40
    %p42 = scmp.ne.s32.totalorder %s34, %s37
    %p43 = scmp.eq.s32.totalorder %s10, 0
    %p44 = por %p42, %p43
    %p45 = scmp.ne.s32.totalorder %s34, %s37
    %p46 = scmp.eq.s32.totalorder %s15, 1
    %p47 = por %p45, %p46
    %p48 = scmp.ne.s32.totalorder %s37, %s38
    %p49 = scmp.eq.s32.totalorder %s15, 0
    %p50 = por %p48, %p49
    %p51 = scmp.ne.s32.totalorder %s37, %s38
    %p52 = scmp.eq.s32.totalorder %s16, 1
    %p53 = por %p51, %p52
    %p55 = scmp.ne.s32.totalorder %s38, %s54
    %p56 = scmp.eq.s32.totalorder %s16, 0
    %p57 = por %p55, %p56
    %s58 = ssub.s32 %s17, %s29
    %p59 = scmp.eq.s32.totalorder %s58, 0
    %s61 = sadd.s32 %s60, 1
    %s62 = scalar_select %p59, %s60, %s61
    %p65 = pneg %p59
    %p66 = scmp.eq.s32.totalorder %s10, 1
    %p67 = por %p65, %p66
    %p68 = scmp.ne.s32.totalorder %s60, %s63
    %p69 = scmp.eq.s32.totalorder %s10, 0
    %p70 = por %p68, %p69
    %p71 = scmp.ne.s32.totalorder %s60, %s63
    %p72 = scmp.eq.s32.totalorder %s15, 1
    %p73 = por %p71, %p72
    %p74 = scmp.ne.s32.totalorder %s63, %s64
    %p75 = scmp.eq.s32.totalorder %s15, 0
    %p76 = por %p74, %p75
    %p77 = scmp.ne.s32.totalorder %s63, %s64
    %p78 = scmp.eq.s32.totalorder %s16, 1
    %p79 = por %p77, %p78
    %p81 = scmp.ne.s32.totalorder %s64, %s80
    %p82 = scmp.eq.s32.totalorder %s16, 0
    %p83 = por %p81, %p82
    %s85 = sadd.s32 %s84, 1
    %p88 = scmp.eq.s32.totalorder %s10, 1
    %p89 = scmp.ne.s32.totalorder %s84, %s86
    %p90 = scmp.eq.s32.totalorder %s10, 0
    %p91 = por %p89, %p90
    %p92 = scmp.ne.s32.totalorder %s84, %s86
    %p93 = scmp.eq.s32.totalorder %s15, 1
    %p94 = por %p92, %p93
    %p95 = scmp.ne.s32.totalorder %s86, %s87
    %p96 = scmp.eq.s32.totalorder %s15, 0
    %p97 = por %p95, %p96
    %p98 = scmp.ne.s32.totalorder %s86, %s87
    %p99 = scmp.eq.s32.totalorder %s16, 1
    %p100 = por %p98, %p99
    %p102 = scmp.ne.s32.totalorder %s87, %s101
    %p103 = scmp.eq.s32.totalorder %s16, 0
    %p104 = por %p102, %p103
    %s106 = sadd.s32 %s105, 1
    %p109 = scmp.eq.s32.totalorder %s10, 1
    %p110 = scmp.ne.s32.totalorder %s105, %s107
    %p111 = scmp.eq.s32.totalorder %s10, 0
    %p112 = por %p110, %p111
    %p113 = scmp.ne.s32.totalorder %s105, %s107
    %p114 = scmp.eq.s32.totalorder %s15, 1
    %p115 = por %p113, %p114
    %p116 = scmp.ne.s32.totalorder %s107, %s108
    %p117 = scmp.eq.s32.totalorder %s15, 0
    %p118 = por %p116, %p117
    %p119 = scmp.ne.s32.totalorder %s107, %s108
    %p120 = scmp.eq.s32.totalorder %s16, 1
    %p121 = por %p119, %p120
    %p123 = scmp.ne.s32.totalorder %s108, %s122
    %p124 = scmp.eq.s32.totalorder %s16, 0
    %p125 = por %p123, %p124
    %s126 = ssub.s32 %s18, %s25
    %s127 = ssub.s32 %s17, %s29
    %s128 = sor.u32 %s126, %s127
    %p129 = scmp.eq.s32.totalorder %s128, 0
    %s131 = sadd.s32 %s130, 1
    %s132 = scalar_select %p129, %s130, %s131
    %p135 = pneg %p129
    %p136 = scmp.eq.s32.totalorder %s10, 1
    %p137 = por %p135, %p136
    %p138 = scmp.ne.s32.totalorder %s130, %s133
    %p139 = scmp.eq.s32.totalorder %s10, 0
    %p140 = por %p138, %p139
    %p141 = scmp.ne.s32.totalorder %s130, %s133
    %p142 = scmp.eq.s32.totalorder %s15, 1
    %p143 = por %p141, %p142
    %p144 = scmp.ne.s32.totalorder %s133, %s134
    %p145 = scmp.eq.s32.totalorder %s15, 0
    %p146 = por %p144, %p145
    %p147 = scmp.ne.s32.totalorder %s133, %s134
    %p148 = scmp.eq.s32.totalorder %s16, 1
    %p149 = por %p147, %p148
    %p151 = scmp.ne.s32.totalorder %s134, %s150
    %p152 = scmp.eq.s32.totalorder %s16, 0
    %p153 = por %p151, %p152
    %p154 = scmp.le.s32.totalorder 1, %s10
    %p155 = scmp.lt.s32.totalorder %s10, 3
    %p156 = pnand %p154, %p155
    %p157 = pneg %p156
    // Predicated region
    $region9: #{forward.3} parent=5 // pred_check
      _
    $region10: #{forward.3} parent=5 // pred_check_branch
      %159 = sbr.rel (%p156) target = $region12
    $region11: #{forward.3} parent=5 // pred_region
      %s160 = ssub.s32 %s10, 1
      // Predicated region
      $region13: #{forward.3} parent=11 // pred_check
        %p161 = pneg %p76
      $region14: #{forward.3} parent=11 // pred_check_branch
        %163 = sbr.rel (%p161) target = $region16
      $region15: #{forward.3} parent=11 // pred_region
        %p164 = scmp.lt.s32.totalorder %s19, 24
        %s165 = scalar_select %p164, %s19, 24
        %s166 = smul.addr %s165, 8
        %s167 = scalar_lea.vmem %s1, %s166
      $region16: #{forward.3} parent=11 // pred_fallthru
        _
      // Predicated region
      $region17: #{forward.3} parent=11 // pred_check
        %p168 = pneg %p97
      $region18: #{forward.3} parent=11 // pred_check_branch
        %170 = sbr.rel (%p168) target = $region20
      $region19: #{forward.3} parent=11 // pred_region
        _
      $region20: #{forward.3} parent=11 // pred_fallthru
        _
      // Predicated region
      $region21: #{forward.3} parent=11 // pred_check
        %p171 = pneg %p118
      $region22: #{forward.3} parent=11 // pred_check_branch
        %173 = sbr.rel (%p171) target = $region24
      $region23: #{forward.3} parent=11 // pred_region
        _
      $region24: #{forward.3} parent=11 // pred_fallthru
        _
    $region12: #{forward.3} parent=5 // pred_fallthru
      _
    %p174 = scmp.lt.s32.totalorder %s10, 2
    // Predicated region
    $region25: #{forward.3} parent=5 // pred_check
      %p175 = pneg %p174
    $region26: #{forward.3} parent=5 // pred_check_branch
      %177 = sbr.rel (%p175) target = $region28
    $region27: #{forward.3} parent=5 // pred_region
      // Predicated region
      $region29: #{forward.3} parent=27 // pred_check
        %p178 = pneg %p44
      $region30: #{forward.3} parent=27 // pred_check_branch
        %180 = sbr.rel (%p178) target = $region32
      $region31: #{forward.3} parent=27 // pred_region
        %p181 = scmp.lt.s32.totalorder %s18, 1
        %s182 = scalar_select %p181, %s18, 1
        %p183 = scmp.lt.s32.totalorder %s17, 0
        %s184 = scalar_select %p183, %s17, 0
        %s185 = sadd.s32 %s184, %s182
        %s186 = smul.addr %s185, 8
        %s187 = scalar_lea.vmem %s0, %s186
      $region32: #{forward.3} parent=27 // pred_fallthru
        _
    $region28: #{forward.3} parent=5 // pred_fallthru
      _
    %p188 = scmp.le.s32.totalorder 1, %s10
    %p189 = scmp.lt.s32.totalorder %s10, 3
    %p190 = pnand %p188, %p189
    %p191 = pneg %p190
    // Predicated region
    $region33: #{forward.3} parent=5 // pred_check
      _
    $region34: #{forward.3} parent=5 // pred_check_branch
      %193 = sbr.rel (%p190) target = $region36
    $region35: #{forward.3} parent=5 // pred_region
      %s194 = ssub.s32 %s10, 1
      %p195 = scmp.lt.s32.totalorder %s20, 1
      %s196 = scalar_select %p195, %s20, 1
      %p197 = scmp.lt.s32.totalorder %s19, 0
      %s198 = scalar_select %p197, %s19, 0
      %s199 = sadd.s32 %s198, %s196
      %s200 = smul.addr %s199, 8
      %s201 = scalar_lea.vmem %s0, %s200
      %p202 = pneg %p50
      %p203 = pneg %p47
      %p204 = scmp.lt.s32.totalorder %s19, 24
      %s205 = scalar_select %p204, %s19, 24
      %s206 = smul.addr %s205, 8
      %s207 = scalar_lea.vmem %s1, %s206
      %p208 = pneg %p76
      %p209 = pneg %p73
      %p210 = pneg %p97
      %p211 = pneg %p94
      %p212 = pneg %p118
      %p213 = pneg %p115
      %p214 = pneg %p146
      %p215 = pneg %p143
      %p216 = scmp.lt.s32.totalorder %s20, 1
      %s217 = scalar_select %p216, %s20, 1
      %p218 = scmp.lt.s32.totalorder %s19, 0
      %s219 = scalar_select %p218, %s19, 0
      %s220 = sadd.s32 %s219, %s217
      %s221 = smul.addr %s220, 8
      %s222 = scalar_lea.vmem %s4, %s221
      %p223 = scmp.lt.s32.totalorder %s20, 1
      %s224 = scalar_select %p223, %s20, 1
      %p225 = scmp.lt.s32.totalorder %s19, 0
      %s226 = scalar_select %p225, %s19, 0
      %s227 = sadd.s32 %s226, %s224
      %s228 = smul.addr %s227, 8
      %s229 = scalar_lea.vmem %s0, %s228
      %p230 = scmp.lt.s32.totalorder %s19, 24
      %s231 = scalar_select %p230, %s19, 24
      %s232 = smul.addr %s231, 8
      %s233 = scalar_lea.vmem %s1, %s232
      %p234 = scmp.lt.s32.totalorder %s20, 1
      %s235 = scalar_select %p234, %s20, 1
      %p236 = scmp.lt.s32.totalorder %s19, 0
      %s237 = scalar_select %p236, %s19, 0
      %s238 = sadd.s32 %s237, %s235
      %s239 = smul.addr %s238, 8
      %s240 = scalar_lea.vmem %s4, %s239
      %v241 = vld [vmem:[%s229] sm:$0xff]
      %v242 = vld [vmem:[%s233] sm:$0xff]
      %v243 = vadd.f32 %v241, %v242
      %v244 = vld [vmem:[%s2] sm:$0x1]
      %v245 = vld [vmem:[%s3] sm:$0x1]
      %vm246 = vcmask 261120
      %v247 = vsel %vm246, %v243, 0.0
      %248 = vadd.xlane.f32.xlu0 %v247
      %v249 = vpop.xlane.xlu0 %248
      %v250 = vrcp.pop 32.0
      %v251 = vmul.f32 %v249, %v250
      %v252 = vsub.f32 %v243, %v251
      %v253 = vmul.f32 %v252, %v252
      %v254 = vsel %vm246, %v253, 0.0
      %255 = vadd.xlane.f32.xlu0 %v254
      %v256 = vpop.xlane.xlu0 %255
      %v257 = vmul.f32 %v256, %v250
      %v258 = vadd.f32 %v257, 1e-06
      %v259 = vrsqrt.pop %v258
      %v260 = vmul.f32 %v252, %v259
      %v262 = vlaneseq
      %v263 = vshrl.u32 %v262, 7
      %v264 = vsub.s32 0, %v263
      %v265 = vrot.slane %v244, %v264
      %v267 = vmul.f32 %v260, %v265
      %v269 = vlaneseq
      %v270 = vshrl.u32 %v269, 7
      %v271 = vsub.s32 0, %v270
      %v272 = vrot.slane %v245, %v271
      %v274 = vadd.f32 %v267, %v272
      %275 = vst.msk [vmem:[%s240] sm:$0xff] %vm246, %v274
      %p276 = scmp.lt.s32.totalorder %s20, 1
      %s277 = scalar_select %p276, %s20, 1
      %p278 = scmp.lt.s32.totalorder %s19, 0
      %s279 = scalar_select %p278, %s19, 0
      %s280 = sadd.s32 %s279, %s277
      %s281 = smul.addr %s280, 8
      %s282 = scalar_lea.vmem %s4, %s281
      // Predicated region
      $region37: #{forward.3} parent=35 // pred_check
        %p283 = pneg %p143
      $region38: #{forward.3} parent=35 // pred_check_branch
        %285 = sbr.rel (%p283) target = $region40
      $region39: #{forward.3} parent=35 // pred_region
        _
      $region40: #{forward.3} parent=35 // pred_fallthru
        _
    $region36: #{forward.3} parent=5 // pred_fallthru
      _
    %p286 = scmp.le.s32.totalorder 2, %s10
    // Predicated region
    $region41: #{forward.3} parent=5 // pred_check
      %p287 = pneg %p286
    $region42: #{forward.3} parent=5 // pred_check_branch
      %289 = sbr.rel (%p287) target = $region44
    $region43: #{forward.3} parent=5 // pred_region
      %s290 = ssub.s32 %s10, 2
      // Predicated region
      $region45: #{forward.3} parent=43 // pred_check
        %p291 = pneg %p149
      $region46: #{forward.3} parent=43 // pred_check_branch
        %293 = sbr.rel (%p291) target = $region48
      $region47: #{forward.3} parent=43 // pred_region
        %p294 = scmp.lt.s32.totalorder %s22, 1
        %s295 = scalar_select %p294, %s22, 1
        %p296 = scmp.lt.s32.totalorder %s21, 0
        %s297 = scalar_select %p296, %s21, 0
        %s298 = sadd.s32 %s297, %s295
        %s299 = smul.addr %s298, 8
        %s300 = scalar_lea.vmem %s4, %s299
      $region48: #{forward.3} parent=43 // pred_fallthru
        _
    $region44: #{forward.3} parent=5 // pred_fallthru
      _
  $region6: #{forward.3} parent=0 // loop_footer
    %s14 = sadd.s32 1, %s10
  $region7: #{forward.3} parent=0 // loop_footer_branch
    %9 = sbr.rel target = $region3
  $region8: #{forward.3} parent=0 // loop_exit
    _

// kernel: forward.4
$region0: #{forward.4}
  #allocation0 [shape = 'u32[]', space=smem, size = 0x4, offset = 0x4, fixed_abs, tag = 'smem constant byte address 0x4 - core index']
  #allocation1 [shape = 'u32[144,128]{1,0:T(1,128)}', space=vmem, size = 0x12000, scoped, tag = 'internal scratch']
  %s0 = inlined_call_operand.vmem [shape: f32[2,8,32], index: 0, kind: input, shape index: {}, may-alias: {0,11}]
  %s1 = inlined_call_operand.vmem [shape: f32[4,32,24], index: 1, kind: input, shape index: {}]
  %s2 = inlined_call_operand.vmem [shape: f32[4,8,32], index: 2, kind: input, shape index: {}]
  %s3 = inlined_call_operand.vmem [shape: f32[1,32], index: 3, kind: input, shape index: {}]
  %s4 = inlined_call_operand.vmem [shape: f32[1,32], index: 4, kind: input, shape index: {}]
  %s5 = inlined_call_operand.vmem [shape: f32[32,64], index: 5, kind: input, shape index: {}]
  %s6 = inlined_call_operand.vmem [shape: f32[1,64], index: 6, kind: input, shape index: {}]
  %s7 = inlined_call_operand.vmem [shape: f32[64,32], index: 7, kind: input, shape index: {}]
  %s8 = inlined_call_operand.vmem [shape: f32[1,32], index: 8, kind: input, shape index: {}]
  %s9 = inlined_call_operand.vmem [shape: f32[1,32], index: 9, kind: input, shape index: {}]
  %s10 = inlined_call_operand.vmem [shape: f32[1,32], index: 10, kind: input, shape index: {}]
  %s11 = inlined_call_operand.vmem [shape: f32[2,8,32], index: 11, kind: output, shape index: {}, may-alias: {0,11}]
  %s12 = sld [smem:[#allocation0]]
  $region77: #{forward.4} parent=0
    _
  %s14 = ssub.s32 1, %s12
  %s15 = scalar_select 0, %s14, %s12
  loop: start=0, step=1, limit=4
  $region2: #{forward.4} parent=0 // loop_pre_header
    _
  $region3: #{forward.4} parent=0 // loop_header
    %s17 = sphi 0, %s21
    %p18 = scmp.ge.s32.totalorder %s17, 4
    %s27 = sphi 0, %s29
    %s30 = sphi 0, %s27
    %s31 = sphi 0, %s30
    %s47 = sphi 0, %s31
    %s51 = sphi 0, %s51
    %s53 = sphi 0, %s51
    %s54 = sphi 0, %s53
    %s68 = sphi 0, %s54
    %s72 = sphi 0, %s72
    %s74 = sphi 0, %s72
    %s75 = sphi 0, %s74
    %s89 = sphi 0, %s75
    %s93 = sphi 0, %s93
    %s95 = sphi 0, %s93
    %s96 = sphi 0, %s95
    %s110 = sphi 0, %s96
    %s114 = sphi 0, %s114
    %s116 = sphi 0, %s114
    %s117 = sphi 0, %s116
    %s131 = sphi 0, %s117
    %s135 = sphi 0, %s135
    %s137 = sphi 0, %s135
    %s138 = sphi 0, %s137
    %s152 = sphi 0, %s138
    %s156 = sphi 0, %s156
    %s158 = sphi 0, %s156
    %s159 = sphi 0, %s158
    %s173 = sphi 0, %s159
    %s177 = sphi 0, %s177
    %s179 = sphi 0, %s177
    %s180 = sphi 0, %s179
    %s194 = sphi 0, %s180
    %s198 = sphi 0, %s198
    %s200 = sphi 0, %s198
    %s201 = sphi 0, %s200
    %s215 = sphi 0, %s201
    %s219 = sphi 0, %s219
    %s221 = sphi 0, %s219
    %s222 = sphi 0, %s221
    %s236 = sphi 0, %s222
    %s240 = sphi 0, %s240
    %s242 = sphi 0, %s240
    %s243 = sphi 0, %s242
    %s257 = sphi 0, %s243
    %s263 = sphi 0, %s265
    %s266 = sphi 0, %s263
    %s267 = sphi 0, %s266
    %s283 = sphi 0, %s267
  $region4: #{forward.4} parent=0 // loop_header_branch
    %20 = sbr.rel (%p18) target = $region8
  $region5: #{forward.4} parent=0 // loop_body
    %s22 = ssub.s32 %s17, 1
    %s23 = ssub.s32 %s17, 2
    %s24 = sadd.s32 %s17, 1
    %s25 = ssub.s32 %s17, %s24
    %p26 = scmp.eq.s32.totalorder %s25, 0
    %s28 = sadd.s32 %s27, 1
    %s29 = scalar_select %p26, %s27, %s28
    %p32 = pneg %p26
    %p33 = scmp.eq.s32.totalorder %s17, 1
    %p34 = por %p32, %p33
    %p35 = scmp.ne.s32.totalorder %s27, %s30
    %p36 = scmp.eq.s32.totalorder %s17, 0
    %p37 = por %p35, %p36
    %p38 = scmp.ne.s32.totalorder %s27, %s30
    %p39 = scmp.eq.s32.totalorder %s22, 1
    %p40 = por %p38, %p39
    %p41 = scmp.ne.s32.totalorder %s30, %s31
    %p42 = scmp.eq.s32.totalorder %s22, 0
    %p43 = por %p41, %p42
    %p44 = scmp.ne.s32.totalorder %s30, %s31
    %p45 = scmp.eq.s32.totalorder %s23, 1
    %p46 = por %p44, %p45
    %p48 = scmp.ne.s32.totalorder %s31, %s47
    %p49 = scmp.eq.s32.totalorder %s23, 0
    %p50 = por %p48, %p49
    %s52 = sadd.s32 %s51, 1
    %p55 = scmp.eq.s32.totalorder %s17, 1
    %p56 = scmp.ne.s32.totalorder %s51, %s53
    %p57 = scmp.eq.s32.totalorder %s17, 0
    %p58 = por %p56, %p57
    %p59 = scmp.ne.s32.totalorder %s51, %s53
    %p60 = scmp.eq.s32.totalorder %s22, 1
    %p61 = por %p59, %p60
    %p62 = scmp.ne.s32.totalorder %s53, %s54
    %p63 = scmp.eq.s32.totalorder %s22, 0
    %p64 = por %p62, %p63
    %p65 = scmp.ne.s32.totalorder %s53, %s54
    %p66 = scmp.eq.s32.totalorder %s23, 1
    %p67 = por %p65, %p66
    %p69 = scmp.ne.s32.totalorder %s54, %s68
    %p70 = scmp.eq.s32.totalorder %s23, 0
    %p71 = por %p69, %p70
    %s73 = sadd.s32 %s72, 1
    %p76 = scmp.eq.s32.totalorder %s17, 1
    %p77 = scmp.ne.s32.totalorder %s72, %s74
    %p78 = scmp.eq.s32.totalorder %s17, 0
    %p79 = por %p77, %p78
    %p80 = scmp.ne.s32.totalorder %s72, %s74
    %p81 = scmp.eq.s32.totalorder %s22, 1
    %p82 = por %p80, %p81
    %p83 = scmp.ne.s32.totalorder %s74, %s75
    %p84 = scmp.eq.s32.totalorder %s22, 0
    %p85 = por %p83, %p84
    %p86 = scmp.ne.s32.totalorder %s74, %s75
    %p87 = scmp.eq.s32.totalorder %s23, 1
    %p88 = por %p86, %p87
    %p90 = scmp.ne.s32.totalorder %s75, %s89
    %p91 = scmp.eq.s32.totalorder %s23, 0
    %p92 = por %p90, %p91
    %s94 = sadd.s32 %s93, 1
    %p97 = scmp.eq.s32.totalorder %s17, 1
    %p98 = scmp.ne.s32.totalorder %s93, %s95
    %p99 = scmp.eq.s32.totalorder %s17, 0
    %p100 = por %p98, %p99
    %p101 = scmp.ne.s32.totalorder %s93, %s95
    %p102 = scmp.eq.s32.totalorder %s22, 1
    %p103 = por %p101, %p102
    %p104 = scmp.ne.s32.totalorder %s95, %s96
    %p105 = scmp.eq.s32.totalorder %s22, 0
    %p106 = por %p104, %p105
    %p107 = scmp.ne.s32.totalorder %s95, %s96
    %p108 = scmp.eq.s32.totalorder %s23, 1
    %p109 = por %p107, %p108
    %p111 = scmp.ne.s32.totalorder %s96, %s110
    %p112 = scmp.eq.s32.totalorder %s23, 0
    %p113 = por %p111, %p112
    %s115 = sadd.s32 %s114, 1
    %p118 = scmp.eq.s32.totalorder %s17, 1
    %p119 = scmp.ne.s32.totalorder %s114, %s116
    %p120 = scmp.eq.s32.totalorder %s17, 0
    %p121 = por %p119, %p120
    %p122 = scmp.ne.s32.totalorder %s114, %s116
    %p123 = scmp.eq.s32.totalorder %s22, 1
    %p124 = por %p122, %p123
    %p125 = scmp.ne.s32.totalorder %s116, %s117
    %p126 = scmp.eq.s32.totalorder %s22, 0
    %p127 = por %p125, %p126
    %p128 = scmp.ne.s32.totalorder %s116, %s117
    %p129 = scmp.eq.s32.totalorder %s23, 1
    %p130 = por %p128, %p129
    %p132 = scmp.ne.s32.totalorder %s117, %s131
    %p133 = scmp.eq.s32.totalorder %s23, 0
    %p134 = por %p132, %p133
    %s136 = sadd.s32 %s135, 1
    %p139 = scmp.eq.s32.totalorder %s17, 1
    %p140 = scmp.ne.s32.totalorder %s135, %s137
    %p141 = scmp.eq.s32.totalorder %s17, 0
    %p142 = por %p140, %p141
    %p143 = scmp.ne.s32.totalorder %s135, %s137
    %p144 = scmp.eq.s32.totalorder %s22, 1
    %p145 = por %p143, %p144
    %p146 = scmp.ne.s32.totalorder %s137, %s138
    %p147 = scmp.eq.s32.totalorder %s22, 0
    %p148 = por %p146, %p147
    %p149 = scmp.ne.s32.totalorder %s137, %s138
    %p150 = scmp.eq.s32.totalorder %s23, 1
    %p151 = por %p149, %p150
    %p153 = scmp.ne.s32.totalorder %s138, %s152
    %p154 = scmp.eq.s32.totalorder %s23, 0
    %p155 = por %p153, %p154
    %s157 = sadd.s32 %s156, 1
    %p160 = scmp.eq.s32.totalorder %s17, 1
    %p161 = scmp.ne.s32.totalorder %s156, %s158
    %p162 = scmp.eq.s32.totalorder %s17, 0
    %p163 = por %p161, %p162
    %p164 = scmp.ne.s32.totalorder %s156, %s158
    %p165 = scmp.eq.s32.totalorder %s22, 1
    %p166 = por %p164, %p165
    %p167 = scmp.ne.s32.totalorder %s158, %s159
    %p168 = scmp.eq.s32.totalorder %s22, 0
    %p169 = por %p167, %p168
    %p170 = scmp.ne.s32.totalorder %s158, %s159
    %p171 = scmp.eq.s32.totalorder %s23, 1
    %p172 = por %p170, %p171
    %p174 = scmp.ne.s32.totalorder %s159, %s173
    %p175 = scmp.eq.s32.totalorder %s23, 0
    %p176 = por %p174, %p175
    %s178 = sadd.s32 %s177, 1
    %p181 = scmp.eq.s32.totalorder %s17, 1
    %p182 = scmp.ne.s32.totalorder %s177, %s179
    %p183 = scmp.eq.s32.totalorder %s17, 0
    %p184 = por %p182, %p183
    %p185 = scmp.ne.s32.totalorder %s177, %s179
    %p186 = scmp.eq.s32.totalorder %s22, 1
    %p187 = por %p185, %p186
    %p188 = scmp.ne.s32.totalorder %s179, %s180
    %p189 = scmp.eq.s32.totalorder %s22, 0
    %p190 = por %p188, %p189
    %p191 = scmp.ne.s32.totalorder %s179, %s180
    %p192 = scmp.eq.s32.totalorder %s23, 1
    %p193 = por %p191, %p192
    %p195 = scmp.ne.s32.totalorder %s180, %s194
    %p196 = scmp.eq.s32.totalorder %s23, 0
    %p197 = por %p195, %p196
    %s199 = sadd.s32 %s198, 1
    %p202 = scmp.eq.s32.totalorder %s17, 1
    %p203 = scmp.ne.s32.totalorder %s198, %s200
    %p204 = scmp.eq.s32.totalorder %s17, 0
    %p205 = por %p203, %p204
    %p206 = scmp.ne.s32.totalorder %s198, %s200
    %p207 = scmp.eq.s32.totalorder %s22, 1
    %p208 = por %p206, %p207
    %p209 = scmp.ne.s32.totalorder %s200, %s201
    %p210 = scmp.eq.s32.totalorder %s22, 0
    %p211 = por %p209, %p210
    %p212 = scmp.ne.s32.totalorder %s200, %s201
    %p213 = scmp.eq.s32.totalorder %s23, 1
    %p214 = por %p212, %p213
    %p216 = scmp.ne.s32.totalorder %s201, %s215
    %p217 = scmp.eq.s32.totalorder %s23, 0
    %p218 = por %p216, %p217
    %s220 = sadd.s32 %s219, 1
    %p223 = scmp.eq.s32.totalorder %s17, 1
    %p224 = scmp.ne.s32.totalorder %s219, %s221
    %p225 = scmp.eq.s32.totalorder %s17, 0
    %p226 = por %p224, %p225
    %p227 = scmp.ne.s32.totalorder %s219, %s221
    %p228 = scmp.eq.s32.totalorder %s22, 1
    %p229 = por %p227, %p228
    %p230 = scmp.ne.s32.totalorder %s221, %s222
    %p231 = scmp.eq.s32.totalorder %s22, 0
    %p232 = por %p230, %p231
    %p233 = scmp.ne.s32.totalorder %s221, %s222
    %p234 = scmp.eq.s32.totalorder %s23, 1
    %p235 = por %p233, %p234
    %p237 = scmp.ne.s32.totalorder %s222, %s236
    %p238 = scmp.eq.s32.totalorder %s23, 0
    %p239 = por %p237, %p238
    %s241 = sadd.s32 %s240, 1
    %p244 = scmp.eq.s32.totalorder %s17, 1
    %p245 = scmp.ne.s32.totalorder %s240, %s242
    %p246 = scmp.eq.s32.totalorder %s17, 0
    %p247 = por %p245, %p246
    %p248 = scmp.ne.s32.totalorder %s240, %s242
    %p249 = scmp.eq.s32.totalorder %s22, 1
    %p250 = por %p248, %p249
    %p251 = scmp.ne.s32.totalorder %s242, %s243
    %p252 = scmp.eq.s32.totalorder %s22, 0
    %p253 = por %p251, %p252
    %p254 = scmp.ne.s32.totalorder %s242, %s243
    %p255 = scmp.eq.s32.totalorder %s23, 1
    %p256 = por %p254, %p255
    %p258 = scmp.ne.s32.totalorder %s243, %s257
    %p259 = scmp.eq.s32.totalorder %s23, 0
    %p260 = por %p258, %p259
    %s261 = ssub.s32 %s17, %s24
    %p262 = scmp.eq.s32.totalorder %s261, 0
    %s264 = sadd.s32 %s263, 1
    %s265 = scalar_select %p262, %s263, %s264
    %p268 = pneg %p262
    %p269 = scmp.eq.s32.totalorder %s17, 1
    %p270 = por %p268, %p269
    %p271 = scmp.ne.s32.totalorder %s263, %s266
    %p272 = scmp.eq.s32.totalorder %s17, 0
    %p273 = por %p271, %p272
    %p274 = scmp.ne.s32.totalorder %s263, %s266
    %p275 = scmp.eq.s32.totalorder %s22, 1
    %p276 = por %p274, %p275
    %p277 = scmp.ne.s32.totalorder %s266, %s267
    %p278 = scmp.eq.s32.totalorder %s22, 0
    %p279 = por %p277, %p278
    %p280 = scmp.ne.s32.totalorder %s266, %s267
    %p281 = scmp.eq.s32.totalorder %s23, 1
    %p282 = por %p280, %p281
    %p284 = scmp.ne.s32.totalorder %s267, %s283
    %p285 = scmp.eq.s32.totalorder %s23, 0
    %p286 = por %p284, %p285
    %p287 = scmp.le.s32.totalorder 1, %s17
    %p288 = scmp.lt.s32.totalorder %s17, 3
    %p289 = pnand %p287, %p288
    %p290 = pneg %p289
    // Predicated region
    $region9: #{forward.4} parent=5 // pred_check
      _
    $region10: #{forward.4} parent=5 // pred_check_branch
      %292 = sbr.rel (%p289) target = $region12
    $region11: #{forward.4} parent=5 // pred_region
      %s293 = ssub.s32 %s17, 1
      // Predicated region
      $region13: #{forward.4} parent=11 // pred_check
        %p294 = pneg %p64
      $region14: #{forward.4} parent=11 // pred_check_branch
        %296 = sbr.rel (%p294) target = $region16
      $region15: #{forward.4} parent=11 // pred_region
        _
      $region16: #{forward.4} parent=11 // pred_fallthru
        _
      // Predicated region
      $region17: #{forward.4} parent=11 // pred_check
        %p297 = pneg %p85
      $region18: #{forward.4} parent=11 // pred_check_branch
        %299 = sbr.rel (%p297) target = $region20
      $region19: #{forward.4} parent=11 // pred_region
        _
      $region20: #{forward.4} parent=11 // pred_fallthru
        _
      // Predicated region
      $region21: #{forward.4} parent=11 // pred_check
        %p300 = pneg %p106
      $region22: #{forward.4} parent=11 // pred_check_branch
        %302 = sbr.rel (%p300) target = $region24
      $region23: #{forward.4} parent=11 // pred_region
        _
      $region24: #{forward.4} parent=11 // pred_fallthru
        _
      // Predicated region
      $region25: #{forward.4} parent=11 // pred_check
        %p303 = pneg %p127
      $region26: #{forward.4} parent=11 // pred_check_branch
        %305 = sbr.rel (%p303) target = $region28
      $region27: #{forward.4} parent=11 // pred_region
        _
      $region28: #{forward.4} parent=11 // pred_fallthru
        _
      // Predicated region
      $region29: #{forward.4} parent=11 // pred_check
        %p306 = pneg %p148
      $region30: #{forward.4} parent=11 // pred_check_branch
        %308 = sbr.rel (%p306) target = $region32
      $region31: #{forward.4} parent=11 // pred_region
        _
      $region32: #{forward.4} parent=11 // pred_fallthru
        _
      // Predicated region
      $region33: #{forward.4} parent=11 // pred_check
        %p309 = pneg %p169
      $region34: #{forward.4} parent=11 // pred_check_branch
        %311 = sbr.rel (%p309) target = $region36
      $region35: #{forward.4} parent=11 // pred_region
        _
      $region36: #{forward.4} parent=11 // pred_fallthru
        _
      // Predicated region
      $region37: #{forward.4} parent=11 // pred_check
        %p312 = pneg %p190
      $region38: #{forward.4} parent=11 // pred_check_branch
        %314 = sbr.rel (%p312) target = $region40
      $region39: #{forward.4} parent=11 // pred_region
        _
      $region40: #{forward.4} parent=11 // pred_fallthru
        _
      // Predicated region
      $region41: #{forward.4} parent=11 // pred_check
        %p315 = pneg %p211
      $region42: #{forward.4} parent=11 // pred_check_branch
        %317 = sbr.rel (%p315) target = $region44
      $region43: #{forward.4} parent=11 // pred_region
        _
      $region44: #{forward.4} parent=11 // pred_fallthru
        _
      // Predicated region
      $region45: #{forward.4} parent=11 // pred_check
        %p318 = pneg %p232
      $region46: #{forward.4} parent=11 // pred_check_branch
        %320 = sbr.rel (%p318) target = $region48
      $region47: #{forward.4} parent=11 // pred_region
        _
      $region48: #{forward.4} parent=11 // pred_fallthru
        _
      // Predicated region
      $region49: #{forward.4} parent=11 // pred_check
        %p321 = pneg %p253
      $region50: #{forward.4} parent=11 // pred_check_branch
        %323 = sbr.rel (%p321) target = $region52
      $region51: #{forward.4} parent=11 // pred_region
        _
      $region52: #{forward.4} parent=11 // pred_fallthru
        _
    $region12: #{forward.4} parent=5 // pred_fallthru
      _
    %p324 = scmp.lt.s32.totalorder %s17, 2
    // Predicated region
    $region53: #{forward.4} parent=5 // pred_check
      %p325 = pneg %p324
    $region54: #{forward.4} parent=5 // pred_check_branch
      %327 = sbr.rel (%p325) target = $region56
    $region55: #{forward.4} parent=5 // pred_region
      // Predicated region
      $region57: #{forward.4} parent=55 // pred_check
        %p328 = pneg %p37
      $region58: #{forward.4} parent=55 // pred_check_branch
        %330 = sbr.rel (%p328) target = $region60
      $region59: #{forward.4} parent=55 // pred_region
        %p331 = scmp.lt.s32.totalorder %s17, 1
        %s332 = scalar_select %p331, %s17, 1
        %s333 = smul.addr %s332, 8
        %s334 = scalar_lea.vmem %s0, %s333
      $region60: #{forward.4} parent=55 // pred_fallthru
        _
    $region56: #{forward.4} parent=5 // pred_fallthru
      _
    %p335 = scmp.le.s32.totalorder 1, %s17
    %p336 = scmp.lt.s32.totalorder %s17, 3
    %p337 = pnand %p335, %p336
    %p338 = pneg %p337
    // Predicated region
    $region61: #{forward.4} parent=5 // pred_check
      _
    $region62: #{forward.4} parent=5 // pred_check_branch
      %340 = sbr.rel (%p337) target = $region64
    $region63: #{forward.4} parent=5 // pred_region
      %s341 = ssub.s32 %s17, 1
      %p342 = scmp.lt.s32.totalorder %s22, 1
      %s343 = scalar_select %p342, %s22, 1
      %s344 = smul.addr %s343, 8
      %s345 = scalar_lea.vmem %s0, %s344
      %p346 = pneg %p43
      %p347 = pneg %p40
      %p348 = pneg %p64
      %p349 = pneg %p61
      %p350 = pneg %p85
      %p351 = pneg %p82
      %p352 = pneg %p106
      %p353 = pneg %p103
      %p354 = pneg %p127
      %p355 = pneg %p124
      %p356 = pneg %p148
      %p357 = pneg %p145
      %p358 = pneg %p169
      %p359 = pneg %p166
      %p360 = pneg %p190
      %p361 = pneg %p187
      %p362 = pneg %p211
      %p363 = pneg %p208
      %p364 = pneg %p232
      %p365 = pneg %p229
      %p366 = pneg %p253
      %p367 = pneg %p250
      %p368 = pneg %p279
      %p369 = pneg %p276
      %p370 = scmp.lt.s32.totalorder %s22, 1
      %s371 = scalar_select %p370, %s22, 1
      %s372 = smul.addr %s371, 8
      %s373 = scalar_lea.vmem %s11, %s372
      %p374 = scmp.lt.s32.totalorder %s22, 1
      %s375 = scalar_select %p374, %s22, 1
      %s376 = smul.addr %s375, 8
      %s377 = scalar_lea.vmem %s0, %s376
      %p378 = scmp.lt.s32.totalorder %s22, 1
      %s379 = scalar_select %p378, %s22, 1
      %s380 = smul.addr %s379, 8
      %s381 = scalar_lea.vmem %s11, %s380
      %v382 = vld [vmem:[%s377] sm:$0xff]
      %v383 = vld [vmem:[%s1] sm:$0xff]
      %v384 = vld [vmem:[%s1 + $0x8] sm:$0xff]
      %v385 = vld [vmem:[%s1 + $0x10] sm:$0xff]
      %v386 = vld [vmem:[%s1 + $0x18] sm:$0xff]
      %vm387 = vcmask 261120
      %v389 = vsel %vm387, %v382, 0
      %391 = vmatprep.subr.mxu0 0.0
      %392 = vmatpush1.msra.mxu0 0.0
      %393 = vmatprep.subr.mxu0 0.0
      %394 = vmatpush1.msra.mxu0 0.0
      %395 = vmatprep.subr.mxu0 0.0
      %396 = vmatpush1.msra.mxu0 0.0
      %397 = vmatprep.subr.mxu0 0.0
      %398 = vmatpush1.msra.mxu0 0.0
      %399 = vmatprep.subr.mxu0 0.0
      %400 = vmatpush1.msra.mxu0 0.0
      %401 = vmatprep.subr.mxu0 0.0
      %402 = vmatpush1.msra.mxu0 0.0
      %403 = vmatprep.subr.mxu0 0.0
      %404 = vmatpush1.msra.mxu0 0.0
      %405 = vmatprep.subr.mxu0 0.0
      %406 = vmatpush1.msra.mxu0 0.0
      %407 = vmatprep.subr.mxu0 0.0
      %408 = vmatpush1.msra.mxu0 0.0
      %409 = vmatprep.subr.mxu0 0.0
      %410 = vmatpush1.msra.mxu0 0.0
      %411 = vmatprep.subr.mxu0 0.0
      %412 = vmatpush1.msra.mxu0 0.0
      %413 = vmatprep.subr.mxu0 0.0
      %414 = vmatpush1.msra.mxu0 0.0
      %415 = vmatprep.subr.mxu0 0.0
      %416 = vmatpush1.msra.mxu0 %v386
      %417 = vmatprep.subr.mxu0 0.0
      %418 = vmatpush1.msra.mxu0 %v385
      %419 = vmatprep.subr.mxu0 0.0
      %420 = vmatpush1.msra.mxu0 %v384
      %421 = vmatprep.subr.mxu0 0.0
      %422 = vmatpush1.msra.mxu0 %v383
      %423 = vmatprep.subr.mxu0 0.0
      %424 = vmatpush2.msra.mxu0 0.0
      %425 = vmatprep.subr.mxu0 0.0
      %426 = vmatpush2.msra.mxu0 0.0
      %427 = vmatprep.subr.mxu0 0.0
      %428 = vmatpush2.msra.mxu0 0.0
      %429 = vmatprep.subr.mxu0 0.0
      %430 = vmatpush2.msra.mxu0 0.0
      %431 = vmatprep.subr.mxu0 0.0
      %432 = vmatpush2.msra.mxu0 0.0
      %433 = vmatprep.subr.mxu0 0.0
      %434 = vmatpush2.msra.mxu0 0.0
      %435 = vmatprep.subr.mxu0 0.0
      %436 = vmatpush2.msra.mxu0 0.0
      %437 = vmatprep.subr.mxu0 0.0
      %438 = vmatpush2.msra.mxu0 0.0
      %439 = vmatprep.subr.mxu0 0.0
      %440 = vmatpush2.msra.mxu0 0.0
      %441 = vmatprep.subr.mxu0 0.0
      %442 = vmatpush2.msra.mxu0 0.0
      %443 = vmatprep.subr.mxu0 0.0
      %444 = vmatpush2.msra.mxu0 0.0
      %445 = vmatprep.subr.mxu0 0.0
      %446 = vmatpush2.msra.mxu0 0.0
      %447 = vmatprep.subr.mxu0 0.0
      %448 = vmatpush2.msra.mxu0 0.0
      %449 = vmatprep.subr.mxu0 0.0
      %450 = vmatpush2.msra.mxu0 0.0
      %451 = vmatprep.subr.mxu0 0.0
      %452 = vmatpush2.msra.mxu0 0.0
      %453 = vmatprep.subr.mxu0 0.0
      %454 = vmatpush2.msra.mxu0 0.0
      %455 = vmatprep.mubr.f32.mxu0 0.0
      %456 = vmatmul.mubr.f32.gmra.mxu0 %v389
      %v457 = vpop.f32.mrf.mxu0
      %v458 = vadd.f32 0.0, %v457
      %v459 = vpop.f32.mrf.mxu0
      %460 = vdwg.mxu0
      %v461 = vmul.f32 %v458, 0.35355338
      %463 = vrot.lane.b32.xlu0 %v458, 120
      %v464 = vpop.permute.xlu0 %463
      %vm465 = vcmask 64512
      %v467 = vsel %vm465, %v461, 0
      %v469 = vsel %vm465, %v464, 0
      %471 = vmatprep.subr.mxu0 0.0
      %472 = vmatpush1.xpose.msra.mxu0 0.0
      %473 = vmatprep.subr.mxu0 0.0
      %474 = vmatpush1.xpose.msra.mxu0 0.0
      %475 = vmatprep.subr.mxu0 0.0
      %476 = vmatpush1.xpose.msra.mxu0 0.0
      %477 = vmatprep.subr.mxu0 0.0
      %478 = vmatpush1.xpose.msra.mxu0 0.0
      %479 = vmatprep.subr.mxu0 0.0
      %480 = vmatpush1.xpose.msra.mxu0 0.0
      %481 = vmatprep.subr.mxu0 0.0
      %482 = vmatpush1.xpose.msra.mxu0 0.0
      %483 = vmatprep.subr.mxu0 0.0
      %484 = vmatpush1.xpose.msra.mxu0 0.0
      %485 = vmatprep.subr.mxu0 0.0
      %486 = vmatpush1.xpose.msra.mxu0 0.0
      %487 = vmatprep.subr.mxu0 0.0
      %488 = vmatpush1.xpose.msra.mxu0 0.0
      %489 = vmatprep.subr.mxu0 0.0
      %490 = vmatpush1.xpose.msra.mxu0 0.0
      %491 = vmatprep.subr.mxu0 0.0
      %492 = vmatpush1.xpose.msra.mxu0 0.0
      %493 = vmatprep.subr.mxu0 0.0
      %494 = vmatpush1.xpose.msra.mxu0 0.0
      %495 = vmatprep.subr.mxu0 0.0
      %496 = vmatpush1.xpose.msra.mxu0 0.0
      %497 = vmatprep.subr.mxu0 0.0
      %498 = vmatpush1.xpose.msra.mxu0 0.0
      %499 = vmatprep.subr.mxu0 0.0
      %500 = vmatpush1.xpose.msra.mxu0 0.0
      %501 = vmatprep.subr.mxu0 0.0
      %502 = vmatpush1.xpose.msra.mxu0 %v469
      %503 = vmatprep.subr.mxu0 0.0
      %504 = vmatpush2.xpose.msra.mxu0 0.0
      %505 = vmatprep.subr.mxu0 0.0
      %506 = vmatpush2.xpose.msra.mxu0 0.0
      %507 = vmatprep.subr.mxu0 0.0
      %508 = vmatpush2.xpose.msra.mxu0 0.0
      %509 = vmatprep.subr.mxu0 0.0
      %510 = vmatpush2.xpose.msra.mxu0 0.0
      %511 = vmatprep.subr.mxu0 0.0
      %512 = vmatpush2.xpose.msra.mxu0 0.0
      %513 = vmatprep.subr.mxu0 0.0
      %514 = vmatpush2.xpose.msra.mxu0 0.0
      %515 = vmatprep.subr.mxu0 0.0
      %516 = vmatpush2.xpose.msra.mxu0 0.0
      %517 = vmatprep.subr.mxu0 0.0
      %518 = vmatpush2.xpose.msra.mxu0 0.0
      %519 = vmatprep.subr.mxu0 0.0
      %520 = vmatpush2.xpose.msra.mxu0 0.0
      %521 = vmatprep.subr.mxu0 0.0
      %522 = vmatpush2.xpose.msra.mxu0 0.0
      %523 = vmatprep.subr.mxu0 0.0
      %524 = vmatpush2.xpose.msra.mxu0 0.0
      %525 = vmatprep.subr.mxu0 0.0
      %526 = vmatpush2.xpose.msra.mxu0 0.0
      %527 = vmatprep.subr.mxu0 0.0
      %528 = vmatpush2.xpose.msra.mxu0 0.0
      %529 = vmatprep.subr.mxu0 0.0
      %530 = vmatpush2.xpose.msra.mxu0 0.0
      %531 = vmatprep.subr.mxu0 0.0
      %532 = vmatpush2.xpose.msra.mxu0 0.0
      %533 = vmatprep.subr.mxu0 0.0
      %534 = vmatpush2.xpose.msra.mxu0 0.0
      %535 = vmatprep.mubr.f32.mxu0 0.0
      %536 = vmatmul.mubr.f32.gmra.mxu0 %v467
      %v537 = vpop.f32.mrf.mxu0
      %v538 = vadd.f32 0.0, %v537
      %v539 = vpop.f32.mrf.mxu0
      %540 = vdwg.mxu0
      %v541 = vsel %vm465, %v538, -inf
      %542 = vmax.xlane.f32.xlu0 %v541
      %v543 = vpop.xlane.xlu0 %542
      %v544 = vsub.f32 %v538, %v543
      %v545 = vmul.f32 %v544, 1.442695
      %v546 = vpow.pop %v545
      %v547 = vsel %vm465, %v546, 0.0
      %548 = vadd.xlane.f32.xlu0 %v547
      %v549 = vpop.xlane.xlu0 %548
      %v550 = vrcp.pop %v549
      %v551 = vmul.f32 %v549, %v550
      %v552 = vsub.f32 2.0, %v551
      %v553 = vmul.f32 %v550, %v552
      %v554 = vmul.f32 %v546, %v553
      %555 = vrot.lane.b32.xlu0 %v458, 112
      %v556 = vpop.permute.xlu0 %555
      %v559 = vsel %vm465, %v554, 0
      %561 = vmatprep.subr.mxu0 0.0
      %562 = vmatpush1.msra.mxu0 0.0
      %563 = vmatprep.subr.mxu0 0.0
      %564 = vmatpush1.msra.mxu0 0.0
      %565 = vmatprep.subr.mxu0 0.0
      %566 = vmatpush1.msra.mxu0 0.0
      %567 = vmatprep.subr.mxu0 0.0
      %568 = vmatpush1.msra.mxu0 0.0
      %569 = vmatprep.subr.mxu0 0.0
      %570 = vmatpush1.msra.mxu0 0.0
      %571 = vmatprep.subr.mxu0 0.0
      %572 = vmatpush1.msra.mxu0 0.0
      %573 = vmatprep.subr.mxu0 0.0
      %574 = vmatpush1.msra.mxu0 0.0
      %575 = vmatprep.subr.mxu0 0.0
      %576 = vmatpush1.msra.mxu0 0.0
      %577 = vmatprep.subr.mxu0 0.0
      %578 = vmatpush1.msra.mxu0 0.0
      %579 = vmatprep.subr.mxu0 0.0
      %580 = vmatpush1.msra.mxu0 0.0
      %581 = vmatprep.subr.mxu0 0.0
      %582 = vmatpush1.msra.mxu0 0.0
      %583 = vmatprep.subr.mxu0 0.0
      %584 = vmatpush1.msra.mxu0 0.0
      %585 = vmatprep.subr.mxu0 0.0
      %586 = vmatpush1.msra.mxu0 0.0
      %587 = vmatprep.subr.mxu0 0.0
      %588 = vmatpush1.msra.mxu0 0.0
      %589 = vmatprep.subr.mxu0 0.0
      %590 = vmatpush1.msra.mxu0 0.0
      %591 = vmatprep.subr.mxu0 0.0
      %592 = vmatpush1.msra.mxu0 %v556
      %593 = vmatprep.subr.mxu0 0.0
      %594 = vmatpush2.msra.mxu0 0.0
      %595 = vmatprep.subr.mxu0 0.0
      %596 = vmatpush2.msra.mxu0 0.0
      %597 = vmatprep.subr.mxu0 0.0
      %598 = vmatpush2.msra.mxu0 0.0
      %599 = vmatprep.subr.mxu0 0.0
      %600 = vmatpush2.msra.mxu0 0.0
      %601 = vmatprep.subr.mxu0 0.0
      %602 = vmatpush2.msra.mxu0 0.0
      %603 = vmatprep.subr.mxu0 0.0
      %604 = vmatpush2.msra.mxu0 0.0
      %605 = vmatprep.subr.mxu0 0.0
      %606 = vmatpush2.msra.mxu0 0.0
      %607 = vmatprep.subr.mxu0 0.0
      %608 = vmatpush2.msra.mxu0 0.0
      %609 = vmatprep.subr.mxu0 0.0
      %610 = vmatpush2.msra.mxu0 0.0
      %611 = vmatprep.subr.mxu0 0.0
      %612 = vmatpush2.msra.mxu0 0.0
      %613 = vmatprep.subr.mxu0 0.0
      %614 = vmatpush2.msra.mxu0 0.0
      %615 = vmatprep.subr.mxu0 0.0
      %616 = vmatpush2.msra.mxu0 0.0
      %617 = vmatprep.subr.mxu0 0.0
      %618 = vmatpush2.msra.mxu0 0.0
      %619 = vmatprep.subr.mxu0 0.0
      %620 = vmatpush2.msra.mxu0 0.0
      %621 = vmatprep.subr.mxu0 0.0
      %622 = vmatpush2.msra.mxu0 0.0
      %623 = vmatprep.subr.mxu0 0.0
      %624 = vmatpush2.msra.mxu0 0.0
      %625 = vmatprep.mubr.f32.mxu0 0.0
      %626 = vmatmul.mubr.f32.gmra.mxu0 %v559
      %v627 = vpop.f32.mrf.mxu0
      %v628 = vadd.f32 0.0, %v627
      %v629 = vpop.f32.mrf.mxu0
      %630 = vdwg.mxu0
      %v631 = vld [vmem:[%s2] sm:$0xff]
      %s632 = scalar_lea.vmem %s1, 32
      %v633 = vld [vmem:[%s632] sm:$0xff]
      %v634 = vld [vmem:[%s632 + $0x8] sm:$0xff]
      %v635 = vld [vmem:[%s632 + $0x10] sm:$0xff]
      %v636 = vld [vmem:[%s632 + $0x18] sm:$0xff]
      %637 = vmatprep.subr.mxu0 0.0
      %638 = vmatpush1.msra.mxu0 0.0
      %639 = vmatprep.subr.mxu0 0.0
      %640 = vmatpush1.msra.mxu0 0.0
      %641 = vmatprep.subr.mxu0 0.0
      %642 = vmatpush1.msra.mxu0 0.0
      %643 = vmatprep.subr.mxu0 0.0
      %644 = vmatpush1.msra.mxu0 0.0
      %645 = vmatprep.subr.mxu0 0.0
      %646 = vmatpush1.msra.mxu0 0.0
      %647 = vmatprep.subr.mxu0 0.0
      %648 = vmatpush1.msra.mxu0 0.0
      %649 = vmatprep.subr.mxu0 0.0
      %650 = vmatpush1.msra.mxu0 0.0
      %651 = vmatprep.subr.mxu0 0.0
      %652 = vmatpush1.msra.mxu0 0.0
      %653 = vmatprep.subr.mxu0 0.0
      %654 = vmatpush1.msra.mxu0 0.0
      %655 = vmatprep.subr.mxu0 0.0
      %656 = vmatpush1.msra.mxu0 0.0
      %657 = vmatprep.subr.mxu0 0.0
      %658 = vmatpush1.msra.mxu0 0.0
      %659 = vmatprep.subr.mxu0 0.0
      %660 = vmatpush1.msra.mxu0 0.0
      %661 = vmatprep.subr.mxu0 0.0
      %662 = vmatpush1.msra.mxu0 %v636
      %663 = vmatprep.subr.mxu0 0.0
      %664 = vmatpush1.msra.mxu0 %v635
      %665 = vmatprep.subr.mxu0 0.0
      %666 = vmatpush1.msra.mxu0 %v634
      %667 = vmatprep.subr.mxu0 0.0
      %668 = vmatpush1.msra.mxu0 %v633
      %669 = vmatprep.subr.mxu0 0.0
      %670 = vmatpush2.msra.mxu0 0.0
      %671 = vmatprep.subr.mxu0 0.0
      %672 = vmatpush2.msra.mxu0 0.0
      %673 = vmatprep.subr.mxu0 0.0
      %674 = vmatpush2.msra.mxu0 0.0
      %675 = vmatprep.subr.mxu0 0.0
      %676 = vmatpush2.msra.mxu0 0.0
      %677 = vmatprep.subr.mxu0 0.0
      %678 = vmatpush2.msra.mxu0 0.0
      %679 = vmatprep.subr.mxu0 0.0
      %680 = vmatpush2.msra.mxu0 0.0
      %681 = vmatprep.subr.mxu0 0.0
      %682 = vmatpush2.msra.mxu0 0.0
      %683 = vmatprep.subr.mxu0 0.0
      %684 = vmatpush2.msra.mxu0 0.0
      %685 = vmatprep.subr.mxu0 0.0
      %686 = vmatpush2.msra.mxu0 0.0
      %687 = vmatprep.subr.mxu0 0.0
      %688 = vmatpush2.msra.mxu0 0.0
      %689 = vmatprep.subr.mxu0 0.0
      %690 = vmatpush2.msra.mxu0 0.0
      %691 = vmatprep.subr.mxu0 0.0
      %692 = vmatpush2.msra.mxu0 0.0
      %693 = vmatprep.subr.mxu0 0.0
      %694 = vmatpush2.msra.mxu0 0.0
      %695 = vmatprep.subr.mxu0 0.0
      %696 = vmatpush2.msra.mxu0 0.0
      %697 = vmatprep.subr.mxu0 0.0
      %698 = vmatpush2.msra.mxu0 0.0
      %699 = vmatprep.subr.mxu0 0.0
      %700 = vmatpush2.msra.mxu0 0.0
      %701 = vmatprep.mubr.f32.mxu0 0.0
      %702 = vmatmul.mubr.f32.gmra.mxu0 %v389
      %v703 = vpop.f32.mrf.mxu0
      %v704 = vadd.f32 0.0, %v703
      %v705 = vpop.f32.mrf.mxu0
      %706 = vdwg.mxu0
      %v707 = vmul.f32 %v704, 0.35355338
      %709 = vrot.lane.b32.xlu0 %v704, 120
      %v710 = vpop.permute.xlu0 %709
      %v712 = vsel %vm465, %v707, 0
      %v714 = vsel %vm465, %v710, 0
      %716 = vmatprep.subr.mxu0 0.0
      %717 = vmatpush1.xpose.msra.mxu0 0.0
      %718 = vmatprep.subr.mxu0 0.0
      %719 = vmatpush1.xpose.msra.mxu0 0.0
      %720 = vmatprep.subr.mxu0 0.0
      %721 = vmatpush1.xpose.msra.mxu0 0.0
      %722 = vmatprep.subr.mxu0 0.0
      %723 = vmatpush1.xpose.msra.mxu0 0.0
      %724 = vmatprep.subr.mxu0 0.0
      %725 = vmatpush1.xpose.msra.mxu0 0.0
      %726 = vmatprep.subr.mxu0 0.0
      %727 = vmatpush1.xpose.msra.mxu0 0.0
      %728 = vmatprep.subr.mxu0 0.0
      %729 = vmatpush1.xpose.msra.mxu0 0.0
      %730 = vmatprep.subr.mxu0 0.0
      %731 = vmatpush1.xpose.msra.mxu0 0.0
      %732 = vmatprep.subr.mxu0 0.0
      %733 = vmatpush1.xpose.msra.mxu0 0.0
      %734 = vmatprep.subr.mxu0 0.0
      %735 = vmatpush1.xpose.msra.mxu0 0.0
      %736 = vmatprep.subr.mxu0 0.0
      %737 = vmatpush1.xpose.msra.mxu0 0.0
      %738 = vmatprep.subr.mxu0 0.0
      %739 = vmatpush1.xpose.msra.mxu0 0.0
      %740 = vmatprep.subr.mxu0 0.0
      %741 = vmatpush1.xpose.msra.mxu0 0.0
      %742 = vmatprep.subr.mxu0 0.0
      %743 = vmatpush1.xpose.msra.mxu0 0.0
      %744 = vmatprep.subr.mxu0 0.0
      %745 = vmatpush1.xpose.msra.mxu0 0.0
      %746 = vmatprep.subr.mxu0 0.0
      %747 = vmatpush1.xpose.msra.mxu0 %v714
      %748 = vmatprep.subr.mxu0 0.0
      %749 = vmatpush2.xpose.msra.mxu0 0.0
      %750 = vmatprep.subr.mxu0 0.0
      %751 = vmatpush2.xpose.msra.mxu0 0.0
      %752 = vmatprep.subr.mxu0 0.0
      %753 = vmatpush2.xpose.msra.mxu0 0.0
      %754 = vmatprep.subr.mxu0 0.0
      %755 = vmatpush2.xpose.msra.mxu0 0.0
      %756 = vmatprep.subr.mxu0 0.0
      %757 = vmatpush2.xpose.msra.mxu0 0.0
      %758 = vmatprep.subr.mxu0 0.0
      %759 = vmatpush2.xpose.msra.mxu0 0.0
      %760 = vmatprep.subr.mxu0 0.0
      %761 = vmatpush2.xpose.msra.mxu0 0.0
      %762 = vmatprep.subr.mxu0 0.0
      %763 = vmatpush2.xpose.msra.mxu0 0.0
      %764 = vmatprep.subr.mxu0 0.0
      %765 = vmatpush2.xpose.msra.mxu0 0.0
      %766 = vmatprep.subr.mxu0 0.0
      %767 = vmatpush2.xpose.msra.mxu0 0.0
      %768 = vmatprep.subr.mxu0 0.0
      %769 = vmatpush2.xpose.msra.mxu0 0.0
      %770 = vmatprep.subr.mxu0 0.0
      %771 = vmatpush2.xpose.msra.mxu0 0.0
      %772 = vmatprep.subr.mxu0 0.0
      %773 = vmatpush2.xpose.msra.mxu0 0.0
      %774 = vmatprep.subr.mxu0 0.0
      %775 = vmatpush2.xpose.msra.mxu0 0.0
      %776 = vmatprep.subr.mxu0 0.0
      %777 = vmatpush2.xpose.msra.mxu0 0.0
      %778 = vmatprep.subr.mxu0 0.0
      %779 = vmatpush2.xpose.msra.mxu0 0.0
      %780 = vmatprep.mubr.f32.mxu0 0.0
      %781 = vmatmul.mubr.f32.gmra.mxu0 %v712
      %v782 = vpop.f32.mrf.mxu0
      %v783 = vadd.f32 0.0, %v782
      %v784 = vpop.f32.mrf.mxu0
      %785 = vdwg.mxu0
      %v786 = vsel %vm465, %v783, -inf
      %787 = vmax.xlane.f32.xlu0 %v786
      %v788 = vpop.xlane.xlu0 %787
      %v789 = vsub.f32 %v783, %v788
      %v790 = vmul.f32 %v789, 1.442695
      %v791 = vpow.pop %v790
      %v792 = vsel %vm465, %v791, 0.0
      %793 = vadd.xlane.f32.xlu0 %v792
      %v794 = vpop.xlane.xlu0 %793
      %v795 = vrcp.pop %v794
      %v796 = vmul.f32 %v794, %v795
      %v797 = vsub.f32 2.0, %v796
      %v798 = vmul.f32 %v795, %v797
      %v799 = vmul.f32 %v791, %v798
      %800 = vrot.lane.b32.xlu0 %v704, 112
      %v801 = vpop.permute.xlu0 %800
      %v804 = vsel %vm465, %v799, 0
      %806 = vmatprep.subr.mxu0 0.0
      %807 = vmatpush1.msra.mxu0 0.0
      %808 = vmatprep.subr.mxu0 0.0
      %809 = vmatpush1.msra.mxu0 0.0
      %810 = vmatprep.subr.mxu0 0.0
      %811 = vmatpush1.msra.mxu0 0.0
      %812 = vmatprep.subr.mxu0 0.0
      %813 = vmatpush1.msra.mxu0 0.0
      %814 = vmatprep.subr.mxu0 0.0
      %815 = vmatpush1.msra.mxu0 0.0
      %816 = vmatprep.subr.mxu0 0.0
      %817 = vmatpush1.msra.mxu0 0.0
      %818 = vmatprep.subr.mxu0 0.0
      %819 = vmatpush1.msra.mxu0 0.0
      %820 = vmatprep.subr.mxu0 0.0
      %821 = vmatpush1.msra.mxu0 0.0
      %822 = vmatprep.subr.mxu0 0.0
      %823 = vmatpush1.msra.mxu0 0.0
      %824 = vmatprep.subr.mxu0 0.0
      %825 = vmatpush1.msra.mxu0 0.0
      %826 = vmatprep.subr.mxu0 0.0
      %827 = vmatpush1.msra.mxu0 0.0
      %828 = vmatprep.subr.mxu0 0.0
      %829 = vmatpush1.msra.mxu0 0.0
      %830 = vmatprep.subr.mxu0 0.0
      %831 = vmatpush1.msra.mxu0 0.0
      %832 = vmatprep.subr.mxu0 0.0
      %833 = vmatpush1.msra.mxu0 0.0
      %834 = vmatprep.subr.mxu0 0.0
      %835 = vmatpush1.msra.mxu0 0.0
      %836 = vmatprep.subr.mxu0 0.0
      %837 = vmatpush1.msra.mxu0 %v801
      %838 = vmatprep.subr.mxu0 0.0
      %839 = vmatpush2.msra.mxu0 0.0
      %840 = vmatprep.subr.mxu0 0.0
      %841 = vmatpush2.msra.mxu0 0.0
      %842 = vmatprep.subr.mxu0 0.0
      %843 = vmatpush2.msra.mxu0 0.0
      %844 = vmatprep.subr.mxu0 0.0
      %845 = vmatpush2.msra.mxu0 0.0
      %846 = vmatprep.subr.mxu0 0.0
      %847 = vmatpush2.msra.mxu0 0.0
      %848 = vmatprep.subr.mxu0 0.0
      %849 = vmatpush2.msra.mxu0 0.0
      %850 = vmatprep.subr.mxu0 0.0
      %851 = vmatpush2.msra.mxu0 0.0
      %852 = vmatprep.subr.mxu0 0.0
      %853 = vmatpush2.msra.mxu0 0.0
      %854 = vmatprep.subr.mxu0 0.0
      %855 = vmatpush2.msra.mxu0 0.0
      %856 = vmatprep.subr.mxu0 0.0
      %857 = vmatpush2.msra.mxu0 0.0
      %858 = vmatprep.subr.mxu0 0.0
      %859 = vmatpush2.msra.mxu0 0.0
      %860 = vmatprep.subr.mxu0 0.0
      %861 = vmatpush2.msra.mxu0 0.0
      %862 = vmatprep.subr.mxu0 0.0
      %863 = vmatpush2.msra.mxu0 0.0
      %864 = vmatprep.subr.mxu0 0.0
      %865 = vmatpush2.msra.mxu0 0.0
      %866 = vmatprep.subr.mxu0 0.0
      %867 = vmatpush2.msra.mxu0 0.0
      %868 = vmatprep.subr.mxu0 0.0
      %869 = vmatpush2.msra.mxu0 0.0
      %870 = vmatprep.mubr.f32.mxu0 0.0
      %871 = vmatmul.mubr.f32.gmra.mxu0 %v804
      %v872 = vpop.f32.mrf.mxu0
      %v873 = vadd.f32 0.0, %v872
      %v874 = vpop.f32.mrf.mxu0
      %875 = vdwg.mxu0
      %s876 = scalar_lea.vmem %s2, 8
      %v877 = vld [vmem:[%s876] sm:$0xff]
      %v879 = vsel %vm465, %v873, 0
      %881 = vmatprep.subr.mxu0 0.0
      %882 = vmatpush1.msra.mxu0 0.0
      %883 = vmatprep.subr.mxu0 0.0
      %884 = vmatpush1.msra.mxu0 0.0
      %885 = vmatprep.subr.mxu0 0.0
      %886 = vmatpush1.msra.mxu0 0.0
      %887 = vmatprep.subr.mxu0 0.0
      %888 = vmatpush1.msra.mxu0 0.0
      %889 = vmatprep.subr.mxu0 0.0
      %890 = vmatpush1.msra.mxu0 0.0
      %891 = vmatprep.subr.mxu0 0.0
      %892 = vmatpush1.msra.mxu0 0.0
      %893 = vmatprep.subr.mxu0 0.0
      %894 = vmatpush1.msra.mxu0 0.0
      %895 = vmatprep.subr.mxu0 0.0
      %896 = vmatpush1.msra.mxu0 0.0
      %897 = vmatprep.subr.mxu0 0.0
      %898 = vmatpush1.msra.mxu0 0.0
      %899 = vmatprep.subr.mxu0 0.0
      %900 = vmatpush1.msra.mxu0 0.0
      %901 = vmatprep.subr.mxu0 0.0
      %902 = vmatpush1.msra.mxu0 0.0
      %903 = vmatprep.subr.mxu0 0.0
      %904 = vmatpush1.msra.mxu0 0.0
      %905 = vmatprep.subr.mxu0 0.0
      %906 = vmatpush1.msra.mxu0 0.0
      %907 = vmatprep.subr.mxu0 0.0
      %908 = vmatpush1.msra.mxu0 0.0
      %909 = vmatprep.subr.mxu0 0.0
      %910 = vmatpush1.msra.mxu0 0.0
      %911 = vmatprep.subr.mxu0 0.0
      %912 = vmatpush1.msra.mxu0 %v877
      %913 = vmatprep.subr.mxu0 0.0
      %914 = vmatpush2.msra.mxu0 0.0
      %915 = vmatprep.subr.mxu0 0.0
      %916 = vmatpush2.msra.mxu0 0.0
      %917 = vmatprep.subr.mxu0 0.0
      %918 = vmatpush2.msra.mxu0 0.0
      %919 = vmatprep.subr.mxu0 0.0
      %920 = vmatpush2.msra.mxu0 0.0
      %921 = vmatprep.subr.mxu0 0.0
      %922 = vmatpush2.msra.mxu0 0.0
      %923 = vmatprep.subr.mxu0 0.0
      %924 = vmatpush2.msra.mxu0 0.0
      %925 = vmatprep.subr.mxu0 0.0
      %926 = vmatpush2.msra.mxu0 0.0
      %927 = vmatprep.subr.mxu0 0.0
      %928 = vmatpush2.msra.mxu0 0.0
      %929 = vmatprep.subr.mxu0 0.0
      %930 = vmatpush2.msra.mxu0 0.0
      %931 = vmatprep.subr.mxu0 0.0
      %932 = vmatpush2.msra.mxu0 0.0
      %933 = vmatprep.subr.mxu0 0.0
      %934 = vmatpush2.msra.mxu0 0.0
      %935 = vmatprep.subr.mxu0 0.0
      %936 = vmatpush2.msra.mxu0 0.0
      %937 = vmatprep.subr.mxu0 0.0
      %938 = vmatpush2.msra.mxu0 0.0
      %939 = vmatprep.subr.mxu0 0.0
      %940 = vmatpush2.msra.mxu0 0.0
      %941 = vmatprep.subr.mxu0 0.0
      %942 = vmatpush2.msra.mxu0 0.0
      %943 = vmatprep.subr.mxu0 0.0
      %944 = vmatpush2.msra.mxu0 0.0
      %945 = vmatprep.mubr.f32.mxu0 0.0
      %946 = vmatmul.mubr.f32.gmra.mxu0 %v879
      %v947 = vpop.f32.mrf.mxu0
      %v948 = vadd.f32 0.0, %v947
      %v949 = vpop.f32.mrf.mxu0
      %950 = vdwg.mxu0
      %v952 = vsel %vm465, %v628, 0
      %954 = vmatprep.subr.mxu0 0.0
      %955 = vmatpush1.msra.mxu0 0.0
      %956 = vmatprep.subr.mxu0 0.0
      %957 = vmatpush1.msra.mxu0 0.0
      %958 = vmatprep.subr.mxu0 0.0
      %959 = vmatpush1.msra.mxu0 0.0
      %960 = vmatprep.subr.mxu0 0.0
      %961 = vmatpush1.msra.mxu0 0.0
      %962 = vmatprep.subr.mxu0 0.0
      %963 = vmatpush1.msra.mxu0 0.0
      %964 = vmatprep.subr.mxu0 0.0
      %965 = vmatpush1.msra.mxu0 0.0
      %966 = vmatprep.subr.mxu0 0.0
      %967 = vmatpush1.msra.mxu0 0.0
      %968 = vmatprep.subr.mxu0 0.0
      %969 = vmatpush1.msra.mxu0 0.0
      %970 = vmatprep.subr.mxu0 0.0
      %971 = vmatpush1.msra.mxu0 0.0
      %972 = vmatprep.subr.mxu0 0.0
      %973 = vmatpush1.msra.mxu0 0.0
      %974 = vmatprep.subr.mxu0 0.0
      %975 = vmatpush1.msra.mxu0 0.0
      %976 = vmatprep.subr.mxu0 0.0
      %977 = vmatpush1.msra.mxu0 0.0
      %978 = vmatprep.subr.mxu0 0.0
      %979 = vmatpush1.msra.mxu0 0.0
      %980 = vmatprep.subr.mxu0 0.0
      %981 = vmatpush1.msra.mxu0 0.0
      %982 = vmatprep.subr.mxu0 0.0
      %983 = vmatpush1.msra.mxu0 0.0
      %984 = vmatprep.subr.mxu0 0.0
      %985 = vmatpush1.msra.mxu0 %v631
      %986 = vmatprep.subr.mxu0 0.0
      %987 = vmatpush2.msra.mxu0 0.0
      %988 = vmatprep.subr.mxu0 0.0
      %989 = vmatpush2.msra.mxu0 0.0
      %990 = vmatprep.subr.mxu0 0.0
      %991 = vmatpush2.msra.mxu0 0.0
      %992 = vmatprep.subr.mxu0 0.0
      %993 = vmatpush2.msra.mxu0 0.0
      %994 = vmatprep.subr.mxu0 0.0
      %995 = vmatpush2.msra.mxu0 0.0
      %996 = vmatprep.subr.mxu0 0.0
      %997 = vmatpush2.msra.mxu0 0.0
      %998 = vmatprep.subr.mxu0 0.0
      %999 = vmatpush2.msra.mxu0 0.0
      %1000 = vmatprep.subr.mxu0 0.0
      %1001 = vmatpush2.msra.mxu0 0.0
      %1002 = vmatprep.subr.mxu0 0.0
      %1003 = vmatpush2.msra.mxu0 0.0
      %1004 = vmatprep.subr.mxu0 0.0
      %1005 = vmatpush2.msra.mxu0 0.0
      %1006 = vmatprep.subr.mxu0 0.0
      %1007 = vmatpush2.msra.mxu0 0.0
      %1008 = vmatprep.subr.mxu0 0.0
      %1009 = vmatpush2.msra.mxu0 0.0
      %1010 = vmatprep.subr.mxu0 0.0
      %1011 = vmatpush2.msra.mxu0 0.0
      %1012 = vmatprep.subr.mxu0 0.0
      %1013 = vmatpush2.msra.mxu0 0.0
      %1014 = vmatprep.subr.mxu0 0.0
      %1015 = vmatpush2.msra.mxu0 0.0
      %1016 = vmatprep.subr.mxu0 0.0
      %1017 = vmatpush2.msra.mxu0 0.0
      %1018 = vmatprep.mubr.f32.mxu0 0.0
      %1019 = vmatmul.mubr.f32.gmra.mxu0 %v952
      %v1020 = vpop.f32.mrf.mxu0
      %v1021 = vadd.f32 %v948, %v1020
      %v1022 = vpop.f32.mrf.mxu0
      %1023 = vdwg.mxu0
      %s1024 = scalar_lea.vmem %s1, 64
      %v1025 = vld [vmem:[%s1024] sm:$0xff]
      %v1026 = vld [vmem:[%s1024 + $0x8] sm:$0xff]
      %v1027 = vld [vmem:[%s1024 + $0x10] sm:$0xff]
      %v1028 = vld [vmem:[%s1024 + $0x18] sm:$0xff]
      %1029 = vmatprep.subr.mxu0 0.0
      %1030 = vmatpush1.msra.mxu0 0.0
      %1031 = vmatprep.subr.mxu0 0.0
      %1032 = vmatpush1.msra.mxu0 0.0
      %1033 = vmatprep.subr.mxu0 0.0
      %1034 = vmatpush1.msra.mxu0 0.0
      %1035 = vmatprep.subr.mxu0 0.0
      %1036 = vmatpush1.msra.mxu0 0.0
      %1037 = vmatprep.subr.mxu0 0.0
      %1038 = vmatpush1.msra.mxu0 0.0
      %1039 = vmatprep.subr.mxu0 0.0
      %1040 = vmatpush1.msra.mxu0 0.0
      %1041 = vmatprep.subr.mxu0 0.0
      %1042 = vmatpush1.msra.mxu0 0.0
      %1043 = vmatprep.subr.mxu0 0.0
      %1044 = vmatpush1.msra.mxu0 0.0
      %1045 = vmatprep.subr.mxu0 0.0
      %1046 = vmatpush1.msra.mxu0 0.0
      %1047 = vmatprep.subr.mxu0 0.0
      %1048 = vmatpush1.msra.mxu0 0.0
      %1049 = vmatprep.subr.mxu0 0.0
      %1050 = vmatpush1.msra.mxu0 0.0
      %1051 = vmatprep.subr.mxu0 0.0
      %1052 = vmatpush1.msra.mxu0 0.0
      %1053 = vmatprep.subr.mxu0 0.0
      %1054 = vmatpush1.msra.mxu0 %v1028
      %1055 = vmatprep.subr.mxu0 0.0
      %1056 = vmatpush1.msra.mxu0 %v1027
      %1057 = vmatprep.subr.mxu0 0.0
      %1058 = vmatpush1.msra.mxu0 %v1026
      %1059 = vmatprep.subr.mxu0 0.0
      %1060 = vmatpush1.msra.mxu0 %v1025
      %1061 = vmatprep.subr.mxu0 0.0
      %1062 = vmatpush2.msra.mxu0 0.0
      %1063 = vmatprep.subr.mxu0 0.0
      %1064 = vmatpush2.msra.mxu0 0.0
      %1065 = vmatprep.subr.mxu0 0.0
      %1066 = vmatpush2.msra.mxu0 0.0
      %1067 = vmatprep.subr.mxu0 0.0
      %1068 = vmatpush2.msra.mxu0 0.0
      %1069 = vmatprep.subr.mxu0 0.0
      %1070 = vmatpush2.msra.mxu0 0.0
      %1071 = vmatprep.subr.mxu0 0.0
      %1072 = vmatpush2.msra.mxu0 0.0
      %1073 = vmatprep.subr.mxu0 0.0
      %1074 = vmatpush2.msra.mxu0 0.0
      %1075 = vmatprep.subr.mxu0 0.0
      %1076 = vmatpush2.msra.mxu0 0.0
      %1077 = vmatprep.subr.mxu0 0.0
      %1078 = vmatpush2.msra.mxu0 0.0
      %1079 = vmatprep.subr.mxu0 0.0
      %1080 = vmatpush2.msra.mxu0 0.0
      %1081 = vmatprep.subr.mxu0 0.0
      %1082 = vmatpush2.msra.mxu0 0.0
      %1083 = vmatprep.subr.mxu0 0.0
      %1084 = vmatpush2.msra.mxu0 0.0
      %1085 = vmatprep.subr.mxu0 0.0
      %1086 = vmatpush2.msra.mxu0 0.0
      %1087 = vmatprep.subr.mxu0 0.0
      %1088 = vmatpush2.msra.mxu0 0.0
      %1089 = vmatprep.subr.mxu0 0.0
      %1090 = vmatpush2.msra.mxu0 0.0
      %1091 = vmatprep.subr.mxu0 0.0
      %1092 = vmatpush2.msra.mxu0 0.0
      %1093 = vmatprep.mubr.f32.mxu0 0.0
      %1094 = vmatmul.mubr.f32.gmra.mxu0 %v389
      %v1095 = vpop.f32.mrf.mxu0
      %v1096 = vadd.f32 0.0, %v1095
      %v1097 = vpop.f32.mrf.mxu0
      %1098 = vdwg.mxu0
      %v1099 = vmul.f32 %v1096, 0.35355338
      %1101 = vrot.lane.b32.xlu0 %v1096, 120
      %v1102 = vpop.permute.xlu0 %1101
      %v1104 = vsel %vm465, %v1099, 0
      %v1106 = vsel %vm465, %v1102, 0
      %1108 = vmatprep.subr.mxu0 0.0
      %1109 = vmatpush1.xpose.msra.mxu0 0.0
      %1110 = vmatprep.subr.mxu0 0.0
      %1111 = vmatpush1.xpose.msra.mxu0 0.0
      %1112 = vmatprep.subr.mxu0 0.0
      %1113 = vmatpush1.xpose.msra.mxu0 0.0
      %1114 = vmatprep.subr.mxu0 0.0
      %1115 = vmatpush1.xpose.msra.mxu0 0.0
      %1116 = vmatprep.subr.mxu0 0.0
      %1117 = vmatpush1.xpose.msra.mxu0 0.0
      %1118 = vmatprep.subr.mxu0 0.0
      %1119 = vmatpush1.xpose.msra.mxu0 0.0
      %1120 = vmatprep.subr.mxu0 0.0
      %1121 = vmatpush1.xpose.msra.mxu0 0.0
      %1122 = vmatprep.subr.mxu0 0.0
      %1123 = vmatpush1.xpose.msra.mxu0 0.0
      %1124 = vmatprep.subr.mxu0 0.0
      %1125 = vmatpush1.xpose.msra.mxu0 0.0
      %1126 = vmatprep.subr.mxu0 0.0
      %1127 = vmatpush1.xpose.msra.mxu0 0.0
      %1128 = vmatprep.subr.mxu0 0.0
      %1129 = vmatpush1.xpose.msra.mxu0 0.0
      %1130 = vmatprep.subr.mxu0 0.0
      %1131 = vmatpush1.xpose.msra.mxu0 0.0
      %1132 = vmatprep.subr.mxu0 0.0
      %1133 = vmatpush1.xpose.msra.mxu0 0.0
      %1134 = vmatprep.subr.mxu0 0.0
      %1135 = vmatpush1.xpose.msra.mxu0 0.0
      %1136 = vmatprep.subr.mxu0 0.0
      %1137 = vmatpush1.xpose.msra.mxu0 0.0
      %1138 = vmatprep.subr.mxu0 0.0
      %1139 = vmatpush1.xpose.msra.mxu0 %v1106
      %1140 = vmatprep.subr.mxu0 0.0
      %1141 = vmatpush2.xpose.msra.mxu0 0.0
      %1142 = vmatprep.subr.mxu0 0.0
      %1143 = vmatpush2.xpose.msra.mxu0 0.0
      %1144 = vmatprep.subr.mxu0 0.0
      %1145 = vmatpush2.xpose.msra.mxu0 0.0
      %1146 = vmatprep.subr.mxu0 0.0
      %1147 = vmatpush2.xpose.msra.mxu0 0.0
      %1148 = vmatprep.subr.mxu0 0.0
      %1149 = vmatpush2.xpose.msra.mxu0 0.0
      %1150 = vmatprep.subr.mxu0 0.0
      %1151 = vmatpush2.xpose.msra.mxu0 0.0
      %1152 = vmatprep.subr.mxu0 0.0
      %1153 = vmatpush2.xpose.msra.mxu0 0.0
      %1154 = vmatprep.subr.mxu0 0.0
      %1155 = vmatpush2.xpose.msra.mxu0 0.0
      %1156 = vmatprep.subr.mxu0 0.0
      %1157 = vmatpush2.xpose.msra.mxu0 0.0
      %1158 = vmatprep.subr.mxu0 0.0
      %1159 = vmatpush2.xpose.msra.mxu0 0.0
      %1160 = vmatprep.subr.mxu0 0.0
      %1161 = vmatpush2.xpose.msra.mxu0 0.0
      %1162 = vmatprep.subr.mxu0 0.0
      %1163 = vmatpush2.xpose.msra.mxu0 0.0
      %1164 = vmatprep.subr.mxu0 0.0
      %1165 = vmatpush2.xpose.msra.mxu0 0.0
      %1166 = vmatprep.subr.mxu0 0.0
      %1167 = vmatpush2.xpose.msra.mxu0 0.0
      %1168 = vmatprep.subr.mxu0 0.0
      %1169 = vmatpush2.xpose.msra.mxu0 0.0
      %1170 = vmatprep.subr.mxu0 0.0
      %1171 = vmatpush2.xpose.msra.mxu0 0.0
      %1172 = vmatprep.mubr.f32.mxu0 0.0
      %1173 = vmatmul.mubr.f32.gmra.mxu0 %v1104
      %v1174 = vpop.f32.mrf.mxu0
      %v1175 = vadd.f32 0.0, %v1174
      %v1176 = vpop.f32.mrf.mxu0
      %1177 = vdwg.mxu0
      %v1178 = vsel %vm465, %v1175, -inf
      %1179 = vmax.xlane.f32.xlu0 %v1178
      %v1180 = vpop.xlane.xlu0 %1179
      %v1181 = vsub.f32 %v1175, %v1180
      %v1182 = vmul.f32 %v1181, 1.442695
      %v1183 = vpow.pop %v1182
      %v1184 = vsel %vm465, %v1183, 0.0
      %1185 = vadd.xlane.f32.xlu0 %v1184
      %v1186 = vpop.xlane.xlu0 %1185
      %v1187 = vrcp.pop %v1186
      %v1188 = vmul.f32 %v1186, %v1187
      %v1189 = vsub.f32 2.0, %v1188
      %v1190 = vmul.f32 %v1187, %v1189
      %v1191 = vmul.f32 %v1183, %v1190
      %1192 = vrot.lane.b32.xlu0 %v1096, 112
      %v1193 = vpop.permute.xlu0 %1192
      %v1196 = vsel %vm465, %v1191, 0
      %1198 = vmatprep.subr.mxu0 0.0
      %1199 = vmatpush1.msra.mxu0 0.0
      %1200 = vmatprep.subr.mxu0 0.0
      %1201 = vmatpush1.msra.mxu0 0.0
      %1202 = vmatprep.subr.mxu0 0.0
      %1203 = vmatpush1.msra.mxu0 0.0
      %1204 = vmatprep.subr.mxu0 0.0
      %1205 = vmatpush1.msra.mxu0 0.0
      %1206 = vmatprep.subr.mxu0 0.0
      %1207 = vmatpush1.msra.mxu0 0.0
      %1208 = vmatprep.subr.mxu0 0.0
      %1209 = vmatpush1.msra.mxu0 0.0
      %1210 = vmatprep.subr.mxu0 0.0
      %1211 = vmatpush1.msra.mxu0 0.0
      %1212 = vmatprep.subr.mxu0 0.0
      %1213 = vmatpush1.msra.mxu0 0.0
      %1214 = vmatprep.subr.mxu0 0.0
      %1215 = vmatpush1.msra.mxu0 0.0
      %1216 = vmatprep.subr.mxu0 0.0
      %1217 = vmatpush1.msra.mxu0 0.0
      %1218 = vmatprep.subr.mxu0 0.0
      %1219 = vmatpush1.msra.mxu0 0.0
      %1220 = vmatprep.subr.mxu0 0.0
      %1221 = vmatpush1.msra.mxu0 0.0
      %1222 = vmatprep.subr.mxu0 0.0
      %1223 = vmatpush1.msra.mxu0 0.0
      %1224 = vmatprep.subr.mxu0 0.0
      %1225 = vmatpush1.msra.mxu0 0.0
      %1226 = vmatprep.subr.mxu0 0.0
      %1227 = vmatpush1.msra.mxu0 0.0
      %1228 = vmatprep.subr.mxu0 0.0
      %1229 = vmatpush1.msra.mxu0 %v1193
      %1230 = vmatprep.subr.mxu0 0.0
      %1231 = vmatpush2.msra.mxu0 0.0
      %1232 = vmatprep.subr.mxu0 0.0
      %1233 = vmatpush2.msra.mxu0 0.0
      %1234 = vmatprep.subr.mxu0 0.0
      %1235 = vmatpush2.msra.mxu0 0.0
      %1236 = vmatprep.subr.mxu0 0.0
      %1237 = vmatpush2.msra.mxu0 0.0
      %1238 = vmatprep.subr.mxu0 0.0
      %1239 = vmatpush2.msra.mxu0 0.0
      %1240 = vmatprep.subr.mxu0 0.0
      %1241 = vmatpush2.msra.mxu0 0.0
      %1242 = vmatprep.subr.mxu0 0.0
      %1243 = vmatpush2.msra.mxu0 0.0
      %1244 = vmatprep.subr.mxu0 0.0
      %1245 = vmatpush2.msra.mxu0 0.0
      %1246 = vmatprep.subr.mxu0 0.0
      %1247 = vmatpush2.msra.mxu0 0.0
      %1248 = vmatprep.subr.mxu0 0.0
      %1249 = vmatpush2.msra.mxu0 0.0
      %1250 = vmatprep.subr.mxu0 0.0
      %1251 = vmatpush2.msra.mxu0 0.0
      %1252 = vmatprep.subr.mxu0 0.0
      %1253 = vmatpush2.msra.mxu0 0.0
      %1254 = vmatprep.subr.mxu0 0.0
      %1255 = vmatpush2.msra.mxu0 0.0
      %1256 = vmatprep.subr.mxu0 0.0
      %1257 = vmatpush2.msra.mxu0 0.0
      %1258 = vmatprep.subr.mxu0 0.0
      %1259 = vmatpush2.msra.mxu0 0.0
      %1260 = vmatprep.subr.mxu0 0.0
      %1261 = vmatpush2.msra.mxu0 0.0
      %1262 = vmatprep.mubr.f32.mxu0 0.0
      %1263 = vmatmul.mubr.f32.gmra.mxu0 %v1196
      %v1264 = vpop.f32.mrf.mxu0
      %v1265 = vadd.f32 0.0, %v1264
      %v1266 = vpop.f32.mrf.mxu0
      %1267 = vdwg.mxu0
      %s1268 = scalar_lea.vmem %s2, 16
      %v1269 = vld [vmem:[%s1268] sm:$0xff]
      %v1271 = vsel %vm465, %v1265, 0
      %1273 = vmatprep.subr.mxu0 0.0
      %1274 = vmatpush1.msra.mxu0 0.0
      %1275 = vmatprep.subr.mxu0 0.0
      %1276 = vmatpush1.msra.mxu0 0.0
      %1277 = vmatprep.subr.mxu0 0.0
      %1278 = vmatpush1.msra.mxu0 0.0
      %1279 = vmatprep.subr.mxu0 0.0
      %1280 = vmatpush1.msra.mxu0 0.0
      %1281 = vmatprep.subr.mxu0 0.0
      %1282 = vmatpush1.msra.mxu0 0.0
      %1283 = vmatprep.subr.mxu0 0.0
      %1284 = vmatpush1.msra.mxu0 0.0
      %1285 = vmatprep.subr.mxu0 0.0
      %1286 = vmatpush1.msra.mxu0 0.0
      %1287 = vmatprep.subr.mxu0 0.0
      %1288 = vmatpush1.msra.mxu0 0.0
      %1289 = vmatprep.subr.mxu0 0.0
      %1290 = vmatpush1.msra.mxu0 0.0
      %1291 = vmatprep.subr.mxu0 0.0
      %1292 = vmatpush1.msra.mxu0 0.0
      %1293 = vmatprep.subr.mxu0 0.0
      %1294 = vmatpush1.msra.mxu0 0.0
      %1295 = vmatprep.subr.mxu0 0.0
      %1296 = vmatpush1.msra.mxu0 0.0
      %1297 = vmatprep.subr.mxu0 0.0
      %1298 = vmatpush1.msra.mxu0 0.0
      %1299 = vmatprep.subr.mxu0 0.0
      %1300 = vmatpush1.msra.mxu0 0.0
      %1301 = vmatprep.subr.mxu0 0.0
      %1302 = vmatpush1.msra.mxu0 0.0
      %1303 = vmatprep.subr.mxu0 0.0
      %1304 = vmatpush1.msra.mxu0 %v1269
      %1305 = vmatprep.subr.mxu0 0.0
      %1306 = vmatpush2.msra.mxu0 0.0
      %1307 = vmatprep.subr.mxu0 0.0
      %1308 = vmatpush2.msra.mxu0 0.0
      %1309 = vmatprep.subr.mxu0 0.0
      %1310 = vmatpush2.msra.mxu0 0.0
      %1311 = vmatprep.subr.mxu0 0.0
      %1312 = vmatpush2.msra.mxu0 0.0
      %1313 = vmatprep.subr.mxu0 0.0
      %1314 = vmatpush2.msra.mxu0 0.0
      %1315 = vmatprep.subr.mxu0 0.0
      %1316 = vmatpush2.msra.mxu0 0.0
      %1317 = vmatprep.subr.mxu0 0.0
      %1318 = vmatpush2.msra.mxu0 0.0
      %1319 = vmatprep.subr.mxu0 0.0
      %1320 = vmatpush2.msra.mxu0 0.0
      %1321 = vmatprep.subr.mxu0 0.0
      %1322 = vmatpush2.msra.mxu0 0.0
      %1323 = vmatprep.subr.mxu0 0.0
      %1324 = vmatpush2.msra.mxu0 0.0
      %1325 = vmatprep.subr.mxu0 0.0
      %1326 = vmatpush2.msra.mxu0 0.0
      %1327 = vmatprep.subr.mxu0 0.0
      %1328 = vmatpush2.msra.mxu0 0.0
      %1329 = vmatprep.subr.mxu0 0.0
      %1330 = vmatpush2.msra.mxu0 0.0
      %1331 = vmatprep.subr.mxu0 0.0
      %1332 = vmatpush2.msra.mxu0 0.0
      %1333 = vmatprep.subr.mxu0 0.0
      %1334 = vmatpush2.msra.mxu0 0.0
      %1335 = vmatprep.subr.mxu0 0.0
      %1336 = vmatpush2.msra.mxu0 0.0
      %1337 = vmatprep.mubr.f32.mxu0 0.0
      %1338 = vmatmul.mubr.f32.gmra.mxu0 %v1271
      %v1339 = vpop.f32.mrf.mxu0
      %v1340 = vadd.f32 0.0, %v1339
      %v1341 = vpop.f32.mrf.mxu0
      %1342 = vdwg.mxu0
      %v1343 = vadd.f32 %v1021, %v1340
      %s1344 = scalar_lea.vmem %s1, 96
      %v1345 = vld [vmem:[%s1344] sm:$0xff]
      %v1346 = vld [vmem:[%s1344 + $0x8] sm:$0xff]
      %v1347 = vld [vmem:[%s1344 + $0x10] sm:$0xff]
      %v1348 = vld [vmem:[%s1344 + $0x18] sm:$0xff]
      %1349 = vmatprep.subr.mxu0 0.0
      %1350 = vmatpush1.msra.mxu0 0.0
      %1351 = vmatprep.subr.mxu0 0.0
      %1352 = vmatpush1.msra.mxu0 0.0
      %1353 = vmatprep.subr.mxu0 0.0
      %1354 = vmatpush1.msra.mxu0 0.0
      %1355 = vmatprep.subr.mxu0 0.0
      %1356 = vmatpush1.msra.mxu0 0.0
      %1357 = vmatprep.subr.mxu0 0.0
      %1358 = vmatpush1.msra.mxu0 0.0
      %1359 = vmatprep.subr.mxu0 0.0
      %1360 = vmatpush1.msra.mxu0 0.0
      %1361 = vmatprep.subr.mxu0 0.0
      %1362 = vmatpush1.msra.mxu0 0.0
      %1363 = vmatprep.subr.mxu0 0.0
      %1364 = vmatpush1.msra.mxu0 0.0
      %1365 = vmatprep.subr.mxu0 0.0
      %1366 = vmatpush1.msra.mxu0 0.0
      %1367 = vmatprep.subr.mxu0 0.0
      %1368 = vmatpush1.msra.mxu0 0.0
      %1369 = vmatprep.subr.mxu0 0.0
      %1370 = vmatpush1.msra.mxu0 0.0
      %1371 = vmatprep.subr.mxu0 0.0
      %1372 = vmatpush1.msra.mxu0 0.0
      %1373 = vmatprep.subr.mxu0 0.0
      %1374 = vmatpush1.msra.mxu0 %v1348
      %1375 = vmatprep.subr.mxu0 0.0
      %1376 = vmatpush1.msra.mxu0 %v1347
      %1377 = vmatprep.subr.mxu0 0.0
      %1378 = vmatpush1.msra.mxu0 %v1346
      %1379 = vmatprep.subr.mxu0 0.0
      %1380 = vmatpush1.msra.mxu0 %v1345
      %1381 = vmatprep.subr.mxu0 0.0
      %1382 = vmatpush2.msra.mxu0 0.0
      %1383 = vmatprep.subr.mxu0 0.0
      %1384 = vmatpush2.msra.mxu0 0.0
      %1385 = vmatprep.subr.mxu0 0.0
      %1386 = vmatpush2.msra.mxu0 0.0
      %1387 = vmatprep.subr.mxu0 0.0
      %1388 = vmatpush2.msra.mxu0 0.0
      %1389 = vmatprep.subr.mxu0 0.0
      %1390 = vmatpush2.msra.mxu0 0.0
      %1391 = vmatprep.subr.mxu0 0.0
      %1392 = vmatpush2.msra.mxu0 0.0
      %1393 = vmatprep.subr.mxu0 0.0
      %1394 = vmatpush2.msra.mxu0 0.0
      %1395 = vmatprep.subr.mxu0 0.0
      %1396 = vmatpush2.msra.mxu0 0.0
      %1397 = vmatprep.subr.mxu0 0.0
      %1398 = vmatpush2.msra.mxu0 0.0
      %1399 = vmatprep.subr.mxu0 0.0
      %1400 = vmatpush2.msra.mxu0 0.0
      %1401 = vmatprep.subr.mxu0 0.0
      %1402 = vmatpush2.msra.mxu0 0.0
      %1403 = vmatprep.subr.mxu0 0.0
      %1404 = vmatpush2.msra.mxu0 0.0
      %1405 = vmatprep.subr.mxu0 0.0
      %1406 = vmatpush2.msra.mxu0 0.0
      %1407 = vmatprep.subr.mxu0 0.0
      %1408 = vmatpush2.msra.mxu0 0.0
      %1409 = vmatprep.subr.mxu0 0.0
      %1410 = vmatpush2.msra.mxu0 0.0
      %1411 = vmatprep.subr.mxu0 0.0
      %1412 = vmatpush2.msra.mxu0 0.0
      %1413 = vmatprep.mubr.f32.mxu0 0.0
      %1414 = vmatmul.mubr.f32.gmra.mxu0 %v389
      %v1415 = vpop.f32.mrf.mxu0
      %v1416 = vadd.f32 0.0, %v1415
      %v1417 = vpop.f32.mrf.mxu0
      %1418 = vdwg.mxu0
      %v1419 = vmul.f32 %v1416, 0.35355338
      %1421 = vrot.lane.b32.xlu0 %v1416, 120
      %v1422 = vpop.permute.xlu0 %1421
      %v1424 = vsel %vm465, %v1419, 0
      %v1426 = vsel %vm465, %v1422, 0
      %1428 = vmatprep.subr.mxu0 0.0
      %1429 = vmatpush1.xpose.msra.mxu0 0.0
      %1430 = vmatprep.subr.mxu0 0.0
      %1431 = vmatpush1.xpose.msra.mxu0 0.0
      %1432 = vmatprep.subr.mxu0 0.0
      %1433 = vmatpush1.xpose.msra.mxu0 0.0
      %1434 = vmatprep.subr.mxu0 0.0
      %1435 = vmatpush1.xpose.msra.mxu0 0.0
      %1436 = vmatprep.subr.mxu0 0.0
      %1437 = vmatpush1.xpose.msra.mxu0 0.0
      %1438 = vmatprep.subr.mxu0 0.0
      %1439 = vmatpush1.xpose.msra.mxu0 0.0
      %1440 = vmatprep.subr.mxu0 0.0
      %1441 = vmatpush1.xpose.msra.mxu0 0.0
      %1442 = vmatprep.subr.mxu0 0.0
      %1443 = vmatpush1.xpose.msra.mxu0 0.0
      %1444 = vmatprep.subr.mxu0 0.0
      %1445 = vmatpush1.xpose.msra.mxu0 0.0
      %1446 = vmatprep.subr.mxu0 0.0
      %1447 = vmatpush1.xpose.msra.mxu0 0.0
      %1448 = vmatprep.subr.mxu0 0.0
      %1449 = vmatpush1.xpose.msra.mxu0 0.0
      %1450 = vmatprep.subr.mxu0 0.0
      %1451 = vmatpush1.xpose.msra.mxu0 0.0
      %1452 = vmatprep.subr.mxu0 0.0
      %1453 = vmatpush1.xpose.msra.mxu0 0.0
      %1454 = vmatprep.subr.mxu0 0.0
      %1455 = vmatpush1.xpose.msra.mxu0 0.0
      %1456 = vmatprep.subr.mxu0 0.0
      %1457 = vmatpush1.xpose.msra.mxu0 0.0
      %1458 = vmatprep.subr.mxu0 0.0
      %1459 = vmatpush1.xpose.msra.mxu0 %v1426
      %1460 = vmatprep.subr.mxu0 0.0
      %1461 = vmatpush2.xpose.msra.mxu0 0.0
      %1462 = vmatprep.subr.mxu0 0.0
      %1463 = vmatpush2.xpose.msra.mxu0 0.0
      %1464 = vmatprep.subr.mxu0 0.0
      %1465 = vmatpush2.xpose.msra.mxu0 0.0
      %1466 = vmatprep.subr.mxu0 0.0
      %1467 = vmatpush2.xpose.msra.mxu0 0.0
      %1468 = vmatprep.subr.mxu0 0.0
      %1469 = vmatpush2.xpose.msra.mxu0 0.0
      %1470 = vmatprep.subr.mxu0 0.0
      %1471 = vmatpush2.xpose.msra.mxu0 0.0
      %1472 = vmatprep.subr.mxu0 0.0
      %1473 = vmatpush2.xpose.msra.mxu0 0.0
      %1474 = vmatprep.subr.mxu0 0.0
      %1475 = vmatpush2.xpose.msra.mxu0 0.0
      %1476 = vmatprep.subr.mxu0 0.0
      %1477 = vmatpush2.xpose.msra.mxu0 0.0
      %1478 = vmatprep.subr.mxu0 0.0
      %1479 = vmatpush2.xpose.msra.mxu0 0.0
      %1480 = vmatprep.subr.mxu0 0.0
      %1481 = vmatpush2.xpose.msra.mxu0 0.0
      %1482 = vmatprep.subr.mxu0 0.0
      %1483 = vmatpush2.xpose.msra.mxu0 0.0
      %1484 = vmatprep.subr.mxu0 0.0
      %1485 = vmatpush2.xpose.msra.mxu0 0.0
      %1486 = vmatprep.subr.mxu0 0.0
      %1487 = vmatpush2.xpose.msra.mxu0 0.0
      %1488 = vmatprep.subr.mxu0 0.0
      %1489 = vmatpush2.xpose.msra.mxu0 0.0
      %1490 = vmatprep.subr.mxu0 0.0
      %1491 = vmatpush2.xpose.msra.mxu0 0.0
      %1492 = vmatprep.mubr.f32.mxu0 0.0
      %1493 = vmatmul.mubr.f32.gmra.mxu0 %v1424
      %v1494 = vpop.f32.mrf.mxu0
      %v1495 = vadd.f32 0.0, %v1494
      %v1496 = vpop.f32.mrf.mxu0
      %1497 = vdwg.mxu0
      %v1498 = vsel %vm465, %v1495, -inf
      %1499 = vmax.xlane.f32.xlu0 %v1498
      %v1500 = vpop.xlane.xlu0 %1499
      %v1501 = vsub.f32 %v1495, %v1500
      %v1502 = vmul.f32 %v1501, 1.442695
      %v1503 = vpow.pop %v1502
      %v1504 = vsel %vm465, %v1503, 0.0
      %1505 = vadd.xlane.f32.xlu0 %v1504
      %v1506 = vpop.xlane.xlu0 %1505
      %v1507 = vrcp.pop %v1506
      %v1508 = vmul.f32 %v1506, %v1507
      %v1509 = vsub.f32 2.0, %v1508
      %v1510 = vmul.f32 %v1507, %v1509
      %v1511 = vmul.f32 %v1503, %v1510
      %1512 = vrot.lane.b32.xlu0 %v1416, 112
      %v1513 = vpop.permute.xlu0 %1512
      %v1516 = vsel %vm465, %v1511, 0
      %1518 = vmatprep.subr.mxu0 0.0
      %1519 = vmatpush1.msra.mxu0 0.0
      %1520 = vmatprep.subr.mxu0 0.0
      %1521 = vmatpush1.msra.mxu0 0.0
      %1522 = vmatprep.subr.mxu0 0.0
      %1523 = vmatpush1.msra.mxu0 0.0
      %1524 = vmatprep.subr.mxu0 0.0
      %1525 = vmatpush1.msra.mxu0 0.0
      %1526 = vmatprep.subr.mxu0 0.0
      %1527 = vmatpush1.msra.mxu0 0.0
      %1528 = vmatprep.subr.mxu0 0.0
      %1529 = vmatpush1.msra.mxu0 0.0
      %1530 = vmatprep.subr.mxu0 0.0
      %1531 = vmatpush1.msra.mxu0 0.0
      %1532 = vmatprep.subr.mxu0 0.0
      %1533 = vmatpush1.msra.mxu0 0.0
      %1534 = vmatprep.subr.mxu0 0.0
      %1535 = vmatpush1.msra.mxu0 0.0
      %1536 = vmatprep.subr.mxu0 0.0
      %1537 = vmatpush1.msra.mxu0 0.0
      %1538 = vmatprep.subr.mxu0 0.0
      %1539 = vmatpush1.msra.mxu0 0.0
      %1540 = vmatprep.subr.mxu0 0.0
      %1541 = vmatpush1.msra.mxu0 0.0
      %1542 = vmatprep.subr.mxu0 0.0
      %1543 = vmatpush1.msra.mxu0 0.0
      %1544 = vmatprep.subr.mxu0 0.0
      %1545 = vmatpush1.msra.mxu0 0.0
      %1546 = vmatprep.subr.mxu0 0.0
      %1547 = vmatpush1.msra.mxu0 0.0
      %1548 = vmatprep.subr.mxu0 0.0
      %1549 = vmatpush1.msra.mxu0 %v1513
      %1550 = vmatprep.subr.mxu0 0.0
      %1551 = vmatpush2.msra.mxu0 0.0
      %1552 = vmatprep.subr.mxu0 0.0
      %1553 = vmatpush2.msra.mxu0 0.0
      %1554 = vmatprep.subr.mxu0 0.0
      %1555 = vmatpush2.msra.mxu0 0.0
      %1556 = vmatprep.subr.mxu0 0.0
      %1557 = vmatpush2.msra.mxu0 0.0
      %1558 = vmatprep.subr.mxu0 0.0
      %1559 = vmatpush2.msra.mxu0 0.0
      %1560 = vmatprep.subr.mxu0 0.0
      %1561 = vmatpush2.msra.mxu0 0.0
      %1562 = vmatprep.subr.mxu0 0.0
      %1563 = vmatpush2.msra.mxu0 0.0
      %1564 = vmatprep.subr.mxu0 0.0
      %1565 = vmatpush2.msra.mxu0 0.0
      %1566 = vmatprep.subr.mxu0 0.0
      %1567 = vmatpush2.msra.mxu0 0.0
      %1568 = vmatprep.subr.mxu0 0.0
      %1569 = vmatpush2.msra.mxu0 0.0
      %1570 = vmatprep.subr.mxu0 0.0
      %1571 = vmatpush2.msra.mxu0 0.0
      %1572 = vmatprep.subr.mxu0 0.0
      %1573 = vmatpush2.msra.mxu0 0.0
      %1574 = vmatprep.subr.mxu0 0.0
      %1575 = vmatpush2.msra.mxu0 0.0
      %1576 = vmatprep.subr.mxu0 0.0
      %1577 = vmatpush2.msra.mxu0 0.0
      %1578 = vmatprep.subr.mxu0 0.0
      %1579 = vmatpush2.msra.mxu0 0.0
      %1580 = vmatprep.subr.mxu0 0.0
      %1581 = vmatpush2.msra.mxu0 0.0
      %1582 = vmatprep.mubr.f32.mxu0 0.0
      %1583 = vmatmul.mubr.f32.gmra.mxu0 %v1516
      %v1584 = vpop.f32.mrf.mxu0
      %v1585 = vadd.f32 0.0, %v1584
      %v1586 = vpop.f32.mrf.mxu0
      %1587 = vdwg.mxu0
      %s1588 = scalar_lea.vmem %s2, 24
      %v1589 = vld [vmem:[%s1588] sm:$0xff]
      %v1591 = vsel %vm465, %v1585, 0
      %1593 = vmatprep.subr.mxu0 0.0
      %1594 = vmatpush1.msra.mxu0 0.0
      %1595 = vmatprep.subr.mxu0 0.0
      %1596 = vmatpush1.msra.mxu0 0.0
      %1597 = vmatprep.subr.mxu0 0.0
      %1598 = vmatpush1.msra.mxu0 0.0
      %1599 = vmatprep.subr.mxu0 0.0
      %1600 = vmatpush1.msra.mxu0 0.0
      %1601 = vmatprep.subr.mxu0 0.0
      %1602 = vmatpush1.msra.mxu0 0.0
      %1603 = vmatprep.subr.mxu0 0.0
      %1604 = vmatpush1.msra.mxu0 0.0
      %1605 = vmatprep.subr.mxu0 0.0
      %1606 = vmatpush1.msra.mxu0 0.0
      %1607 = vmatprep.subr.mxu0 0.0
      %1608 = vmatpush1.msra.mxu0 0.0
      %1609 = vmatprep.subr.mxu0 0.0
      %1610 = vmatpush1.msra.mxu0 0.0
      %1611 = vmatprep.subr.mxu0 0.0
      %1612 = vmatpush1.msra.mxu0 0.0
      %1613 = vmatprep.subr.mxu0 0.0
      %1614 = vmatpush1.msra.mxu0 0.0
      %1615 = vmatprep.subr.mxu0 0.0
      %1616 = vmatpush1.msra.mxu0 0.0
      %1617 = vmatprep.subr.mxu0 0.0
      %1618 = vmatpush1.msra.mxu0 0.0
      %1619 = vmatprep.subr.mxu0 0.0
      %1620 = vmatpush1.msra.mxu0 0.0
      %1621 = vmatprep.subr.mxu0 0.0
      %1622 = vmatpush1.msra.mxu0 0.0
      %1623 = vmatprep.subr.mxu0 0.0
      %1624 = vmatpush1.msra.mxu0 %v1589
      %1625 = vmatprep.subr.mxu0 0.0
      %1626 = vmatpush2.msra.mxu0 0.0
      %1627 = vmatprep.subr.mxu0 0.0
      %1628 = vmatpush2.msra.mxu0 0.0
      %1629 = vmatprep.subr.mxu0 0.0
      %1630 = vmatpush2.msra.mxu0 0.0
      %1631 = vmatprep.subr.mxu0 0.0
      %1632 = vmatpush2.msra.mxu0 0.0
      %1633 = vmatprep.subr.mxu0 0.0
      %1634 = vmatpush2.msra.mxu0 0.0
      %1635 = vmatprep.subr.mxu0 0.0
      %1636 = vmatpush2.msra.mxu0 0.0
      %1637 = vmatprep.subr.mxu0 0.0
      %1638 = vmatpush2.msra.mxu0 0.0
      %1639 = vmatprep.subr.mxu0 0.0
      %1640 = vmatpush2.msra.mxu0 0.0
      %1641 = vmatprep.subr.mxu0 0.0
      %1642 = vmatpush2.msra.mxu0 0.0
      %1643 = vmatprep.subr.mxu0 0.0
      %1644 = vmatpush2.msra.mxu0 0.0
      %1645 = vmatprep.subr.mxu0 0.0
      %1646 = vmatpush2.msra.mxu0 0.0
      %1647 = vmatprep.subr.mxu0 0.0
      %1648 = vmatpush2.msra.mxu0 0.0
      %1649 = vmatprep.subr.mxu0 0.0
      %1650 = vmatpush2.msra.mxu0 0.0
      %1651 = vmatprep.subr.mxu0 0.0
      %1652 = vmatpush2.msra.mxu0 0.0
      %1653 = vmatprep.subr.mxu0 0.0
      %1654 = vmatpush2.msra.mxu0 0.0
      %1655 = vmatprep.subr.mxu0 0.0
      %1656 = vmatpush2.msra.mxu0 0.0
      %1657 = vmatprep.mubr.f32.mxu0 0.0
      %1658 = vmatmul.mubr.f32.gmra.mxu0 %v1591
      %v1659 = vpop.f32.mrf.mxu0
      %v1660 = vadd.f32 0.0, %v1659
      %v1661 = vpop.f32.mrf.mxu0
      %1662 = vdwg.mxu0
      %v1663 = vadd.f32 %v1343, %v1660
      %v1664 = vadd.f32 %v1663, %v382
      %v1665 = vld [vmem:[%s3] sm:$0x1]
      %v1666 = vld [vmem:[%s4] sm:$0x1]
      %v1667 = vsel %vm387, %v1664, 0.0
      %1668 = vadd.xlane.f32.xlu0 %v1667
      %v1669 = vpop.xlane.xlu0 %1668
      %v1670 = vrcp.pop 32.0
      %v1671 = vmul.f32 %v1669, %v1670
      %v1672 = vsub.f32 %v1664, %v1671
      %v1673 = vmul.f32 %v1672, %v1672
      %v1674 = vsel %vm387, %v1673, 0.0
      %1675 = vadd.xlane.f32.xlu0 %v1674
      %v1676 = vpop.xlane.xlu0 %1675
      %v1677 = vmul.f32 %v1676, %v1670
      %v1678 = vadd.f32 %v1677, 1e-06
      %v1679 = vrsqrt.pop %v1678
      %v1680 = vmul.f32 %v1672, %v1679
      %v1682 = vlaneseq
      %v1683 = vshrl.u32 %v1682, 7
      %v1684 = vsub.s32 0, %v1683
      %v1685 = vrot.slane %v1665, %v1684
      %v1687 = vmul.f32 %v1680, %v1685
      %v1689 = vlaneseq
      %v1690 = vshrl.u32 %v1689, 7
      %v1691 = vsub.s32 0, %v1690
      %v1692 = vrot.slane %v1666, %v1691
      %v1694 = vadd.f32 %v1687, %v1692
      %v1695 = vld [vmem:[%s5] sm:$0xff]
      %v1696 = vld [vmem:[%s5 + $0x8] sm:$0xff]
      %v1697 = vld [vmem:[%s5 + $0x10] sm:$0xff]
      %v1698 = vld [vmem:[%s5 + $0x18] sm:$0xff]
      %v1699 = vld [vmem:[%s6] sm:$0x1]
      %v1701 = vlaneseq
      %v1702 = vshrl.u32 %v1701, 7
      %v1703 = vsub.s32 0, %v1702
      %v1704 = vrot.slane %v1699, %v1703
      %v1707 = vsel %vm387, %v1694, 0
      %1709 = vmatprep.subr.mxu0 0.0
      %1710 = vmatpush1.msra.mxu0 0.0
      %1711 = vmatprep.subr.mxu0 0.0
      %1712 = vmatpush1.msra.mxu0 0.0
      %1713 = vmatprep.subr.mxu0 0.0
      %1714 = vmatpush1.msra.mxu0 0.0
      %1715 = vmatprep.subr.mxu0 0.0
      %1716 = vmatpush1.msra.mxu0 0.0
      %1717 = vmatprep.subr.mxu0 0.0
      %1718 = vmatpush1.msra.mxu0 0.0
      %1719 = vmatprep.subr.mxu0 0.0
      %1720 = vmatpush1.msra.mxu0 0.0
      %1721 = vmatprep.subr.mxu0 0.0
      %1722 = vmatpush1.msra.mxu0 0.0
      %1723 = vmatprep.subr.mxu0 0.0
      %1724 = vmatpush1.msra.mxu0 0.0
      %1725 = vmatprep.subr.mxu0 0.0
      %1726 = vmatpush1.msra.mxu0 0.0
      %1727 = vmatprep.subr.mxu0 0.0
      %1728 = vmatpush1.msra.mxu0 0.0
      %1729 = vmatprep.subr.mxu0 0.0
      %1730 = vmatpush1.msra.mxu0 0.0
      %1731 = vmatprep.subr.mxu0 0.0
      %1732 = vmatpush1.msra.mxu0 0.0
      %1733 = vmatprep.subr.mxu0 0.0
      %1734 = vmatpush1.msra.mxu0 %v1698
      %1735 = vmatprep.subr.mxu0 0.0
      %1736 = vmatpush1.msra.mxu0 %v1697
      %1737 = vmatprep.subr.mxu0 0.0
      %1738 = vmatpush1.msra.mxu0 %v1696
      %1739 = vmatprep.subr.mxu0 0.0
      %1740 = vmatpush1.msra.mxu0 %v1695
      %1741 = vmatprep.subr.mxu0 0.0
      %1742 = vmatpush2.msra.mxu0 0.0
      %1743 = vmatprep.subr.mxu0 0.0
      %1744 = vmatpush2.msra.mxu0 0.0
      %1745 = vmatprep.subr.mxu0 0.0
      %1746 = vmatpush2.msra.mxu0 0.0
      %1747 = vmatprep.subr.mxu0 0.0
      %1748 = vmatpush2.msra.mxu0 0.0
      %1749 = vmatprep.subr.mxu0 0.0
      %1750 = vmatpush2.msra.mxu0 0.0
      %1751 = vmatprep.subr.mxu0 0.0
      %1752 = vmatpush2.msra.mxu0 0.0
      %1753 = vmatprep.subr.mxu0 0.0
      %1754 = vmatpush2.msra.mxu0 0.0
      %1755 = vmatprep.subr.mxu0 0.0
      %1756 = vmatpush2.msra.mxu0 0.0
      %1757 = vmatprep.subr.mxu0 0.0
      %1758 = vmatpush2.msra.mxu0 0.0
      %1759 = vmatprep.subr.mxu0 0.0
      %1760 = vmatpush2.msra.mxu0 0.0
      %1761 = vmatprep.subr.mxu0 0.0
      %1762 = vmatpush2.msra.mxu0 0.0
      %1763 = vmatprep.subr.mxu0 0.0
      %1764 = vmatpush2.msra.mxu0 0.0
      %1765 = vmatprep.subr.mxu0 0.0
      %1766 = vmatpush2.msra.mxu0 0.0
      %1767 = vmatprep.subr.mxu0 0.0
      %1768 = vmatpush2.msra.mxu0 0.0
      %1769 = vmatprep.subr.mxu0 0.0
      %1770 = vmatpush2.msra.mxu0 0.0
      %1771 = vmatprep.subr.mxu0 0.0
      %1772 = vmatpush2.msra.mxu0 0.0
      %1773 = vmatprep.mubr.f32.mxu0 0.0
      %1774 = vmatmul.mubr.f32.gmra.mxu0 %v1707
      %v1775 = vpop.f32.mrf.mxu0
      %v1776 = vadd.f32 %v1704, %v1775
      %v1777 = vpop.f32.mrf.mxu0
      %1778 = vdwg.mxu0
      %v1779 = vmax.f32 %v1776, 0.0
      %v1780 = vld [vmem:[%s7] sm:$0xff]
      %v1781 = vld [vmem:[%s7 + $0x8] sm:$0xff]
      %v1782 = vld [vmem:[%s7 + $0x10] sm:$0xff]
      %v1783 = vld [vmem:[%s7 + $0x18] sm:$0xff]
      %v1784 = vld [vmem:[%s7 + $0x20] sm:$0xff]
      %v1785 = vld [vmem:[%s7 + $0x28] sm:$0xff]
      %v1786 = vld [vmem:[%s7 + $0x30] sm:$0xff]
      %v1787 = vld [vmem:[%s7 + $0x38] sm:$0xff]
      %v1788 = vld [vmem:[%s8] sm:$0x1]
      %v1790 = vlaneseq
      %v1791 = vshrl.u32 %v1790, 7
      %v1792 = vsub.s32 0, %v1791
      %v1793 = vrot.slane %v1788, %v1792
      %vm1795 = vcmask 523264
      %v1797 = vsel %vm1795, %v1779, 0
      %1799 = vmatprep.subr.mxu0 0.0
      %1800 = vmatpush1.msra.mxu0 0.0
      %1801 = vmatprep.subr.mxu0 0.0
      %1802 = vmatpush1.msra.mxu0 0.0
      %1803 = vmatprep.subr.mxu0 0.0
      %1804 = vmatpush1.msra.mxu0 0.0
      %1805 = vmatprep.subr.mxu0 0.0
      %1806 = vmatpush1.msra.mxu0 0.0
      %1807 = vmatprep.subr.mxu0 0.0
      %1808 = vmatpush1.msra.mxu0 0.0
      %1809 = vmatprep.subr.mxu0 0.0
      %1810 = vmatpush1.msra.mxu0 0.0
      %1811 = vmatprep.subr.mxu0 0.0
      %1812 = vmatpush1.msra.mxu0 0.0
      %1813 = vmatprep.subr.mxu0 0.0
      %1814 = vmatpush1.msra.mxu0 0.0
      %1815 = vmatprep.subr.mxu0 0.0
      %1816 = vmatpush1.msra.mxu0 %v1787
      %1817 = vmatprep.subr.mxu0 0.0
      %1818 = vmatpush1.msra.mxu0 %v1786
      %1819 = vmatprep.subr.mxu0 0.0
      %1820 = vmatpush1.msra.mxu0 %v1785
      %1821 = vmatprep.subr.mxu0 0.0
      %1822 = vmatpush1.msra.mxu0 %v1784
      %1823 = vmatprep.subr.mxu0 0.0
      %1824 = vmatpush1.msra.mxu0 %v1783
      %1825 = vmatprep.subr.mxu0 0.0
      %1826 = vmatpush1.msra.mxu0 %v1782
      %1827 = vmatprep.subr.mxu0 0.0
      %1828 = vmatpush1.msra.mxu0 %v1781
      %1829 = vmatprep.subr.mxu0 0.0
      %1830 = vmatpush1.msra.mxu0 %v1780
      %1831 = vmatprep.subr.mxu0 0.0
      %1832 = vmatpush2.msra.mxu0 0.0
      %1833 = vmatprep.subr.mxu0 0.0
      %1834 = vmatpush2.msra.mxu0 0.0
      %1835 = vmatprep.subr.mxu0 0.0
      %1836 = vmatpush2.msra.mxu0 0.0
      %1837 = vmatprep.subr.mxu0 0.0
      %1838 = vmatpush2.msra.mxu0 0.0
      %1839 = vmatprep.subr.mxu0 0.0
      %1840 = vmatpush2.msra.mxu0 0.0
      %1841 = vmatprep.subr.mxu0 0.0
      %1842 = vmatpush2.msra.mxu0 0.0
      %1843 = vmatprep.subr.mxu0 0.0
      %1844 = vmatpush2.msra.mxu0 0.0
      %1845 = vmatprep.subr.mxu0 0.0
      %1846 = vmatpush2.msra.mxu0 0.0
      %1847 = vmatprep.subr.mxu0 0.0
      %1848 = vmatpush2.msra.mxu0 0.0
      %1849 = vmatprep.subr.mxu0 0.0
      %1850 = vmatpush2.msra.mxu0 0.0
      %1851 = vmatprep.subr.mxu0 0.0
      %1852 = vmatpush2.msra.mxu0 0.0
      %1853 = vmatprep.subr.mxu0 0.0
      %1854 = vmatpush2.msra.mxu0 0.0
      %1855 = vmatprep.subr.mxu0 0.0
      %1856 = vmatpush2.msra.mxu0 0.0
      %1857 = vmatprep.subr.mxu0 0.0
      %1858 = vmatpush2.msra.mxu0 0.0
      %1859 = vmatprep.subr.mxu0 0.0
      %1860 = vmatpush2.msra.mxu0 0.0
      %1861 = vmatprep.subr.mxu0 0.0
      %1862 = vmatpush2.msra.mxu0 0.0
      %1863 = vmatprep.mubr.f32.mxu0 0.0
      %1864 = vmatmul.mubr.f32.gmra.mxu0 %v1797
      %v1865 = vpop.f32.mrf.mxu0
      %v1866 = vadd.f32 %v1793, %v1865
      %v1867 = vpop.f32.mrf.mxu0
      %1868 = vdwg.mxu0
      %v1869 = vadd.f32 %v1866, %v1694
      %v1870 = vld [vmem:[%s9] sm:$0x1]
      %v1871 = vld [vmem:[%s10] sm:$0x1]
      %v1872 = vsel %vm387, %v1869, 0.0
      %1873 = vadd.xlane.f32.xlu0 %v1872
      %v1874 = vpop.xlane.xlu0 %1873
      %v1875 = vmul.f32 %v1874, %v1670
      %v1876 = vsub.f32 %v1869, %v1875
      %v1877 = vmul.f32 %v1876, %v1876
      %v1878 = vsel %vm387, %v1877, 0.0
      %1879 = vadd.xlane.f32.xlu0 %v1878
      %v1880 = vpop.xlane.xlu0 %1879
      %v1881 = vmul.f32 %v1880, %v1670
      %v1882 = vadd.f32 %v1881, 1e-06
      %v1883 = vrsqrt.pop %v1882
      %v1884 = vmul.f32 %v1876, %v1883
      %v1886 = vlaneseq
      %v1887 = vshrl.u32 %v1886, 7
      %v1888 = vsub.s32 0, %v1887
      %v1889 = vrot.slane %v1870, %v1888
      %v1891 = vmul.f32 %v1884, %v1889
      %v1893 = vlaneseq
      %v1894 = vshrl.u32 %v1893, 7
      %v1895 = vsub.s32 0, %v1894
      %v1896 = vrot.slane %v1871, %v1895
      %v1898 = vadd.f32 %v1891, %v1896
      %1899 = vst.msk [vmem:[%s381] sm:$0xff] %vm387, %v1898
      %p1900 = scmp.lt.s32.totalorder %s22, 1
      %s1901 = scalar_select %p1900, %s22, 1
      %s1902 = smul.addr %s1901, 8
      %s1903 = scalar_lea.vmem %s11, %s1902
      // Predicated region
      $region65: #{forward.4} parent=63 // pred_check
        %p1904 = pneg %p276
      $region66: #{forward.4} parent=63 // pred_check_branch
        %1906 = sbr.rel (%p1904) target = $region68
      $region67: #{forward.4} parent=63 // pred_region
        _
      $region68: #{forward.4} parent=63 // pred_fallthru
        _
    $region64: #{forward.4} parent=5 // pred_fallthru
      _
    %p1907 = scmp.le.s32.totalorder 2, %s17
    // Predicated region
    $region69: #{forward.4} parent=5 // pred_check
      %p1908 = pneg %p1907
    $region70: #{forward.4} parent=5 // pred_check_branch
      %1910 = sbr.rel (%p1908) target = $region72
    $region71: #{forward.4} parent=5 // pred_region
      %s1911 = ssub.s32 %s17, 2
      // Predicated region
      $region73: #{forward.4} parent=71 // pred_check
        %p1912 = pneg %p282
      $region74: #{forward.4} parent=71 // pred_check_branch
        %1914 = sbr.rel (%p1912) target = $region76
      $region75: #{forward.4} parent=71 // pred_region
        %p1915 = scmp.lt.s32.totalorder %s23, 1
        %s1916 = scalar_select %p1915, %s23, 1
        %s1917 = smul.addr %s1916, 8
        %s1918 = scalar_lea.vmem %s11, %s1917
      $region76: #{forward.4} parent=71 // pred_fallthru
        _
    $region72: #{forward.4} parent=5 // pred_fallthru
      _
  $region6: #{forward.4} parent=0 // loop_footer
    %s21 = sadd.s32 1, %s17
  $region7: #{forward.4} parent=0 // loop_footer_branch
    %16 = sbr.rel target = $region3
  $region8: #{forward.4} parent=0 // loop_exit
    _

// kernel: forward.5
$region0: #{forward.5}
  #allocation0 [shape = 'u32[]', space=smem, size = 0x4, offset = 0x4, fixed_abs, tag = 'smem constant byte address 0x4 - core index']
  #allocation1 [shape = 'u32[144,128]{1,0:T(1,128)}', space=vmem, size = 0x12000, scoped, tag = 'internal scratch']
  %s0 = inlined_call_operand.hbm [shape: f32[2,8,32], index: 0, kind: input, shape index: {}, may-alias: {0,11}]
  %s1 = inlined_call_operand.vmem [shape: f32[4,32,24], index: 1, kind: input, shape index: {}]
  %s2 = inlined_call_operand.vmem [shape: f32[4,8,32], index: 2, kind: input, shape index: {}]
  %s3 = inlined_call_operand.vmem [shape: f32[1,32], index: 3, kind: input, shape index: {}]
  %s4 = inlined_call_operand.vmem [shape: f32[1,32], index: 4, kind: input, shape index: {}]
  %s5 = inlined_call_operand.vmem [shape: f32[32,64], index: 5, kind: input, shape index: {}]
  %s6 = inlined_call_operand.vmem [shape: f32[1,64], index: 6, kind: input, shape index: {}]
  %s7 = inlined_call_operand.vmem [shape: f32[64,32], index: 7, kind: input, shape index: {}]
  %s8 = inlined_call_operand.vmem [shape: f32[1,32], index: 8, kind: input, shape index: {}]
  %s9 = inlined_call_operand.vmem [shape: f32[1,32], index: 9, kind: input, shape index: {}]
  %s10 = inlined_call_operand.vmem [shape: f32[1,32], index: 10, kind: input, shape index: {}]
  %s11 = inlined_call_operand.hbm [shape: f32[2,8,32], index: 11, kind: output, shape index: {}, may-alias: {0,11}]
  %s12 = sld [smem:[#allocation0]]
  $region81: #{forward.5} parent=0
    _
  %s14 = ssub.s32 1, %s12
  %s15 = scalar_select 0, %s14, %s12
  $region1: #{forward.5} parent=0
    #allocation2 [shape = 'u8[8192]{0}', space=vmem, size = 0x2000, scoped, tag = 'input window, operand 0']
    #allocation3 [shape = 's32[2]{0}', space=sflag, size = 0x8, scoped, tag = 'scoped memory for forward.5']
    #allocation4 [shape = 's32[2]{0}', space=sflag, size = 0x8, scoped, tag = 'scoped memory for forward.5']
    #allocation5 [shape = 'u8[8192]{0}', space=vmem, size = 0x2000, scoped, tag = 'output window, operand 0']
    %16 = vsyncpa [#allocation3], 0
    %s17 = scalar_lea.sflag [#allocation3], 1
    %18 = vsyncpa %s17, 0
    %19 = vsyncpa [#allocation4], 0
    %s20 = scalar_lea.sflag [#allocation4], 1
    %21 = vsyncpa %s20, 0
    loop: start=0, step=1, limit=4
    $region2: #{forward.5} parent=1 // loop_pre_header
      _
    $region3: #{forward.5} parent=1 // loop_header
      %s23 = sphi 0, %s27
      %p24 = scmp.ge.s32.totalorder %s23, 4
      %s33 = sphi 0, %s35
      %s36 = sphi 0, %s33
      %s37 = sphi 0, %s36
      %s53 = sphi 0, %s37
      %s57 = sphi 0, %s57
      %s59 = sphi 0, %s57
      %s60 = sphi 0, %s59
      %s74 = sphi 0, %s60
      %s78 = sphi 0, %s78
      %s80 = sphi 0, %s78
      %s81 = sphi 0, %s80
      %s95 = sphi 0, %s81
      %s99 = sphi 0, %s99
      %s101 = sphi 0, %s99
      %s102 = sphi 0, %s101
      %s116 = sphi 0, %s102
      %s120 = sphi 0, %s120
      %s122 = sphi 0, %s120
      %s123 = sphi 0, %s122
      %s137 = sphi 0, %s123
      %s141 = sphi 0, %s141
      %s143 = sphi 0, %s141
      %s144 = sphi 0, %s143
      %s158 = sphi 0, %s144
      %s162 = sphi 0, %s162
      %s164 = sphi 0, %s162
      %s165 = sphi 0, %s164
      %s179 = sphi 0, %s165
      %s183 = sphi 0, %s183
      %s185 = sphi 0, %s183
      %s186 = sphi 0, %s185
      %s200 = sphi 0, %s186
      %s204 = sphi 0, %s204
      %s206 = sphi 0, %s204
      %s207 = sphi 0, %s206
      %s221 = sphi 0, %s207
      %s225 = sphi 0, %s225
      %s227 = sphi 0, %s225
      %s228 = sphi 0, %s227
      %s242 = sphi 0, %s228
      %s246 = sphi 0, %s246
      %s248 = sphi 0, %s246
      %s249 = sphi 0, %s248
      %s263 = sphi 0, %s249
      %s269 = sphi 0, %s271
      %s272 = sphi 0, %s269
      %s273 = sphi 0, %s272
      %s289 = sphi 0, %s273
    $region4: #{forward.5} parent=1 // loop_header_branch
      %26 = sbr.rel (%p24) target = $region8
    $region5: #{forward.5} parent=1 // loop_body
      %s28 = ssub.s32 %s23, 1
      %s29 = ssub.s32 %s23, 2
      %s30 = sadd.s32 %s23, 1
      %s31 = ssub.s32 %s23, %s30
      %p32 = scmp.eq.s32.totalorder %s31, 0
      %s34 = sadd.s32 %s33, 1
      %s35 = scalar_select %p32, %s33, %s34
      %p38 = pneg %p32
      %p39 = scmp.eq.s32.totalorder %s23, 1
      %p40 = por %p38, %p39
      %p41 = scmp.ne.s32.totalorder %s33, %s36
      %p42 = scmp.eq.s32.totalorder %s23, 0
      %p43 = por %p41, %p42
      %p44 = scmp.ne.s32.totalorder %s33, %s36
      %p45 = scmp.eq.s32.totalorder %s28, 1
      %p46 = por %p44, %p45
      %p47 = scmp.ne.s32.totalorder %s36, %s37
      %p48 = scmp.eq.s32.totalorder %s28, 0
      %p49 = por %p47, %p48
      %p50 = scmp.ne.s32.totalorder %s36, %s37
      %p51 = scmp.eq.s32.totalorder %s29, 1
      %p52 = por %p50, %p51
      %p54 = scmp.ne.s32.totalorder %s37, %s53
      %p55 = scmp.eq.s32.totalorder %s29, 0
      %p56 = por %p54, %p55
      %s58 = sadd.s32 %s57, 1
      %p61 = scmp.eq.s32.totalorder %s23, 1
      %p62 = scmp.ne.s32.totalorder %s57, %s59
      %p63 = scmp.eq.s32.totalorder %s23, 0
      %p64 = por %p62, %p63
      %p65 = scmp.ne.s32.totalorder %s57, %s59
      %p66 = scmp.eq.s32.totalorder %s28, 1
      %p67 = por %p65, %p66
      %p68 = scmp.ne.s32.totalorder %s59, %s60
      %p69 = scmp.eq.s32.totalorder %s28, 0
      %p70 = por %p68, %p69
      %p71 = scmp.ne.s32.totalorder %s59, %s60
      %p72 = scmp.eq.s32.totalorder %s29, 1
      %p73 = por %p71, %p72
      %p75 = scmp.ne.s32.totalorder %s60, %s74
      %p76 = scmp.eq.s32.totalorder %s29, 0
      %p77 = por %p75, %p76
      %s79 = sadd.s32 %s78, 1
      %p82 = scmp.eq.s32.totalorder %s23, 1
      %p83 = scmp.ne.s32.totalorder %s78, %s80
      %p84 = scmp.eq.s32.totalorder %s23, 0
      %p85 = por %p83, %p84
      %p86 = scmp.ne.s32.totalorder %s78, %s80
      %p87 = scmp.eq.s32.totalorder %s28, 1
      %p88 = por %p86, %p87
      %p89 = scmp.ne.s32.totalorder %s80, %s81
      %p90 = scmp.eq.s32.totalorder %s28, 0
      %p91 = por %p89, %p90
      %p92 = scmp.ne.s32.totalorder %s80, %s81
      %p93 = scmp.eq.s32.totalorder %s29, 1
      %p94 = por %p92, %p93
      %p96 = scmp.ne.s32.totalorder %s81, %s95
      %p97 = scmp.eq.s32.totalorder %s29, 0
      %p98 = por %p96, %p97
      %s100 = sadd.s32 %s99, 1
      %p103 = scmp.eq.s32.totalorder %s23, 1
      %p104 = scmp.ne.s32.totalorder %s99, %s101
      %p105 = scmp.eq.s32.totalorder %s23, 0
      %p106 = por %p104, %p105
      %p107 = scmp.ne.s32.totalorder %s99, %s101
      %p108 = scmp.eq.s32.totalorder %s28, 1
      %p109 = por %p107, %p108
      %p110 = scmp.ne.s32.totalorder %s101, %s102
      %p111 = scmp.eq.s32.totalorder %s28, 0
      %p112 = por %p110, %p111
      %p113 = scmp.ne.s32.totalorder %s101, %s102
      %p114 = scmp.eq.s32.totalorder %s29, 1
      %p115 = por %p113, %p114
      %p117 = scmp.ne.s32.totalorder %s102, %s116
      %p118 = scmp.eq.s32.totalorder %s29, 0
      %p119 = por %p117, %p118
      %s121 = sadd.s32 %s120, 1
      %p124 = scmp.eq.s32.totalorder %s23, 1
      %p125 = scmp.ne.s32.totalorder %s120, %s122
      %p126 = scmp.eq.s32.totalorder %s23, 0
      %p127 = por %p125, %p126
      %p128 = scmp.ne.s32.totalorder %s120, %s122
      %p129 = scmp.eq.s32.totalorder %s28, 1
      %p130 = por %p128, %p129
      %p131 = scmp.ne.s32.totalorder %s122, %s123
      %p132 = scmp.eq.s32.totalorder %s28, 0
      %p133 = por %p131, %p132
      %p134 = scmp.ne.s32.totalorder %s122, %s123
      %p135 = scmp.eq.s32.totalorder %s29, 1
      %p136 = por %p134, %p135
      %p138 = scmp.ne.s32.totalorder %s123, %s137
      %p139 = scmp.eq.s32.totalorder %s29, 0
      %p140 = por %p138, %p139
      %s142 = sadd.s32 %s141, 1
      %p145 = scmp.eq.s32.totalorder %s23, 1
      %p146 = scmp.ne.s32.totalorder %s141, %s143
      %p147 = scmp.eq.s32.totalorder %s23, 0
      %p148 = por %p146, %p147
      %p149 = scmp.ne.s32.totalorder %s141, %s143
      %p150 = scmp.eq.s32.totalorder %s28, 1
      %p151 = por %p149, %p150
      %p152 = scmp.ne.s32.totalorder %s143, %s144
      %p153 = scmp.eq.s32.totalorder %s28, 0
      %p154 = por %p152, %p153
      %p155 = scmp.ne.s32.totalorder %s143, %s144
      %p156 = scmp.eq.s32.totalorder %s29, 1
      %p157 = por %p155, %p156
      %p159 = scmp.ne.s32.totalorder %s144, %s158
      %p160 = scmp.eq.s32.totalorder %s29, 0
      %p161 = por %p159, %p160
      %s163 = sadd.s32 %s162, 1
      %p166 = scmp.eq.s32.totalorder %s23, 1
      %p167 = scmp.ne.s32.totalorder %s162, %s164
      %p168 = scmp.eq.s32.totalorder %s23, 0
      %p169 = por %p167, %p168
      %p170 = scmp.ne.s32.totalorder %s162, %s164
      %p171 = scmp.eq.s32.totalorder %s28, 1
      %p172 = por %p170, %p171
      %p173 = scmp.ne.s32.totalorder %s164, %s165
      %p174 = scmp.eq.s32.totalorder %s28, 0
      %p175 = por %p173, %p174
      %p176 = scmp.ne.s32.totalorder %s164, %s165
      %p177 = scmp.eq.s32.totalorder %s29, 1
      %p178 = por %p176, %p177
      %p180 = scmp.ne.s32.totalorder %s165, %s179
      %p181 = scmp.eq.s32.totalorder %s29, 0
      %p182 = por %p180, %p181
      %s184 = sadd.s32 %s183, 1
      %p187 = scmp.eq.s32.totalorder %s23, 1
      %p188 = scmp.ne.s32.totalorder %s183, %s185
      %p189 = scmp.eq.s32.totalorder %s23, 0
      %p190 = por %p188, %p189
      %p191 = scmp.ne.s32.totalorder %s183, %s185
      %p192 = scmp.eq.s32.totalorder %s28, 1
      %p193 = por %p191, %p192
      %p194 = scmp.ne.s32.totalorder %s185, %s186
      %p195 = scmp.eq.s32.totalorder %s28, 0
      %p196 = por %p194, %p195
      %p197 = scmp.ne.s32.totalorder %s185, %s186
      %p198 = scmp.eq.s32.totalorder %s29, 1
      %p199 = por %p197, %p198
      %p201 = scmp.ne.s32.totalorder %s186, %s200
      %p202 = scmp.eq.s32.totalorder %s29, 0
      %p203 = por %p201, %p202
      %s205 = sadd.s32 %s204, 1
      %p208 = scmp.eq.s32.totalorder %s23, 1
      %p209 = scmp.ne.s32.totalorder %s204, %s206
      %p210 = scmp.eq.s32.totalorder %s23, 0
      %p211 = por %p209, %p210
      %p212 = scmp.ne.s32.totalorder %s204, %s206
      %p213 = scmp.eq.s32.totalorder %s28, 1
      %p214 = por %p212, %p213
      %p215 = scmp.ne.s32.totalorder %s206, %s207
      %p216 = scmp.eq.s32.totalorder %s28, 0
      %p217 = por %p215, %p216
      %p218 = scmp.ne.s32.totalorder %s206, %s207
      %p219 = scmp.eq.s32.totalorder %s29, 1
      %p220 = por %p218, %p219
      %p222 = scmp.ne.s32.totalorder %s207, %s221
      %p223 = scmp.eq.s32.totalorder %s29, 0
      %p224 = por %p222, %p223
      %s226 = sadd.s32 %s225, 1
      %p229 = scmp.eq.s32.totalorder %s23, 1
      %p230 = scmp.ne.s32.totalorder %s225, %s227
      %p231 = scmp.eq.s32.totalorder %s23, 0
      %p232 = por %p230, %p231
      %p233 = scmp.ne.s32.totalorder %s225, %s227
      %p234 = scmp.eq.s32.totalorder %s28, 1
      %p235 = por %p233, %p234
      %p236 = scmp.ne.s32.totalorder %s227, %s228
      %p237 = scmp.eq.s32.totalorder %s28, 0
      %p238 = por %p236, %p237
      %p239 = scmp.ne.s32.totalorder %s227, %s228
      %p240 = scmp.eq.s32.totalorder %s29, 1
      %p241 = por %p239, %p240
      %p243 = scmp.ne.s32.totalorder %s228, %s242
      %p244 = scmp.eq.s32.totalorder %s29, 0
      %p245 = por %p243, %p244
      %s247 = sadd.s32 %s246, 1
      %p250 = scmp.eq.s32.totalorder %s23, 1
      %p251 = scmp.ne.s32.totalorder %s246, %s248
      %p252 = scmp.eq.s32.totalorder %s23, 0
      %p253 = por %p251, %p252
      %p254 = scmp.ne.s32.totalorder %s246, %s248
      %p255 = scmp.eq.s32.totalorder %s28, 1
      %p256 = por %p254, %p255
      %p257 = scmp.ne.s32.totalorder %s248, %s249
      %p258 = scmp.eq.s32.totalorder %s28, 0
      %p259 = por %p257, %p258
      %p260 = scmp.ne.s32.totalorder %s248, %s249
      %p261 = scmp.eq.s32.totalorder %s29, 1
      %p262 = por %p260, %p261
      %p264 = scmp.ne.s32.totalorder %s249, %s263
      %p265 = scmp.eq.s32.totalorder %s29, 0
      %p266 = por %p264, %p265
      %s267 = ssub.s32 %s23, %s30
      %p268 = scmp.eq.s32.totalorder %s267, 0
      %s270 = sadd.s32 %s269, 1
      %s271 = scalar_select %p268, %s269, %s270
      %p274 = pneg %p268
      %p275 = scmp.eq.s32.totalorder %s23, 1
      %p276 = por %p274, %p275
      %p277 = scmp.ne.s32.totalorder %s269, %s272
      %p278 = scmp.eq.s32.totalorder %s23, 0
      %p279 = por %p277, %p278
      %p280 = scmp.ne.s32.totalorder %s269, %s272
      %p281 = scmp.eq.s32.totalorder %s28, 1
      %p282 = por %p280, %p281
      %p283 = scmp.ne.s32.totalorder %s272, %s273
      %p284 = scmp.eq.s32.totalorder %s28, 0
      %p285 = por %p283, %p284
      %p286 = scmp.ne.s32.totalorder %s272, %s273
      %p287 = scmp.eq.s32.totalorder %s29, 1
      %p288 = por %p286, %p287
      %p290 = scmp.ne.s32.totalorder %s273, %s289
      %p291 = scmp.eq.s32.totalorder %s29, 0
      %p292 = por %p290, %p291
      %p293 = scmp.le.s32.totalorder 1, %s23
      %p294 = scmp.lt.s32.totalorder %s23, 3
      %p295 = pnand %p293, %p294
      %p296 = pneg %p295
      // Predicated region
      $region9: #{forward.5} parent=5 // pred_check
        _
      $region10: #{forward.5} parent=5 // pred_check_branch
        %298 = sbr.rel (%p295) target = $region12
      $region11: #{forward.5} parent=5 // pred_region
        %s299 = ssub.s32 %s23, 1
        // Predicated region
        $region13: #{forward.5} parent=11 // pred_check
          %p300 = pneg %p70
        $region14: #{forward.5} parent=11 // pred_check_branch
          %302 = sbr.rel (%p300) target = $region16
        $region15: #{forward.5} parent=11 // pred_region
          _
        $region16: #{forward.5} parent=11 // pred_fallthru
          _
        // Predicated region
        $region17: #{forward.5} parent=11 // pred_check
          %p303 = pneg %p91
        $region18: #{forward.5} parent=11 // pred_check_branch
          %305 = sbr.rel (%p303) target = $region20
        $region19: #{forward.5} parent=11 // pred_region
          _
        $region20: #{forward.5} parent=11 // pred_fallthru
          _
        // Predicated region
        $region21: #{forward.5} parent=11 // pred_check
          %p306 = pneg %p112
        $region22: #{forward.5} parent=11 // pred_check_branch
          %308 = sbr.rel (%p306) target = $region24
        $region23: #{forward.5} parent=11 // pred_region
          _
        $region24: #{forward.5} parent=11 // pred_fallthru
          _
        // Predicated region
        $region25: #{forward.5} parent=11 // pred_check
          %p309 = pneg %p133
        $region26: #{forward.5} parent=11 // pred_check_branch
          %311 = sbr.rel (%p309) target = $region28
        $region27: #{forward.5} parent=11 // pred_region
          _
        $region28: #{forward.5} parent=11 // pred_fallthru
          _
        // Predicated region
        $region29: #{forward.5} parent=11 // pred_check
          %p312 = pneg %p154
        $region30: #{forward.5} parent=11 // pred_check_branch
          %314 = sbr.rel (%p312) target = $region32
        $region31: #{forward.5} parent=11 // pred_region
          _
        $region32: #{forward.5} parent=11 // pred_fallthru
          _
        // Predicated region
        $region33: #{forward.5} parent=11 // pred_check
          %p315 = pneg %p175
        $region34: #{forward.5} parent=11 // pred_check_branch
          %317 = sbr.rel (%p315) target = $region36
        $region35: #{forward.5} parent=11 // pred_region
          _
        $region36: #{forward.5} parent=11 // pred_fallthru
          _
        // Predicated region
        $region37: #{forward.5} parent=11 // pred_check
          %p318 = pneg %p196
        $region38: #{forward.5} parent=11 // pred_check_branch
          %320 = sbr.rel (%p318) target = $region40
        $region39: #{forward.5} parent=11 // pred_region
          _
        $region40: #{forward.5} parent=11 // pred_fallthru
          _
        // Predicated region
        $region41: #{forward.5} parent=11 // pred_check
          %p321 = pneg %p217
        $region42: #{forward.5} parent=11 // pred_check_branch
          %323 = sbr.rel (%p321) target = $region44
        $region43: #{forward.5} parent=11 // pred_region
          _
        $region44: #{forward.5} parent=11 // pred_fallthru
          _
        // Predicated region
        $region45: #{forward.5} parent=11 // pred_check
          %p324 = pneg %p238
        $region46: #{forward.5} parent=11 // pred_check_branch
          %326 = sbr.rel (%p324) target = $region48
        $region47: #{forward.5} parent=11 // pred_region
          _
        $region48: #{forward.5} parent=11 // pred_fallthru
          _
        // Predicated region
        $region49: #{forward.5} parent=11 // pred_check
          %p327 = pneg %p259
        $region50: #{forward.5} parent=11 // pred_check_branch
          %329 = sbr.rel (%p327) target = $region52
        $region51: #{forward.5} parent=11 // pred_region
          _
        $region52: #{forward.5} parent=11 // pred_fallthru
          _
      $region12: #{forward.5} parent=5 // pred_fallthru
        _
      %p330 = scmp.lt.s32.totalorder %s23, 2
      // Predicated region
      $region53: #{forward.5} parent=5 // pred_check
        %p331 = pneg %p330
      $region54: #{forward.5} parent=5 // pred_check_branch
        %333 = sbr.rel (%p331) target = $region56
      $region55: #{forward.5} parent=5 // pred_region
        // Predicated region
        $region57: #{forward.5} parent=55 // pred_check
          %p334 = pneg %p43
        $region58: #{forward.5} parent=55 // pred_check_branch
          %336 = sbr.rel (%p334) target = $region60
        $region59: #{forward.5} parent=55 // pred_region
          %s337 = sand.u32 %s33, 1
          %s338 = scalar_lea.sflag [#allocation3], %s337
          %s339 = sand.u32 %s33, 1
          %s340 = smul.addr %s339, 8
          %s341 = scalar_lea.vmem [#allocation2], %s340
          %s343 = ssub.s32 128, 128
          %344 = vsyncadd %s338, %s343
          %s345 = smul.addr %s23, 128
          %s346 = scalar_lea.hbm %s0, %s345
          %s348 = sshll.u32 %s341, 4
          %s349 = int_to_ptr.vmem [resolvable:$true] %s348
          %351 = dma.hbm_to_vmem [thread:$0]  %s346, 128, %s349, %s338
        $region60: #{forward.5} parent=55 // pred_fallthru
          _
      $region56: #{forward.5} parent=5 // pred_fallthru
        _
      %p352 = scmp.le.s32.totalorder 1, %s23
      %p353 = scmp.lt.s32.totalorder %s23, 3
      %p354 = pnand %p352, %p353
      %p355 = pneg %p354
      // Predicated region
      $region61: #{forward.5} parent=5 // pred_check
        _
      $region62: #{forward.5} parent=5 // pred_check_branch
        %357 = sbr.rel (%p354) target = $region64
      $region63: #{forward.5} parent=5 // pred_region
        %s358 = ssub.s32 %s23, 1
        %s359 = sand.u32 %s36, 1
        %s360 = scalar_lea.sflag [#allocation3], %s359
        %s361 = sand.u32 %s36, 1
        %s362 = smul.addr %s361, 8
        %s363 = scalar_lea.vmem [#allocation2], %s362
        // Predicated region
        $region65: #{forward.5} parent=63 // pred_check
          %p364 = pneg %p49
        $region66: #{forward.5} parent=63 // pred_check_branch
          %366 = sbr.rel (%p364) target = $region68
        $region67: #{forward.5} parent=63 // pred_region
          %367 = dma.done %s360, 128
        $region68: #{forward.5} parent=63 // pred_fallthru
          _
        %s368 = sand.u32 %s36, 1
        %s369 = scalar_lea.sflag [#allocation3], %s368
        %s370 = sand.u32 %s36, 1
        %s371 = smul.addr %s370, 8
        %s372 = scalar_lea.vmem [#allocation2], %s371
        %p373 = pneg %p49
        %p374 = pneg %p46
        %p375 = pneg %p70
        %p376 = pneg %p67
        %p377 = pneg %p91
        %p378 = pneg %p88
        %p379 = pneg %p112
        %p380 = pneg %p109
        %p381 = pneg %p133
        %p382 = pneg %p130
        %p383 = pneg %p154
        %p384 = pneg %p151
        %p385 = pneg %p175
        %p386 = pneg %p172
        %p387 = pneg %p196
        %p388 = pneg %p193
        %p389 = pneg %p217
        %p390 = pneg %p214
        %p391 = pneg %p238
        %p392 = pneg %p235
        %p393 = pneg %p259
        %p394 = pneg %p256
        %p395 = pneg %p285
        %p396 = pneg %p282
        %s397 = sand.u32 %s272, 1
        %s398 = scalar_lea.sflag [#allocation4], %s397
        %s399 = sand.u32 %s272, 1
        %s400 = smul.addr %s399, 8
        %s401 = scalar_lea.vmem [#allocation5], %s400
        %v402 = vld [vmem:[%s363] sm:$0xff]
        %v403 = vld [vmem:[%s1] sm:$0xff]
        %v404 = vld [vmem:[%s1 + $0x8] sm:$0xff]
        %v405 = vld [vmem:[%s1 + $0x10] sm:$0xff]
        %v406 = vld [vmem:[%s1 + $0x18] sm:$0xff]
        %vm407 = vcmask 261120
        %v409 = vsel %vm407, %v402, 0
        %411 = vmatprep.subr.mxu0 0.0
        %412 = vmatpush1.msra.mxu0 0.0
        %413 = vmatprep.subr.mxu0 0.0
        %414 = vmatpush1.msra.mxu0 0.0
        %415 = vmatprep.subr.mxu0 0.0
        %416 = vmatpush1.msra.mxu0 0.0
        %417 = vmatprep.subr.mxu0 0.0
        %418 = vmatpush1.msra.mxu0 0.0
        %419 = vmatprep.subr.mxu0 0.0
        %420 = vmatpush1.msra.mxu0 0.0
        %421 = vmatprep.subr.mxu0 0.0
        %422 = vmatpush1.msra.mxu0 0.0
        %423 = vmatprep.subr.mxu0 0.0
        %424 = vmatpush1.msra.mxu0 0.0
        %425 = vmatprep.subr.mxu0 0.0
        %426 = vmatpush1.msra.mxu0 0.0
        %427 = vmatprep.subr.mxu0 0.0
        %428 = vmatpush1.msra.mxu0 0.0
        %429 = vmatprep.subr.mxu0 0.0
        %430 = vmatpush1.msra.mxu0 0.0
        %431 = vmatprep.subr.mxu0 0.0
        %432 = vmatpush1.msra.mxu0 0.0
        %433 = vmatprep.subr.mxu0 0.0
        %434 = vmatpush1.msra.mxu0 0.0
        %435 = vmatprep.subr.mxu0 0.0
        %436 = vmatpush1.msra.mxu0 %v406
        %437 = vmatprep.subr.mxu0 0.0
        %438 = vmatpush1.msra.mxu0 %v405
        %439 = vmatprep.subr.mxu0 0.0
        %440 = vmatpush1.msra.mxu0 %v404
        %441 = vmatprep.subr.mxu0 0.0
        %442 = vmatpush1.msra.mxu0 %v403
        %443 = vmatprep.subr.mxu0 0.0
        %444 = vmatpush2.msra.mxu0 0.0
        %445 = vmatprep.subr.mxu0 0.0
        %446 = vmatpush2.msra.mxu0 0.0
        %447 = vmatprep.subr.mxu0 0.0
        %448 = vmatpush2.msra.mxu0 0.0
        %449 = vmatprep.subr.mxu0 0.0
        %450 = vmatpush2.msra.mxu0 0.0
        %451 = vmatprep.subr.mxu0 0.0
        %452 = vmatpush2.msra.mxu0 0.0
        %453 = vmatprep.subr.mxu0 0.0
        %454 = vmatpush2.msra.mxu0 0.0
        %455 = vmatprep.subr.mxu0 0.0
        %456 = vmatpush2.msra.mxu0 0.0
        %457 = vmatprep.subr.mxu0 0.0
        %458 = vmatpush2.msra.mxu0 0.0
        %459 = vmatprep.subr.mxu0 0.0
        %460 = vmatpush2.msra.mxu0 0.0
        %461 = vmatprep.subr.mxu0 0.0
        %462 = vmatpush2.msra.mxu0 0.0
        %463 = vmatprep.subr.mxu0 0.0
        %464 = vmatpush2.msra.mxu0 0.0
        %465 = vmatprep.subr.mxu0 0.0
        %466 = vmatpush2.msra.mxu0 0.0
        %467 = vmatprep.subr.mxu0 0.0
        %468 = vmatpush2.msra.mxu0 0.0
        %469 = vmatprep.subr.mxu0 0.0
        %470 = vmatpush2.msra.mxu0 0.0
        %471 = vmatprep.subr.mxu0 0.0
        %472 = vmatpush2.msra.mxu0 0.0
        %473 = vmatprep.subr.mxu0 0.0
        %474 = vmatpush2.msra.mxu0 0.0
        %475 = vmatprep.mubr.f32.mxu0 0.0
        %476 = vmatmul.mubr.f32.gmra.mxu0 %v409
        %v477 = vpop.f32.mrf.mxu0
        %v478 = vadd.f32 0.0, %v477
        %v479 = vpop.f32.mrf.mxu0
        %480 = vdwg.mxu0
        %v481 = vmul.f32 %v478, 0.35355338
        %483 = vrot.lane.b32.xlu0 %v478, 120
        %v484 = vpop.permute.xlu0 %483
        %vm485 = vcmask 64512
        %v487 = vsel %vm485, %v481, 0
        %v489 = vsel %vm485, %v484, 0
        %491 = vmatprep.subr.mxu0 0.0
        %492 = vmatpush1.xpose.msra.mxu0 0.0
        %493 = vmatprep.subr.mxu0 0.0
        %494 = vmatpush1.xpose.msra.mxu0 0.0
        %495 = vmatprep.subr.mxu0 0.0
        %496 = vmatpush1.xpose.msra.mxu0 0.0
        %497 = vmatprep.subr.mxu0 0.0
        %498 = vmatpush1.xpose.msra.mxu0 0.0
        %499 = vmatprep.subr.mxu0 0.0
        %500 = vmatpush1.xpose.msra.mxu0 0.0
        %501 = vmatprep.subr.mxu0 0.0
        %502 = vmatpush1.xpose.msra.mxu0 0.0
        %503 = vmatprep.subr.mxu0 0.0
        %504 = vmatpush1.xpose.msra.mxu0 0.0
        %505 = vmatprep.subr.mxu0 0.0
        %506 = vmatpush1.xpose.msra.mxu0 0.0
        %507 = vmatprep.subr.mxu0 0.0
        %508 = vmatpush1.xpose.msra.mxu0 0.0
        %509 = vmatprep.subr.mxu0 0.0
        %510 = vmatpush1.xpose.msra.mxu0 0.0
        %511 = vmatprep.subr.mxu0 0.0
        %512 = vmatpush1.xpose.msra.mxu0 0.0
        %513 = vmatprep.subr.mxu0 0.0
        %514 = vmatpush1.xpose.msra.mxu0 0.0
        %515 = vmatprep.subr.mxu0 0.0
        %516 = vmatpush1.xpose.msra.mxu0 0.0
        %517 = vmatprep.subr.mxu0 0.0
        %518 = vmatpush1.xpose.msra.mxu0 0.0
        %519 = vmatprep.subr.mxu0 0.0
        %520 = vmatpush1.xpose.msra.mxu0 0.0
        %521 = vmatprep.subr.mxu0 0.0
        %522 = vmatpush1.xpose.msra.mxu0 %v489
        %523 = vmatprep.subr.mxu0 0.0
        %524 = vmatpush2.xpose.msra.mxu0 0.0
        %525 = vmatprep.subr.mxu0 0.0
        %526 = vmatpush2.xpose.msra.mxu0 0.0
        %527 = vmatprep.subr.mxu0 0.0
        %528 = vmatpush2.xpose.msra.mxu0 0.0
        %529 = vmatprep.subr.mxu0 0.0
        %530 = vmatpush2.xpose.msra.mxu0 0.0
        %531 = vmatprep.subr.mxu0 0.0
        %532 = vmatpush2.xpose.msra.mxu0 0.0
        %533 = vmatprep.subr.mxu0 0.0
        %534 = vmatpush2.xpose.msra.mxu0 0.0
        %535 = vmatprep.subr.mxu0 0.0
        %536 = vmatpush2.xpose.msra.mxu0 0.0
        %537 = vmatprep.subr.mxu0 0.0
        %538 = vmatpush2.xpose.msra.mxu0 0.0
        %539 = vmatprep.subr.mxu0 0.0
        %540 = vmatpush2.xpose.msra.mxu0 0.0
        %541 = vmatprep.subr.mxu0 0.0
        %542 = vmatpush2.xpose.msra.mxu0 0.0
        %543 = vmatprep.subr.mxu0 0.0
        %544 = vmatpush2.xpose.msra.mxu0 0.0
        %545 = vmatprep.subr.mxu0 0.0
        %546 = vmatpush2.xpose.msra.mxu0 0.0
        %547 = vmatprep.subr.mxu0 0.0
        %548 = vmatpush2.xpose.msra.mxu0 0.0
        %549 = vmatprep.subr.mxu0 0.0
        %550 = vmatpush2.xpose.msra.mxu0 0.0
        %551 = vmatprep.subr.mxu0 0.0
        %552 = vmatpush2.xpose.msra.mxu0 0.0
        %553 = vmatprep.subr.mxu0 0.0
        %554 = vmatpush2.xpose.msra.mxu0 0.0
        %555 = vmatprep.mubr.f32.mxu0 0.0
        %556 = vmatmul.mubr.f32.gmra.mxu0 %v487
        %v557 = vpop.f32.mrf.mxu0
        %v558 = vadd.f32 0.0, %v557
        %v559 = vpop.f32.mrf.mxu0
        %560 = vdwg.mxu0
        %v561 = vsel %vm485, %v558, -inf
        %562 = vmax.xlane.f32.xlu0 %v561
        %v563 = vpop.xlane.xlu0 %562
        %v564 = vsub.f32 %v558, %v563
        %v565 = vmul.f32 %v564, 1.442695
        %v566 = vpow.pop %v565
        %v567 = vsel %vm485, %v566, 0.0
        %568 = vadd.xlane.f32.xlu0 %v567
        %v569 = vpop.xlane.xlu0 %568
        %v570 = vrcp.pop %v569
        %v571 = vmul.f32 %v569, %v570
        %v572 = vsub.f32 2.0, %v571
        %v573 = vmul.f32 %v570, %v572
        %v574 = vmul.f32 %v566, %v573
        %575 = vrot.lane.b32.xlu0 %v478, 112
        %v576 = vpop.permute.xlu0 %575
        %v579 = vsel %vm485, %v574, 0
        %581 = vmatprep.subr.mxu0 0.0
        %582 = vmatpush1.msra.mxu0 0.0
        %583 = vmatprep.subr.mxu0 0.0
        %584 = vmatpush1.msra.mxu0 0.0
        %585 = vmatprep.subr.mxu0 0.0
        %586 = vmatpush1.msra.mxu0 0.0
        %587 = vmatprep.subr.mxu0 0.0
        %588 = vmatpush1.msra.mxu0 0.0
        %589 = vmatprep.subr.mxu0 0.0
        %590 = vmatpush1.msra.mxu0 0.0
        %591 = vmatprep.subr.mxu0 0.0
        %592 = vmatpush1.msra.mxu0 0.0
        %593 = vmatprep.subr.mxu0 0.0
        %594 = vmatpush1.msra.mxu0 0.0
        %595 = vmatprep.subr.mxu0 0.0
        %596 = vmatpush1.msra.mxu0 0.0
        %597 = vmatprep.subr.mxu0 0.0
        %598 = vmatpush1.msra.mxu0 0.0
        %599 = vmatprep.subr.mxu0 0.0
        %600 = vmatpush1.msra.mxu0 0.0
        %601 = vmatprep.subr.mxu0 0.0
        %602 = vmatpush1.msra.mxu0 0.0
        %603 = vmatprep.subr.mxu0 0.0
        %604 = vmatpush1.msra.mxu0 0.0
        %605 = vmatprep.subr.mxu0 0.0
        %606 = vmatpush1.msra.mxu0 0.0
        %607 = vmatprep.subr.mxu0 0.0
        %608 = vmatpush1.msra.mxu0 0.0
        %609 = vmatprep.subr.mxu0 0.0
        %610 = vmatpush1.msra.mxu0 0.0
        %611 = vmatprep.subr.mxu0 0.0
        %612 = vmatpush1.msra.mxu0 %v576
        %613 = vmatprep.subr.mxu0 0.0
        %614 = vmatpush2.msra.mxu0 0.0
        %615 = vmatprep.subr.mxu0 0.0
        %616 = vmatpush2.msra.mxu0 0.0
        %617 = vmatprep.subr.mxu0 0.0
        %618 = vmatpush2.msra.mxu0 0.0
        %619 = vmatprep.subr.mxu0 0.0
        %620 = vmatpush2.msra.mxu0 0.0
        %621 = vmatprep.subr.mxu0 0.0
        %622 = vmatpush2.msra.mxu0 0.0
        %623 = vmatprep.subr.mxu0 0.0
        %624 = vmatpush2.msra.mxu0 0.0
        %625 = vmatprep.subr.mxu0 0.0
        %626 = vmatpush2.msra.mxu0 0.0
        %627 = vmatprep.subr.mxu0 0.0
        %628 = vmatpush2.msra.mxu0 0.0
        %629 = vmatprep.subr.mxu0 0.0
        %630 = vmatpush2.msra.mxu0 0.0
        %631 = vmatprep.subr.mxu0 0.0
        %632 = vmatpush2.msra.mxu0 0.0
        %633 = vmatprep.subr.mxu0 0.0
        %634 = vmatpush2.msra.mxu0 0.0
        %635 = vmatprep.subr.mxu0 0.0
        %636 = vmatpush2.msra.mxu0 0.0
        %637 = vmatprep.subr.mxu0 0.0
        %638 = vmatpush2.msra.mxu0 0.0
        %639 = vmatprep.subr.mxu0 0.0
        %640 = vmatpush2.msra.mxu0 0.0
        %641 = vmatprep.subr.mxu0 0.0
        %642 = vmatpush2.msra.mxu0 0.0
        %643 = vmatprep.subr.mxu0 0.0
        %644 = vmatpush2.msra.mxu0 0.0
        %645 = vmatprep.mubr.f32.mxu0 0.0
        %646 = vmatmul.mubr.f32.gmra.mxu0 %v579
        %v647 = vpop.f32.mrf.mxu0
        %v648 = vadd.f32 0.0, %v647
        %v649 = vpop.f32.mrf.mxu0
        %650 = vdwg.mxu0
        %v651 = vld [vmem:[%s2] sm:$0xff]
        %s652 = scalar_lea.vmem %s1, 32
        %v653 = vld [vmem:[%s652] sm:$0xff]
        %v654 = vld [vmem:[%s652 + $0x8] sm:$0xff]
        %v655 = vld [vmem:[%s652 + $0x10] sm:$0xff]
        %v656 = vld [vmem:[%s652 + $0x18] sm:$0xff]
        %657 = vmatprep.subr.mxu0 0.0
        %658 = vmatpush1.msra.mxu0 0.0
        %659 = vmatprep.subr.mxu0 0.0
        %660 = vmatpush1.msra.mxu0 0.0
        %661 = vmatprep.subr.mxu0 0.0
        %662 = vmatpush1.msra.mxu0 0.0
        %663 = vmatprep.subr.mxu0 0.0
        %664 = vmatpush1.msra.mxu0 0.0
        %665 = vmatprep.subr.mxu0 0.0
        %666 = vmatpush1.msra.mxu0 0.0
        %667 = vmatprep.subr.mxu0 0.0
        %668 = vmatpush1.msra.mxu0 0.0
        %669 = vmatprep.subr.mxu0 0.0
        %670 = vmatpush1.msra.mxu0 0.0
        %671 = vmatprep.subr.mxu0 0.0
        %672 = vmatpush1.msra.mxu0 0.0
        %673 = vmatprep.subr.mxu0 0.0
        %674 = vmatpush1.msra.mxu0 0.0
        %675 = vmatprep.subr.mxu0 0.0
        %676 = vmatpush1.msra.mxu0 0.0
        %677 = vmatprep.subr.mxu0 0.0
        %678 = vmatpush1.msra.mxu0 0.0
        %679 = vmatprep.subr.mxu0 0.0
        %680 = vmatpush1.msra.mxu0 0.0
        %681 = vmatprep.subr.mxu0 0.0
        %682 = vmatpush1.msra.mxu0 %v656
        %683 = vmatprep.subr.mxu0 0.0
        %684 = vmatpush1.msra.mxu0 %v655
        %685 = vmatprep.subr.mxu0 0.0
        %686 = vmatpush1.msra.mxu0 %v654
        %687 = vmatprep.subr.mxu0 0.0
        %688 = vmatpush1.msra.mxu0 %v653
        %689 = vmatprep.subr.mxu0 0.0
        %690 = vmatpush2.msra.mxu0 0.0
        %691 = vmatprep.subr.mxu0 0.0
        %692 = vmatpush2.msra.mxu0 0.0
        %693 = vmatprep.subr.mxu0 0.0
        %694 = vmatpush2.msra.mxu0 0.0
        %695 = vmatprep.subr.mxu0 0.0
        %696 = vmatpush2.msra.mxu0 0.0
        %697 = vmatprep.subr.mxu0 0.0
        %698 = vmatpush2.msra.mxu0 0.0
        %699 = vmatprep.subr.mxu0 0.0
        %700 = vmatpush2.msra.mxu0 0.0
        %701 = vmatprep.subr.mxu0 0.0
        %702 = vmatpush2.msra.mxu0 0.0
        %703 = vmatprep.subr.mxu0 0.0
        %704 = vmatpush2.msra.mxu0 0.0
        %705 = vmatprep.subr.mxu0 0.0
        %706 = vmatpush2.msra.mxu0 0.0
        %707 = vmatprep.subr.mxu0 0.0
        %708 = vmatpush2.msra.mxu0 0.0
        %709 = vmatprep.subr.mxu0 0.0
        %710 = vmatpush2.msra.mxu0 0.0
        %711 = vmatprep.subr.mxu0 0.0
        %712 = vmatpush2.msra.mxu0 0.0
        %713 = vmatprep.subr.mxu0 0.0
        %714 = vmatpush2.msra.mxu0 0.0
        %715 = vmatprep.subr.mxu0 0.0
        %716 = vmatpush2.msra.mxu0 0.0
        %717 = vmatprep.subr.mxu0 0.0
        %718 = vmatpush2.msra.mxu0 0.0
        %719 = vmatprep.subr.mxu0 0.0
        %720 = vmatpush2.msra.mxu0 0.0
        %721 = vmatprep.mubr.f32.mxu0 0.0
        %722 = vmatmul.mubr.f32.gmra.mxu0 %v409
        %v723 = vpop.f32.mrf.mxu0
        %v724 = vadd.f32 0.0, %v723
        %v725 = vpop.f32.mrf.mxu0
        %726 = vdwg.mxu0
        %v727 = vmul.f32 %v724, 0.35355338
        %729 = vrot.lane.b32.xlu0 %v724, 120
        %v730 = vpop.permute.xlu0 %729
        %v732 = vsel %vm485, %v727, 0
        %v734 = vsel %vm485, %v730, 0
        %736 = vmatprep.subr.mxu0 0.0
        %737 = vmatpush1.xpose.msra.mxu0 0.0
        %738 = vmatprep.subr.mxu0 0.0
        %739 = vmatpush1.xpose.msra.mxu0 0.0
        %740 = vmatprep.subr.mxu0 0.0
        %741 = vmatpush1.xpose.msra.mxu0 0.0
        %742 = vmatprep.subr.mxu0 0.0
        %743 = vmatpush1.xpose.msra.mxu0 0.0
        %744 = vmatprep.subr.mxu0 0.0
        %745 = vmatpush1.xpose.msra.mxu0 0.0
        %746 = vmatprep.subr.mxu0 0.0
        %747 = vmatpush1.xpose.msra.mxu0 0.0
        %748 = vmatprep.subr.mxu0 0.0
        %749 = vmatpush1.xpose.msra.mxu0 0.0
        %750 = vmatprep.subr.mxu0 0.0
        %751 = vmatpush1.xpose.msra.mxu0 0.0
        %752 = vmatprep.subr.mxu0 0.0
        %753 = vmatpush1.xpose.msra.mxu0 0.0
        %754 = vmatprep.subr.mxu0 0.0
        %755 = vmatpush1.xpose.msra.mxu0 0.0
        %756 = vmatprep.subr.mxu0 0.0
        %757 = vmatpush1.xpose.msra.mxu0 0.0
        %758 = vmatprep.subr.mxu0 0.0
        %759 = vmatpush1.xpose.msra.mxu0 0.0
        %760 = vmatprep.subr.mxu0 0.0
        %761 = vmatpush1.xpose.msra.mxu0 0.0
        %762 = vmatprep.subr.mxu0 0.0
        %763 = vmatpush1.xpose.msra.mxu0 0.0
        %764 = vmatprep.subr.mxu0 0.0
        %765 = vmatpush1.xpose.msra.mxu0 0.0
        %766 = vmatprep.subr.mxu0 0.0
        %767 = vmatpush1.xpose.msra.mxu0 %v734
        %768 = vmatprep.subr.mxu0 0.0
        %769 = vmatpush2.xpose.msra.mxu0 0.0
        %770 = vmatprep.subr.mxu0 0.0
        %771 = vmatpush2.xpose.msra.mxu0 0.0
        %772 = vmatprep.subr.mxu0 0.0
        %773 = vmatpush2.xpose.msra.mxu0 0.0
        %774 = vmatprep.subr.mxu0 0.0
        %775 = vmatpush2.xpose.msra.mxu0 0.0
        %776 = vmatprep.subr.mxu0 0.0
        %777 = vmatpush2.xpose.msra.mxu0 0.0
        %778 = vmatprep.subr.mxu0 0.0
        %779 = vmatpush2.xpose.msra.mxu0 0.0
        %780 = vmatprep.subr.mxu0 0.0
        %781 = vmatpush2.xpose.msra.mxu0 0.0
        %782 = vmatprep.subr.mxu0 0.0
        %783 = vmatpush2.xpose.msra.mxu0 0.0
        %784 = vmatprep.subr.mxu0 0.0
        %785 = vmatpush2.xpose.msra.mxu0 0.0
        %786 = vmatprep.subr.mxu0 0.0
        %787 = vmatpush2.xpose.msra.mxu0 0.0
        %788 = vmatprep.subr.mxu0 0.0
        %789 = vmatpush2.xpose.msra.mxu0 0.0
        %790 = vmatprep.subr.mxu0 0.0
        %791 = vmatpush2.xpose.msra.mxu0 0.0
        %792 = vmatprep.subr.mxu0 0.0
        %793 = vmatpush2.xpose.msra.mxu0 0.0
        %794 = vmatprep.subr.mxu0 0.0
        %795 = vmatpush2.xpose.msra.mxu0 0.0
        %796 = vmatprep.subr.mxu0 0.0
        %797 = vmatpush2.xpose.msra.mxu0 0.0
        %798 = vmatprep.subr.mxu0 0.0
        %799 = vmatpush2.xpose.msra.mxu0 0.0
        %800 = vmatprep.mubr.f32.mxu0 0.0
        %801 = vmatmul.mubr.f32.gmra.mxu0 %v732
        %v802 = vpop.f32.mrf.mxu0
        %v803 = vadd.f32 0.0, %v802
        %v804 = vpop.f32.mrf.mxu0
        %805 = vdwg.mxu0
        %v806 = vsel %vm485, %v803, -inf
        %807 = vmax.xlane.f32.xlu0 %v806
        %v808 = vpop.xlane.xlu0 %807
        %v809 = vsub.f32 %v803, %v808
        %v810 = vmul.f32 %v809, 1.442695
        %v811 = vpow.pop %v810
        %v812 = vsel %vm485, %v811, 0.0
        %813 = vadd.xlane.f32.xlu0 %v812
        %v814 = vpop.xlane.xlu0 %813
        %v815 = vrcp.pop %v814
        %v816 = vmul.f32 %v814, %v815
        %v817 = vsub.f32 2.0, %v816
        %v818 = vmul.f32 %v815, %v817
        %v819 = vmul.f32 %v811, %v818
        %820 = vrot.lane.b32.xlu0 %v724, 112
        %v821 = vpop.permute.xlu0 %820
        %v824 = vsel %vm485, %v819, 0
        %826 = vmatprep.subr.mxu0 0.0
        %827 = vmatpush1.msra.mxu0 0.0
        %828 = vmatprep.subr.mxu0 0.0
        %829 = vmatpush1.msra.mxu0 0.0
        %830 = vmatprep.subr.mxu0 0.0
        %831 = vmatpush1.msra.mxu0 0.0
        %832 = vmatprep.subr.mxu0 0.0
        %833 = vmatpush1.msra.mxu0 0.0
        %834 = vmatprep.subr.mxu0 0.0
        %835 = vmatpush1.msra.mxu0 0.0
        %836 = vmatprep.subr.mxu0 0.0
        %837 = vmatpush1.msra.mxu0 0.0
        %838 = vmatprep.subr.mxu0 0.0
        %839 = vmatpush1.msra.mxu0 0.0
        %840 = vmatprep.subr.mxu0 0.0
        %841 = vmatpush1.msra.mxu0 0.0
        %842 = vmatprep.subr.mxu0 0.0
        %843 = vmatpush1.msra.mxu0 0.0
        %844 = vmatprep.subr.mxu0 0.0
        %845 = vmatpush1.msra.mxu0 0.0
        %846 = vmatprep.subr.mxu0 0.0
        %847 = vmatpush1.msra.mxu0 0.0
        %848 = vmatprep.subr.mxu0 0.0
        %849 = vmatpush1.msra.mxu0 0.0
        %850 = vmatprep.subr.mxu0 0.0
        %851 = vmatpush1.msra.mxu0 0.0
        %852 = vmatprep.subr.mxu0 0.0
        %853 = vmatpush1.msra.mxu0 0.0
        %854 = vmatprep.subr.mxu0 0.0
        %855 = vmatpush1.msra.mxu0 0.0
        %856 = vmatprep.subr.mxu0 0.0
        %857 = vmatpush1.msra.mxu0 %v821
        %858 = vmatprep.subr.mxu0 0.0
        %859 = vmatpush2.msra.mxu0 0.0
        %860 = vmatprep.subr.mxu0 0.0
        %861 = vmatpush2.msra.mxu0 0.0
        %862 = vmatprep.subr.mxu0 0.0
        %863 = vmatpush2.msra.mxu0 0.0
        %864 = vmatprep.subr.mxu0 0.0
        %865 = vmatpush2.msra.mxu0 0.0
        %866 = vmatprep.subr.mxu0 0.0
        %867 = vmatpush2.msra.mxu0 0.0
        %868 = vmatprep.subr.mxu0 0.0
        %869 = vmatpush2.msra.mxu0 0.0
        %870 = vmatprep.subr.mxu0 0.0
        %871 = vmatpush2.msra.mxu0 0.0
        %872 = vmatprep.subr.mxu0 0.0
        %873 = vmatpush2.msra.mxu0 0.0
        %874 = vmatprep.subr.mxu0 0.0
        %875 = vmatpush2.msra.mxu0 0.0
        %876 = vmatprep.subr.mxu0 0.0
        %877 = vmatpush2.msra.mxu0 0.0
        %878 = vmatprep.subr.mxu0 0.0
        %879 = vmatpush2.msra.mxu0 0.0
        %880 = vmatprep.subr.mxu0 0.0
        %881 = vmatpush2.msra.mxu0 0.0
        %882 = vmatprep.subr.mxu0 0.0
        %883 = vmatpush2.msra.mxu0 0.0
        %884 = vmatprep.subr.mxu0 0.0
        %885 = vmatpush2.msra.mxu0 0.0
        %886 = vmatprep.subr.mxu0 0.0
        %887 = vmatpush2.msra.mxu0 0.0
        %888 = vmatprep.subr.mxu0 0.0
        %889 = vmatpush2.msra.mxu0 0.0
        %890 = vmatprep.mubr.f32.mxu0 0.0
        %891 = vmatmul.mubr.f32.gmra.mxu0 %v824
        %v892 = vpop.f32.mrf.mxu0
        %v893 = vadd.f32 0.0, %v892
        %v894 = vpop.f32.mrf.mxu0
        %895 = vdwg.mxu0
        %s896 = scalar_lea.vmem %s2, 8
        %v897 = vld [vmem:[%s896] sm:$0xff]
        %v899 = vsel %vm485, %v893, 0
        %901 = vmatprep.subr.mxu0 0.0
        %902 = vmatpush1.msra.mxu0 0.0
        %903 = vmatprep.subr.mxu0 0.0
        %904 = vmatpush1.msra.mxu0 0.0
        %905 = vmatprep.subr.mxu0 0.0
        %906 = vmatpush1.msra.mxu0 0.0
        %907 = vmatprep.subr.mxu0 0.0
        %908 = vmatpush1.msra.mxu0 0.0
        %909 = vmatprep.subr.mxu0 0.0
        %910 = vmatpush1.msra.mxu0 0.0
        %911 = vmatprep.subr.mxu0 0.0
        %912 = vmatpush1.msra.mxu0 0.0
        %913 = vmatprep.subr.mxu0 0.0
        %914 = vmatpush1.msra.mxu0 0.0
        %915 = vmatprep.subr.mxu0 0.0
        %916 = vmatpush1.msra.mxu0 0.0
        %917 = vmatprep.subr.mxu0 0.0
        %918 = vmatpush1.msra.mxu0 0.0
        %919 = vmatprep.subr.mxu0 0.0
        %920 = vmatpush1.msra.mxu0 0.0
        %921 = vmatprep.subr.mxu0 0.0
        %922 = vmatpush1.msra.mxu0 0.0
        %923 = vmatprep.subr.mxu0 0.0
        %924 = vmatpush1.msra.mxu0 0.0
        %925 = vmatprep.subr.mxu0 0.0
        %926 = vmatpush1.msra.mxu0 0.0
        %927 = vmatprep.subr.mxu0 0.0
        %928 = vmatpush1.msra.mxu0 0.0
        %929 = vmatprep.subr.mxu0 0.0
        %930 = vmatpush1.msra.mxu0 0.0
        %931 = vmatprep.subr.mxu0 0.0
        %932 = vmatpush1.msra.mxu0 %v897
        %933 = vmatprep.subr.mxu0 0.0
        %934 = vmatpush2.msra.mxu0 0.0
        %935 = vmatprep.subr.mxu0 0.0
        %936 = vmatpush2.msra.mxu0 0.0
        %937 = vmatprep.subr.mxu0 0.0
        %938 = vmatpush2.msra.mxu0 0.0
        %939 = vmatprep.subr.mxu0 0.0
        %940 = vmatpush2.msra.mxu0 0.0
        %941 = vmatprep.subr.mxu0 0.0
        %942 = vmatpush2.msra.mxu0 0.0
        %943 = vmatprep.subr.mxu0 0.0
        %944 = vmatpush2.msra.mxu0 0.0
        %945 = vmatprep.subr.mxu0 0.0
        %946 = vmatpush2.msra.mxu0 0.0
        %947 = vmatprep.subr.mxu0 0.0
        %948 = vmatpush2.msra.mxu0 0.0
        %949 = vmatprep.subr.mxu0 0.0
        %950 = vmatpush2.msra.mxu0 0.0
        %951 = vmatprep.subr.mxu0 0.0
        %952 = vmatpush2.msra.mxu0 0.0
        %953 = vmatprep.subr.mxu0 0.0
        %954 = vmatpush2.msra.mxu0 0.0
        %955 = vmatprep.subr.mxu0 0.0
        %956 = vmatpush2.msra.mxu0 0.0
        %957 = vmatprep.subr.mxu0 0.0
        %958 = vmatpush2.msra.mxu0 0.0
        %959 = vmatprep.subr.mxu0 0.0
        %960 = vmatpush2.msra.mxu0 0.0
        %961 = vmatprep.subr.mxu0 0.0
        %962 = vmatpush2.msra.mxu0 0.0
        %963 = vmatprep.subr.mxu0 0.0
        %964 = vmatpush2.msra.mxu0 0.0
        %965 = vmatprep.mubr.f32.mxu0 0.0
        %966 = vmatmul.mubr.f32.gmra.mxu0 %v899
        %v967 = vpop.f32.mrf.mxu0
        %v968 = vadd.f32 0.0, %v967
        %v969 = vpop.f32.mrf.mxu0
        %970 = vdwg.mxu0
        %v972 = vsel %vm485, %v648, 0
        %974 = vmatprep.subr.mxu0 0.0
        %975 = vmatpush1.msra.mxu0 0.0
        %976 = vmatprep.subr.mxu0 0.0
        %977 = vmatpush1.msra.mxu0 0.0
        %978 = vmatprep.subr.mxu0 0.0
        %979 = vmatpush1.msra.mxu0 0.0
        %980 = vmatprep.subr.mxu0 0.0
        %981 = vmatpush1.msra.mxu0 0.0
        %982 = vmatprep.subr.mxu0 0.0
        %983 = vmatpush1.msra.mxu0 0.0
        %984 = vmatprep.subr.mxu0 0.0
        %985 = vmatpush1.msra.mxu0 0.0
        %986 = vmatprep.subr.mxu0 0.0
        %987 = vmatpush1.msra.mxu0 0.0
        %988 = vmatprep.subr.mxu0 0.0
        %989 = vmatpush1.msra.mxu0 0.0
        %990 = vmatprep.subr.mxu0 0.0
        %991 = vmatpush1.msra.mxu0 0.0
        %992 = vmatprep.subr.mxu0 0.0
        %993 = vmatpush1.msra.mxu0 0.0
        %994 = vmatprep.subr.mxu0 0.0
        %995 = vmatpush1.msra.mxu0 0.0
        %996 = vmatprep.subr.mxu0 0.0
        %997 = vmatpush1.msra.mxu0 0.0
        %998 = vmatprep.subr.mxu0 0.0
        %999 = vmatpush1.msra.mxu0 0.0
        %1000 = vmatprep.subr.mxu0 0.0
        %1001 = vmatpush1.msra.mxu0 0.0
        %1002 = vmatprep.subr.mxu0 0.0
        %1003 = vmatpush1.msra.mxu0 0.0
        %1004 = vmatprep.subr.mxu0 0.0
        %1005 = vmatpush1.msra.mxu0 %v651
        %1006 = vmatprep.subr.mxu0 0.0
        %1007 = vmatpush2.msra.mxu0 0.0
        %1008 = vmatprep.subr.mxu0 0.0
        %1009 = vmatpush2.msra.mxu0 0.0
        %1010 = vmatprep.subr.mxu0 0.0
        %1011 = vmatpush2.msra.mxu0 0.0
        %1012 = vmatprep.subr.mxu0 0.0
        %1013 = vmatpush2.msra.mxu0 0.0
        %1014 = vmatprep.subr.mxu0 0.0
        %1015 = vmatpush2.msra.mxu0 0.0
        %1016 = vmatprep.subr.mxu0 0.0
        %1017 = vmatpush2.msra.mxu0 0.0
        %1018 = vmatprep.subr.mxu0 0.0
        %1019 = vmatpush2.msra.mxu0 0.0
        %1020 = vmatprep.subr.mxu0 0.0
        %1021 = vmatpush2.msra.mxu0 0.0
        %1022 = vmatprep.subr.mxu0 0.0
        %1023 = vmatpush2.msra.mxu0 0.0
        %1024 = vmatprep.subr.mxu0 0.0
        %1025 = vmatpush2.msra.mxu0 0.0
        %1026 = vmatprep.subr.mxu0 0.0
        %1027 = vmatpush2.msra.mxu0 0.0
        %1028 = vmatprep.subr.mxu0 0.0
        %1029 = vmatpush2.msra.mxu0 0.0
        %1030 = vmatprep.subr.mxu0 0.0
        %1031 = vmatpush2.msra.mxu0 0.0
        %1032 = vmatprep.subr.mxu0 0.0
        %1033 = vmatpush2.msra.mxu0 0.0
        %1034 = vmatprep.subr.mxu0 0.0
        %1035 = vmatpush2.msra.mxu0 0.0
        %1036 = vmatprep.subr.mxu0 0.0
        %1037 = vmatpush2.msra.mxu0 0.0
        %1038 = vmatprep.mubr.f32.mxu0 0.0
        %1039 = vmatmul.mubr.f32.gmra.mxu0 %v972
        %v1040 = vpop.f32.mrf.mxu0
        %v1041 = vadd.f32 %v968, %v1040
        %v1042 = vpop.f32.mrf.mxu0
        %1043 = vdwg.mxu0
        %s1044 = scalar_lea.vmem %s1, 64
        %v1045 = vld [vmem:[%s1044] sm:$0xff]
        %v1046 = vld [vmem:[%s1044 + $0x8] sm:$0xff]
        %v1047 = vld [vmem:[%s1044 + $0x10] sm:$0xff]
        %v1048 = vld [vmem:[%s1044 + $0x18] sm:$0xff]
        %1049 = vmatprep.subr.mxu0 0.0
        %1050 = vmatpush1.msra.mxu0 0.0
        %1051 = vmatprep.subr.mxu0 0.0
        %1052 = vmatpush1.msra.mxu0 0.0
        %1053 = vmatprep.subr.mxu0 0.0
        %1054 = vmatpush1.msra.mxu0 0.0
        %1055 = vmatprep.subr.mxu0 0.0
        %1056 = vmatpush1.msra.mxu0 0.0
        %1057 = vmatprep.subr.mxu0 0.0
        %1058 = vmatpush1.msra.mxu0 0.0
        %1059 = vmatprep.subr.mxu0 0.0
        %1060 = vmatpush1.msra.mxu0 0.0
        %1061 = vmatprep.subr.mxu0 0.0
        %1062 = vmatpush1.msra.mxu0 0.0
        %1063 = vmatprep.subr.mxu0 0.0
        %1064 = vmatpush1.msra.mxu0 0.0
        %1065 = vmatprep.subr.mxu0 0.0
        %1066 = vmatpush1.msra.mxu0 0.0
        %1067 = vmatprep.subr.mxu0 0.0
        %1068 = vmatpush1.msra.mxu0 0.0
        %1069 = vmatprep.subr.mxu0 0.0
        %1070 = vmatpush1.msra.mxu0 0.0
        %1071 = vmatprep.subr.mxu0 0.0
        %1072 = vmatpush1.msra.mxu0 0.0
        %1073 = vmatprep.subr.mxu0 0.0
        %1074 = vmatpush1.msra.mxu0 %v1048
        %1075 = vmatprep.subr.mxu0 0.0
        %1076 = vmatpush1.msra.mxu0 %v1047
        %1077 = vmatprep.subr.mxu0 0.0
        %1078 = vmatpush1.msra.mxu0 %v1046
        %1079 = vmatprep.subr.mxu0 0.0
        %1080 = vmatpush1.msra.mxu0 %v1045
        %1081 = vmatprep.subr.mxu0 0.0
        %1082 = vmatpush2.msra.mxu0 0.0
        %1083 = vmatprep.subr.mxu0 0.0
        %1084 = vmatpush2.msra.mxu0 0.0
        %1085 = vmatprep.subr.mxu0 0.0
        %1086 = vmatpush2.msra.mxu0 0.0
        %1087 = vmatprep.subr.mxu0 0.0
        %1088 = vmatpush2.msra.mxu0 0.0
        %1089 = vmatprep.subr.mxu0 0.0
        %1090 = vmatpush2.msra.mxu0 0.0
        %1091 = vmatprep.subr.mxu0 0.0
        %1092 = vmatpush2.msra.mxu0 0.0
        %1093 = vmatprep.subr.mxu0 0.0
        %1094 = vmatpush2.msra.mxu0 0.0
        %1095 = vmatprep.subr.mxu0 0.0
        %1096 = vmatpush2.msra.mxu0 0.0
        %1097 = vmatprep.subr.mxu0 0.0
        %1098 = vmatpush2.msra.mxu0 0.0
        %1099 = vmatprep.subr.mxu0 0.0
        %1100 = vmatpush2.msra.mxu0 0.0
        %1101 = vmatprep.subr.mxu0 0.0
        %1102 = vmatpush2.msra.mxu0 0.0
        %1103 = vmatprep.subr.mxu0 0.0
        %1104 = vmatpush2.msra.mxu0 0.0
        %1105 = vmatprep.subr.mxu0 0.0
        %1106 = vmatpush2.msra.mxu0 0.0
        %1107 = vmatprep.subr.mxu0 0.0
        %1108 = vmatpush2.msra.mxu0 0.0
        %1109 = vmatprep.subr.mxu0 0.0
        %1110 = vmatpush2.msra.mxu0 0.0
        %1111 = vmatprep.subr.mxu0 0.0
        %1112 = vmatpush2.msra.mxu0 0.0
        %1113 = vmatprep.mubr.f32.mxu0 0.0
        %1114 = vmatmul.mubr.f32.gmra.mxu0 %v409
        %v1115 = vpop.f32.mrf.mxu0
        %v1116 = vadd.f32 0.0, %v1115
        %v1117 = vpop.f32.mrf.mxu0
        %1118 = vdwg.mxu0
        %v1119 = vmul.f32 %v1116, 0.35355338
        %1121 = vrot.lane.b32.xlu0 %v1116, 120
        %v1122 = vpop.permute.xlu0 %1121
        %v1124 = vsel %vm485, %v1119, 0
        %v1126 = vsel %vm485, %v1122, 0
        %1128 = vmatprep.subr.mxu0 0.0
        %1129 = vmatpush1.xpose.msra.mxu0 0.0
        %1130 = vmatprep.subr.mxu0 0.0
        %1131 = vmatpush1.xpose.msra.mxu0 0.0
        %1132 = vmatprep.subr.mxu0 0.0
        %1133 = vmatpush1.xpose.msra.mxu0 0.0
        %1134 = vmatprep.subr.mxu0 0.0
        %1135 = vmatpush1.xpose.msra.mxu0 0.0
        %1136 = vmatprep.subr.mxu0 0.0
        %1137 = vmatpush1.xpose.msra.mxu0 0.0
        %1138 = vmatprep.subr.mxu0 0.0
        %1139 = vmatpush1.xpose.msra.mxu0 0.0
        %1140 = vmatprep.subr.mxu0 0.0
        %1141 = vmatpush1.xpose.msra.mxu0 0.0
        %1142 = vmatprep.subr.mxu0 0.0
        %1143 = vmatpush1.xpose.msra.mxu0 0.0
        %1144 = vmatprep.subr.mxu0 0.0
        %1145 = vmatpush1.xpose.msra.mxu0 0.0
        %1146 = vmatprep.subr.mxu0 0.0
        %1147 = vmatpush1.xpose.msra.mxu0 0.0
        %1148 = vmatprep.subr.mxu0 0.0
        %1149 = vmatpush1.xpose.msra.mxu0 0.0
        %1150 = vmatprep.subr.mxu0 0.0
        %1151 = vmatpush1.xpose.msra.mxu0 0.0
        %1152 = vmatprep.subr.mxu0 0.0
        %1153 = vmatpush1.xpose.msra.mxu0 0.0
        %1154 = vmatprep.subr.mxu0 0.0
        %1155 = vmatpush1.xpose.msra.mxu0 0.0
        %1156 = vmatprep.subr.mxu0 0.0
        %1157 = vmatpush1.xpose.msra.mxu0 0.0
        %1158 = vmatprep.subr.mxu0 0.0
        %1159 = vmatpush1.xpose.msra.mxu0 %v1126
        %1160 = vmatprep.subr.mxu0 0.0
        %1161 = vmatpush2.xpose.msra.mxu0 0.0
        %1162 = vmatprep.subr.mxu0 0.0
        %1163 = vmatpush2.xpose.msra.mxu0 0.0
        %1164 = vmatprep.subr.mxu0 0.0
        %1165 = vmatpush2.xpose.msra.mxu0 0.0
        %1166 = vmatprep.subr.mxu0 0.0
        %1167 = vmatpush2.xpose.msra.mxu0 0.0
        %1168 = vmatprep.subr.mxu0 0.0
        %1169 = vmatpush2.xpose.msra.mxu0 0.0
        %1170 = vmatprep.subr.mxu0 0.0
        %1171 = vmatpush2.xpose.msra.mxu0 0.0
        %1172 = vmatprep.subr.mxu0 0.0
        %1173 = vmatpush2.xpose.msra.mxu0 0.0
        %1174 = vmatprep.subr.mxu0 0.0
        %1175 = vmatpush2.xpose.msra.mxu0 0.0
        %1176 = vmatprep.subr.mxu0 0.0
        %1177 = vmatpush2.xpose.msra.mxu0 0.0
        %1178 = vmatprep.subr.mxu0 0.0
        %1179 = vmatpush2.xpose.msra.mxu0 0.0
        %1180 = vmatprep.subr.mxu0 0.0
        %1181 = vmatpush2.xpose.msra.mxu0 0.0
        %1182 = vmatprep.subr.mxu0 0.0
        %1183 = vmatpush2.xpose.msra.mxu0 0.0
        %1184 = vmatprep.subr.mxu0 0.0
        %1185 = vmatpush2.xpose.msra.mxu0 0.0
        %1186 = vmatprep.subr.mxu0 0.0
        %1187 = vmatpush2.xpose.msra.mxu0 0.0
        %1188 = vmatprep.subr.mxu0 0.0
        %1189 = vmatpush2.xpose.msra.mxu0 0.0
        %1190 = vmatprep.subr.mxu0 0.0
        %1191 = vmatpush2.xpose.msra.mxu0 0.0
        %1192 = vmatprep.mubr.f32.mxu0 0.0
        %1193 = vmatmul.mubr.f32.gmra.mxu0 %v1124
        %v1194 = vpop.f32.mrf.mxu0
        %v1195 = vadd.f32 0.0, %v1194
        %v1196 = vpop.f32.mrf.mxu0
        %1197 = vdwg.mxu0
        %v1198 = vsel %vm485, %v1195, -inf
        %1199 = vmax.xlane.f32.xlu0 %v1198
        %v1200 = vpop.xlane.xlu0 %1199
        %v1201 = vsub.f32 %v1195, %v1200
        %v1202 = vmul.f32 %v1201, 1.442695
        %v1203 = vpow.pop %v1202
        %v1204 = vsel %vm485, %v1203, 0.0
        %1205 = vadd.xlane.f32.xlu0 %v1204
        %v1206 = vpop.xlane.xlu0 %1205
        %v1207 = vrcp.pop %v1206
        %v1208 = vmul.f32 %v1206, %v1207
        %v1209 = vsub.f32 2.0, %v1208
        %v1210 = vmul.f32 %v1207, %v1209
        %v1211 = vmul.f32 %v1203, %v1210
        %1212 = vrot.lane.b32.xlu0 %v1116, 112
        %v1213 = vpop.permute.xlu0 %1212
        %v1216 = vsel %vm485, %v1211, 0
        %1218 = vmatprep.subr.mxu0 0.0
        %1219 = vmatpush1.msra.mxu0 0.0
        %1220 = vmatprep.subr.mxu0 0.0
        %1221 = vmatpush1.msra.mxu0 0.0
        %1222 = vmatprep.subr.mxu0 0.0
        %1223 = vmatpush1.msra.mxu0 0.0
        %1224 = vmatprep.subr.mxu0 0.0
        %1225 = vmatpush1.msra.mxu0 0.0
        %1226 = vmatprep.subr.mxu0 0.0
        %1227 = vmatpush1.msra.mxu0 0.0
        %1228 = vmatprep.subr.mxu0 0.0
        %1229 = vmatpush1.msra.mxu0 0.0
        %1230 = vmatprep.subr.mxu0 0.0
        %1231 = vmatpush1.msra.mxu0 0.0
        %1232 = vmatprep.subr.mxu0 0.0
        %1233 = vmatpush1.msra.mxu0 0.0
        %1234 = vmatprep.subr.mxu0 0.0
        %1235 = vmatpush1.msra.mxu0 0.0
        %1236 = vmatprep.subr.mxu0 0.0
        %1237 = vmatpush1.msra.mxu0 0.0
        %1238 = vmatprep.subr.mxu0 0.0
        %1239 = vmatpush1.msra.mxu0 0.0
        %1240 = vmatprep.subr.mxu0 0.0
        %1241 = vmatpush1.msra.mxu0 0.0
        %1242 = vmatprep.subr.mxu0 0.0
        %1243 = vmatpush1.msra.mxu0 0.0
        %1244 = vmatprep.subr.mxu0 0.0
        %1245 = vmatpush1.msra.mxu0 0.0
        %1246 = vmatprep.subr.mxu0 0.0
        %1247 = vmatpush1.msra.mxu0 0.0
        %1248 = vmatprep.subr.mxu0 0.0
        %1249 = vmatpush1.msra.mxu0 %v1213
        %1250 = vmatprep.subr.mxu0 0.0
        %1251 = vmatpush2.msra.mxu0 0.0
        %1252 = vmatprep.subr.mxu0 0.0
        %1253 = vmatpush2.msra.mxu0 0.0
        %1254 = vmatprep.subr.mxu0 0.0
        %1255 = vmatpush2.msra.mxu0 0.0
        %1256 = vmatprep.subr.mxu0 0.0
        %1257 = vmatpush2.msra.mxu0 0.0
        %1258 = vmatprep.subr.mxu0 0.0
        %1259 = vmatpush2.msra.mxu0 0.0
        %1260 = vmatprep.subr.mxu0 0.0
        %1261 = vmatpush2.msra.mxu0 0.0
        %1262 = vmatprep.subr.mxu0 0.0
        %1263 = vmatpush2.msra.mxu0 0.0
        %1264 = vmatprep.subr.mxu0 0.0
        %1265 = vmatpush2.msra.mxu0 0.0
        %1266 = vmatprep.subr.mxu0 0.0
        %1267 = vmatpush2.msra.mxu0 0.0
        %1268 = vmatprep.subr.mxu0 0.0
        %1269 = vmatpush2.msra.mxu0 0.0
        %1270 = vmatprep.subr.mxu0 0.0
        %1271 = vmatpush2.msra.mxu0 0.0
        %1272 = vmatprep.subr.mxu0 0.0
        %1273 = vmatpush2.msra.mxu0 0.0
        %1274 = vmatprep.subr.mxu0 0.0
        %1275 = vmatpush2.msra.mxu0 0.0
        %1276 = vmatprep.subr.mxu0 0.0
        %1277 = vmatpush2.msra.mxu0 0.0
        %1278 = vmatprep.subr.mxu0 0.0
        %1279 = vmatpush2.msra.mxu0 0.0
        %1280 = vmatprep.subr.mxu0 0.0
        %1281 = vmatpush2.msra.mxu0 0.0
        %1282 = vmatprep.mubr.f32.mxu0 0.0
        %1283 = vmatmul.mubr.f32.gmra.mxu0 %v1216
        %v1284 = vpop.f32.mrf.mxu0
        %v1285 = vadd.f32 0.0, %v1284
        %v1286 = vpop.f32.mrf.mxu0
        %1287 = vdwg.mxu0
        %s1288 = scalar_lea.vmem %s2, 16
        %v1289 = vld [vmem:[%s1288] sm:$0xff]
        %v1291 = vsel %vm485, %v1285, 0
        %1293 = vmatprep.subr.mxu0 0.0
        %1294 = vmatpush1.msra.mxu0 0.0
        %1295 = vmatprep.subr.mxu0 0.0
        %1296 = vmatpush1.msra.mxu0 0.0
        %1297 = vmatprep.subr.mxu0 0.0
        %1298 = vmatpush1.msra.mxu0 0.0
        %1299 = vmatprep.subr.mxu0 0.0
        %1300 = vmatpush1.msra.mxu0 0.0
        %1301 = vmatprep.subr.mxu0 0.0
        %1302 = vmatpush1.msra.mxu0 0.0
        %1303 = vmatprep.subr.mxu0 0.0
        %1304 = vmatpush1.msra.mxu0 0.0
        %1305 = vmatprep.subr.mxu0 0.0
        %1306 = vmatpush1.msra.mxu0 0.0
        %1307 = vmatprep.subr.mxu0 0.0
        %1308 = vmatpush1.msra.mxu0 0.0
        %1309 = vmatprep.subr.mxu0 0.0
        %1310 = vmatpush1.msra.mxu0 0.0
        %1311 = vmatprep.subr.mxu0 0.0
        %1312 = vmatpush1.msra.mxu0 0.0
        %1313 = vmatprep.subr.mxu0 0.0
        %1314 = vmatpush1.msra.mxu0 0.0
        %1315 = vmatprep.subr.mxu0 0.0
        %1316 = vmatpush1.msra.mxu0 0.0
        %1317 = vmatprep.subr.mxu0 0.0
        %1318 = vmatpush1.msra.mxu0 0.0
        %1319 = vmatprep.subr.mxu0 0.0
        %1320 = vmatpush1.msra.mxu0 0.0
        %1321 = vmatprep.subr.mxu0 0.0
        %1322 = vmatpush1.msra.mxu0 0.0
        %1323 = vmatprep.subr.mxu0 0.0
        %1324 = vmatpush1.msra.mxu0 %v1289
        %1325 = vmatprep.subr.mxu0 0.0
        %1326 = vmatpush2.msra.mxu0 0.0
        %1327 = vmatprep.subr.mxu0 0.0
        %1328 = vmatpush2.msra.mxu0 0.0
        %1329 = vmatprep.subr.mxu0 0.0
        %1330 = vmatpush2.msra.mxu0 0.0
        %1331 = vmatprep.subr.mxu0 0.0
        %1332 = vmatpush2.msra.mxu0 0.0
        %1333 = vmatprep.subr.mxu0 0.0
        %1334 = vmatpush2.msra.mxu0 0.0
        %1335 = vmatprep.subr.mxu0 0.0
        %1336 = vmatpush2.msra.mxu0 0.0
        %1337 = vmatprep.subr.mxu0 0.0
        %1338 = vmatpush2.msra.mxu0 0.0
        %1339 = vmatprep.subr.mxu0 0.0
        %1340 = vmatpush2.msra.mxu0 0.0
        %1341 = vmatprep.subr.mxu0 0.0
        %1342 = vmatpush2.msra.mxu0 0.0
        %1343 = vmatprep.subr.mxu0 0.0
        %1344 = vmatpush2.msra.mxu0 0.0
        %1345 = vmatprep.subr.mxu0 0.0
        %1346 = vmatpush2.msra.mxu0 0.0
        %1347 = vmatprep.subr.mxu0 0.0
        %1348 = vmatpush2.msra.mxu0 0.0
        %1349 = vmatprep.subr.mxu0 0.0
        %1350 = vmatpush2.msra.mxu0 0.0
        %1351 = vmatprep.subr.mxu0 0.0
        %1352 = vmatpush2.msra.mxu0 0.0
        %1353 = vmatprep.subr.mxu0 0.0
        %1354 = vmatpush2.msra.mxu0 0.0
        %1355 = vmatprep.subr.mxu0 0.0
        %1356 = vmatpush2.msra.mxu0 0.0
        %1357 = vmatprep.mubr.f32.mxu0 0.0
        %1358 = vmatmul.mubr.f32.gmra.mxu0 %v1291
        %v1359 = vpop.f32.mrf.mxu0
        %v1360 = vadd.f32 0.0, %v1359
        %v1361 = vpop.f32.mrf.mxu0
        %1362 = vdwg.mxu0
        %v1363 = vadd.f32 %v1041, %v1360
        %s1364 = scalar_lea.vmem %s1, 96
        %v1365 = vld [vmem:[%s1364] sm:$0xff]
        %v1366 = vld [vmem:[%s1364 + $0x8] sm:$0xff]
        %v1367 = vld [vmem:[%s1364 + $0x10] sm:$0xff]
        %v1368 = vld [vmem:[%s1364 + $0x18] sm:$0xff]
        %1369 = vmatprep.subr.mxu0 0.0
        %1370 = vmatpush1.msra.mxu0 0.0
        %1371 = vmatprep.subr.mxu0 0.0
        %1372 = vmatpush1.msra.mxu0 0.0
        %1373 = vmatprep.subr.mxu0 0.0
        %1374 = vmatpush1.msra.mxu0 0.0
        %1375 = vmatprep.subr.mxu0 0.0
        %1376 = vmatpush1.msra.mxu0 0.0
        %1377 = vmatprep.subr.mxu0 0.0
        %1378 = vmatpush1.msra.mxu0 0.0
        %1379 = vmatprep.subr.mxu0 0.0
        %1380 = vmatpush1.msra.mxu0 0.0
        %1381 = vmatprep.subr.mxu0 0.0
        %1382 = vmatpush1.msra.mxu0 0.0
        %1383 = vmatprep.subr.mxu0 0.0
        %1384 = vmatpush1.msra.mxu0 0.0
        %1385 = vmatprep.subr.mxu0 0.0
        %1386 = vmatpush1.msra.mxu0 0.0
        %1387 = vmatprep.subr.mxu0 0.0
        %1388 = vmatpush1.msra.mxu0 0.0
        %1389 = vmatprep.subr.mxu0 0.0
        %1390 = vmatpush1.msra.mxu0 0.0
        %1391 = vmatprep.subr.mxu0 0.0
        %1392 = vmatpush1.msra.mxu0 0.0
        %1393 = vmatprep.subr.mxu0 0.0
        %1394 = vmatpush1.msra.mxu0 %v1368
        %1395 = vmatprep.subr.mxu0 0.0
        %1396 = vmatpush1.msra.mxu0 %v1367
        %1397 = vmatprep.subr.mxu0 0.0
        %1398 = vmatpush1.msra.mxu0 %v1366
        %1399 = vmatprep.subr.mxu0 0.0
        %1400 = vmatpush1.msra.mxu0 %v1365
        %1401 = vmatprep.subr.mxu0 0.0
        %1402 = vmatpush2.msra.mxu0 0.0
        %1403 = vmatprep.subr.mxu0 0.0
        %1404 = vmatpush2.msra.mxu0 0.0
        %1405 = vmatprep.subr.mxu0 0.0
        %1406 = vmatpush2.msra.mxu0 0.0
        %1407 = vmatprep.subr.mxu0 0.0
        %1408 = vmatpush2.msra.mxu0 0.0
        %1409 = vmatprep.subr.mxu0 0.0
        %1410 = vmatpush2.msra.mxu0 0.0
        %1411 = vmatprep.subr.mxu0 0.0
        %1412 = vmatpush2.msra.mxu0 0.0
        %1413 = vmatprep.subr.mxu0 0.0
        %1414 = vmatpush2.msra.mxu0 0.0
        %1415 = vmatprep.subr.mxu0 0.0
        %1416 = vmatpush2.msra.mxu0 0.0
        %1417 = vmatprep.subr.mxu0 0.0
        %1418 = vmatpush2.msra.mxu0 0.0
        %1419 = vmatprep.subr.mxu0 0.0
        %1420 = vmatpush2.msra.mxu0 0.0
        %1421 = vmatprep.subr.mxu0 0.0
        %1422 = vmatpush2.msra.mxu0 0.0
        %1423 = vmatprep.subr.mxu0 0.0
        %1424 = vmatpush2.msra.mxu0 0.0
        %1425 = vmatprep.subr.mxu0 0.0
        %1426 = vmatpush2.msra.mxu0 0.0
        %1427 = vmatprep.subr.mxu0 0.0
        %1428 = vmatpush2.msra.mxu0 0.0
        %1429 = vmatprep.subr.mxu0 0.0
        %1430 = vmatpush2.msra.mxu0 0.0
        %1431 = vmatprep.subr.mxu0 0.0
        %1432 = vmatpush2.msra.mxu0 0.0
        %1433 = vmatprep.mubr.f32.mxu0 0.0
        %1434 = vmatmul.mubr.f32.gmra.mxu0 %v409
        %v1435 = vpop.f32.mrf.mxu0
        %v1436 = vadd.f32 0.0, %v1435
        %v1437 = vpop.f32.mrf.mxu0
        %1438 = vdwg.mxu0
        %v1439 = vmul.f32 %v1436, 0.35355338
        %1441 = vrot.lane.b32.xlu0 %v1436, 120
        %v1442 = vpop.permute.xlu0 %1441
        %v1444 = vsel %vm485, %v1439, 0
        %v1446 = vsel %vm485, %v1442, 0
        %1448 = vmatprep.subr.mxu0 0.0
        %1449 = vmatpush1.xpose.msra.mxu0 0.0
        %1450 = vmatprep.subr.mxu0 0.0
        %1451 = vmatpush1.xpose.msra.mxu0 0.0
        %1452 = vmatprep.subr.mxu0 0.0
        %1453 = vmatpush1.xpose.msra.mxu0 0.0
        %1454 = vmatprep.subr.mxu0 0.0
        %1455 = vmatpush1.xpose.msra.mxu0 0.0
        %1456 = vmatprep.subr.mxu0 0.0
        %1457 = vmatpush1.xpose.msra.mxu0 0.0
        %1458 = vmatprep.subr.mxu0 0.0
        %1459 = vmatpush1.xpose.msra.mxu0 0.0
        %1460 = vmatprep.subr.mxu0 0.0
        %1461 = vmatpush1.xpose.msra.mxu0 0.0
        %1462 = vmatprep.subr.mxu0 0.0
        %1463 = vmatpush1.xpose.msra.mxu0 0.0
        %1464 = vmatprep.subr.mxu0 0.0
        %1465 = vmatpush1.xpose.msra.mxu0 0.0
        %1466 = vmatprep.subr.mxu0 0.0
        %1467 = vmatpush1.xpose.msra.mxu0 0.0
        %1468 = vmatprep.subr.mxu0 0.0
        %1469 = vmatpush1.xpose.msra.mxu0 0.0
        %1470 = vmatprep.subr.mxu0 0.0
        %1471 = vmatpush1.xpose.msra.mxu0 0.0
        %1472 = vmatprep.subr.mxu0 0.0
        %1473 = vmatpush1.xpose.msra.mxu0 0.0
        %1474 = vmatprep.subr.mxu0 0.0
        %1475 = vmatpush1.xpose.msra.mxu0 0.0
        %1476 = vmatprep.subr.mxu0 0.0
        %1477 = vmatpush1.xpose.msra.mxu0 0.0
        %1478 = vmatprep.subr.mxu0 0.0
        %1479 = vmatpush1.xpose.msra.mxu0 %v1446
        %1480 = vmatprep.subr.mxu0 0.0
        %1481 = vmatpush2.xpose.msra.mxu0 0.0
        %1482 = vmatprep.subr.mxu0 0.0
        %1483 = vmatpush2.xpose.msra.mxu0 0.0
        %1484 = vmatprep.subr.mxu0 0.0
        %1485 = vmatpush2.xpose.msra.mxu0 0.0
        %1486 = vmatprep.subr.mxu0 0.0
        %1487 = vmatpush2.xpose.msra.mxu0 0.0
        %1488 = vmatprep.subr.mxu0 0.0
        %1489 = vmatpush2.xpose.msra.mxu0 0.0
        %1490 = vmatprep.subr.mxu0 0.0
        %1491 = vmatpush2.xpose.msra.mxu0 0.0
        %1492 = vmatprep.subr.mxu0 0.0
        %1493 = vmatpush2.xpose.msra.mxu0 0.0
        %1494 = vmatprep.subr.mxu0 0.0
        %1495 = vmatpush2.xpose.msra.mxu0 0.0
        %1496 = vmatprep.subr.mxu0 0.0
        %1497 = vmatpush2.xpose.msra.mxu0 0.0
        %1498 = vmatprep.subr.mxu0 0.0
        %1499 = vmatpush2.xpose.msra.mxu0 0.0
        %1500 = vmatprep.subr.mxu0 0.0
        %1501 = vmatpush2.xpose.msra.mxu0 0.0
        %1502 = vmatprep.subr.mxu0 0.0
        %1503 = vmatpush2.xpose.msra.mxu0 0.0
        %1504 = vmatprep.subr.mxu0 0.0
        %1505 = vmatpush2.xpose.msra.mxu0 0.0
        %1506 = vmatprep.subr.mxu0 0.0
        %1507 = vmatpush2.xpose.msra.mxu0 0.0
        %1508 = vmatprep.subr.mxu0 0.0
        %1509 = vmatpush2.xpose.msra.mxu0 0.0
        %1510 = vmatprep.subr.mxu0 0.0
        %1511 = vmatpush2.xpose.msra.mxu0 0.0
        %1512 = vmatprep.mubr.f32.mxu0 0.0
        %1513 = vmatmul.mubr.f32.gmra.mxu0 %v1444
        %v1514 = vpop.f32.mrf.mxu0
        %v1515 = vadd.f32 0.0, %v1514
        %v1516 = vpop.f32.mrf.mxu0
        %1517 = vdwg.mxu0
        %v1518 = vsel %vm485, %v1515, -inf
        %1519 = vmax.xlane.f32.xlu0 %v1518
        %v1520 = vpop.xlane.xlu0 %1519
        %v1521 = vsub.f32 %v1515, %v1520
        %v1522 = vmul.f32 %v1521, 1.442695
        %v1523 = vpow.pop %v1522
        %v1524 = vsel %vm485, %v1523, 0.0
        %1525 = vadd.xlane.f32.xlu0 %v1524
        %v1526 = vpop.xlane.xlu0 %1525
        %v1527 = vrcp.pop %v1526
        %v1528 = vmul.f32 %v1526, %v1527
        %v1529 = vsub.f32 2.0, %v1528
        %v1530 = vmul.f32 %v1527, %v1529
        %v1531 = vmul.f32 %v1523, %v1530
        %1532 = vrot.lane.b32.xlu0 %v1436, 112
        %v1533 = vpop.permute.xlu0 %1532
        %v1536 = vsel %vm485, %v1531, 0
        %1538 = vmatprep.subr.mxu0 0.0
        %1539 = vmatpush1.msra.mxu0 0.0
        %1540 = vmatprep.subr.mxu0 0.0
        %1541 = vmatpush1.msra.mxu0 0.0
        %1542 = vmatprep.subr.mxu0 0.0
        %1543 = vmatpush1.msra.mxu0 0.0
        %1544 = vmatprep.subr.mxu0 0.0
        %1545 = vmatpush1.msra.mxu0 0.0
        %1546 = vmatprep.subr.mxu0 0.0
        %1547 = vmatpush1.msra.mxu0 0.0
        %1548 = vmatprep.subr.mxu0 0.0
        %1549 = vmatpush1.msra.mxu0 0.0
        %1550 = vmatprep.subr.mxu0 0.0
        %1551 = vmatpush1.msra.mxu0 0.0
        %1552 = vmatprep.subr.mxu0 0.0
        %1553 = vmatpush1.msra.mxu0 0.0
        %1554 = vmatprep.subr.mxu0 0.0
        %1555 = vmatpush1.msra.mxu0 0.0
        %1556 = vmatprep.subr.mxu0 0.0
        %1557 = vmatpush1.msra.mxu0 0.0
        %1558 = vmatprep.subr.mxu0 0.0
        %1559 = vmatpush1.msra.mxu0 0.0
        %1560 = vmatprep.subr.mxu0 0.0
        %1561 = vmatpush1.msra.mxu0 0.0
        %1562 = vmatprep.subr.mxu0 0.0
        %1563 = vmatpush1.msra.mxu0 0.0
        %1564 = vmatprep.subr.mxu0 0.0
        %1565 = vmatpush1.msra.mxu0 0.0
        %1566 = vmatprep.subr.mxu0 0.0
        %1567 = vmatpush1.msra.mxu0 0.0
        %1568 = vmatprep.subr.mxu0 0.0
        %1569 = vmatpush1.msra.mxu0 %v1533
        %1570 = vmatprep.subr.mxu0 0.0
        %1571 = vmatpush2.msra.mxu0 0.0
        %1572 = vmatprep.subr.mxu0 0.0
        %1573 = vmatpush2.msra.mxu0 0.0
        %1574 = vmatprep.subr.mxu0 0.0
        %1575 = vmatpush2.msra.mxu0 0.0
        %1576 = vmatprep.subr.mxu0 0.0
        %1577 = vmatpush2.msra.mxu0 0.0
        %1578 = vmatprep.subr.mxu0 0.0
        %1579 = vmatpush2.msra.mxu0 0.0
        %1580 = vmatprep.subr.mxu0 0.0
        %1581 = vmatpush2.msra.mxu0 0.0
        %1582 = vmatprep.subr.mxu0 0.0
        %1583 = vmatpush2.msra.mxu0 0.0
        %1584 = vmatprep.subr.mxu0 0.0
        %1585 = vmatpush2.msra.mxu0 0.0
        %1586 = vmatprep.subr.mxu0 0.0
        %1587 = vmatpush2.msra.mxu0 0.0
        %1588 = vmatprep.subr.mxu0 0.0
        %1589 = vmatpush2.msra.mxu0 0.0
        %1590 = vmatprep.subr.mxu0 0.0
        %1591 = vmatpush2.msra.mxu0 0.0
        %1592 = vmatprep.subr.mxu0 0.0
        %1593 = vmatpush2.msra.mxu0 0.0
        %1594 = vmatprep.subr.mxu0 0.0
        %1595 = vmatpush2.msra.mxu0 0.0
        %1596 = vmatprep.subr.mxu0 0.0
        %1597 = vmatpush2.msra.mxu0 0.0
        %1598 = vmatprep.subr.mxu0 0.0
        %1599 = vmatpush2.msra.mxu0 0.0
        %1600 = vmatprep.subr.mxu0 0.0
        %1601 = vmatpush2.msra.mxu0 0.0
        %1602 = vmatprep.mubr.f32.mxu0 0.0
        %1603 = vmatmul.mubr.f32.gmra.mxu0 %v1536
        %v1604 = vpop.f32.mrf.mxu0
        %v1605 = vadd.f32 0.0, %v1604
        %v1606 = vpop.f32.mrf.mxu0
        %1607 = vdwg.mxu0
        %s1608 = scalar_lea.vmem %s2, 24
        %v1609 = vld [vmem:[%s1608] sm:$0xff]
        %v1611 = vsel %vm485, %v1605, 0
        %1613 = vmatprep.subr.mxu0 0.0
        %1614 = vmatpush1.msra.mxu0 0.0
        %1615 = vmatprep.subr.mxu0 0.0
        %1616 = vmatpush1.msra.mxu0 0.0
        %1617 = vmatprep.subr.mxu0 0.0
        %1618 = vmatpush1.msra.mxu0 0.0
        %1619 = vmatprep.subr.mxu0 0.0
        %1620 = vmatpush1.msra.mxu0 0.0
        %1621 = vmatprep.subr.mxu0 0.0
        %1622 = vmatpush1.msra.mxu0 0.0
        %1623 = vmatprep.subr.mxu0 0.0
        %1624 = vmatpush1.msra.mxu0 0.0
        %1625 = vmatprep.subr.mxu0 0.0
        %1626 = vmatpush1.msra.mxu0 0.0
        %1627 = vmatprep.subr.mxu0 0.0
        %1628 = vmatpush1.msra.mxu0 0.0
        %1629 = vmatprep.subr.mxu0 0.0
        %1630 = vmatpush1.msra.mxu0 0.0
        %1631 = vmatprep.subr.mxu0 0.0
        %1632 = vmatpush1.msra.mxu0 0.0
        %1633 = vmatprep.subr.mxu0 0.0
        %1634 = vmatpush1.msra.mxu0 0.0
        %1635 = vmatprep.subr.mxu0 0.0
        %1636 = vmatpush1.msra.mxu0 0.0
        %1637 = vmatprep.subr.mxu0 0.0
        %1638 = vmatpush1.msra.mxu0 0.0
        %1639 = vmatprep.subr.mxu0 0.0
        %1640 = vmatpush1.msra.mxu0 0.0
        %1641 = vmatprep.subr.mxu0 0.0
        %1642 = vmatpush1.msra.mxu0 0.0
        %1643 = vmatprep.subr.mxu0 0.0
        %1644 = vmatpush1.msra.mxu0 %v1609
        %1645 = vmatprep.subr.mxu0 0.0
        %1646 = vmatpush2.msra.mxu0 0.0
        %1647 = vmatprep.subr.mxu0 0.0
        %1648 = vmatpush2.msra.mxu0 0.0
        %1649 = vmatprep.subr.mxu0 0.0
        %1650 = vmatpush2.msra.mxu0 0.0
        %1651 = vmatprep.subr.mxu0 0.0
        %1652 = vmatpush2.msra.mxu0 0.0
        %1653 = vmatprep.subr.mxu0 0.0
        %1654 = vmatpush2.msra.mxu0 0.0
        %1655 = vmatprep.subr.mxu0 0.0
        %1656 = vmatpush2.msra.mxu0 0.0
        %1657 = vmatprep.subr.mxu0 0.0
        %1658 = vmatpush2.msra.mxu0 0.0
        %1659 = vmatprep.subr.mxu0 0.0
        %1660 = vmatpush2.msra.mxu0 0.0
        %1661 = vmatprep.subr.mxu0 0.0
        %1662 = vmatpush2.msra.mxu0 0.0
        %1663 = vmatprep.subr.mxu0 0.0
        %1664 = vmatpush2.msra.mxu0 0.0
        %1665 = vmatprep.subr.mxu0 0.0
        %1666 = vmatpush2.msra.mxu0 0.0
        %1667 = vmatprep.subr.mxu0 0.0
        %1668 = vmatpush2.msra.mxu0 0.0
        %1669 = vmatprep.subr.mxu0 0.0
        %1670 = vmatpush2.msra.mxu0 0.0
        %1671 = vmatprep.subr.mxu0 0.0
        %1672 = vmatpush2.msra.mxu0 0.0
        %1673 = vmatprep.subr.mxu0 0.0
        %1674 = vmatpush2.msra.mxu0 0.0
        %1675 = vmatprep.subr.mxu0 0.0
        %1676 = vmatpush2.msra.mxu0 0.0
        %1677 = vmatprep.mubr.f32.mxu0 0.0
        %1678 = vmatmul.mubr.f32.gmra.mxu0 %v1611
        %v1679 = vpop.f32.mrf.mxu0
        %v1680 = vadd.f32 0.0, %v1679
        %v1681 = vpop.f32.mrf.mxu0
        %1682 = vdwg.mxu0
        %v1683 = vadd.f32 %v1363, %v1680
        %v1684 = vadd.f32 %v1683, %v402
        %v1685 = vld [vmem:[%s3] sm:$0x1]
        %v1686 = vld [vmem:[%s4] sm:$0x1]
        %v1687 = vsel %vm407, %v1684, 0.0
        %1688 = vadd.xlane.f32.xlu0 %v1687
        %v1689 = vpop.xlane.xlu0 %1688
        %v1690 = vrcp.pop 32.0
        %v1691 = vmul.f32 %v1689, %v1690
        %v1692 = vsub.f32 %v1684, %v1691
        %v1693 = vmul.f32 %v1692, %v1692
        %v1694 = vsel %vm407, %v1693, 0.0
        %1695 = vadd.xlane.f32.xlu0 %v1694
        %v1696 = vpop.xlane.xlu0 %1695
        %v1697 = vmul.f32 %v1696, %v1690
        %v1698 = vadd.f32 %v1697, 1e-06
        %v1699 = vrsqrt.pop %v1698
        %v1700 = vmul.f32 %v1692, %v1699
        %v1702 = vlaneseq
        %v1703 = vshrl.u32 %v1702, 7
        %v1704 = vsub.s32 0, %v1703
        %v1705 = vrot.slane %v1685, %v1704
        %v1707 = vmul.f32 %v1700, %v1705
        %v1709 = vlaneseq
        %v1710 = vshrl.u32 %v1709, 7
        %v1711 = vsub.s32 0, %v1710
        %v1712 = vrot.slane %v1686, %v1711
        %v1714 = vadd.f32 %v1707, %v1712
        %v1715 = vld [vmem:[%s5] sm:$0xff]
        %v1716 = vld [vmem:[%s5 + $0x8] sm:$0xff]
        %v1717 = vld [vmem:[%s5 + $0x10] sm:$0xff]
        %v1718 = vld [vmem:[%s5 + $0x18] sm:$0xff]
        %v1719 = vld [vmem:[%s6] sm:$0x1]
        %v1721 = vlaneseq
        %v1722 = vshrl.u32 %v1721, 7
        %v1723 = vsub.s32 0, %v1722
        %v1724 = vrot.slane %v1719, %v1723
        %v1727 = vsel %vm407, %v1714, 0
        %1729 = vmatprep.subr.mxu0 0.0
        %1730 = vmatpush1.msra.mxu0 0.0
        %1731 = vmatprep.subr.mxu0 0.0
        %1732 = vmatpush1.msra.mxu0 0.0
        %1733 = vmatprep.subr.mxu0 0.0
        %1734 = vmatpush1.msra.mxu0 0.0
        %1735 = vmatprep.subr.mxu0 0.0
        %1736 = vmatpush1.msra.mxu0 0.0
        %1737 = vmatprep.subr.mxu0 0.0
        %1738 = vmatpush1.msra.mxu0 0.0
        %1739 = vmatprep.subr.mxu0 0.0
        %1740 = vmatpush1.msra.mxu0 0.0
        %1741 = vmatprep.subr.mxu0 0.0
        %1742 = vmatpush1.msra.mxu0 0.0
        %1743 = vmatprep.subr.mxu0 0.0
        %1744 = vmatpush1.msra.mxu0 0.0
        %1745 = vmatprep.subr.mxu0 0.0
        %1746 = vmatpush1.msra.mxu0 0.0
        %1747 = vmatprep.subr.mxu0 0.0
        %1748 = vmatpush1.msra.mxu0 0.0
        %1749 = vmatprep.subr.mxu0 0.0
        %1750 = vmatpush1.msra.mxu0 0.0
        %1751 = vmatprep.subr.mxu0 0.0
        %1752 = vmatpush1.msra.mxu0 0.0
        %1753 = vmatprep.subr.mxu0 0.0
        %1754 = vmatpush1.msra.mxu0 %v1718
        %1755 = vmatprep.subr.mxu0 0.0
        %1756 = vmatpush1.msra.mxu0 %v1717
        %1757 = vmatprep.subr.mxu0 0.0
        %1758 = vmatpush1.msra.mxu0 %v1716
        %1759 = vmatprep.subr.mxu0 0.0
        %1760 = vmatpush1.msra.mxu0 %v1715
        %1761 = vmatprep.subr.mxu0 0.0
        %1762 = vmatpush2.msra.mxu0 0.0
        %1763 = vmatprep.subr.mxu0 0.0
        %1764 = vmatpush2.msra.mxu0 0.0
        %1765 = vmatprep.subr.mxu0 0.0
        %1766 = vmatpush2.msra.mxu0 0.0
        %1767 = vmatprep.subr.mxu0 0.0
        %1768 = vmatpush2.msra.mxu0 0.0
        %1769 = vmatprep.subr.mxu0 0.0
        %1770 = vmatpush2.msra.mxu0 0.0
        %1771 = vmatprep.subr.mxu0 0.0
        %1772 = vmatpush2.msra.mxu0 0.0
        %1773 = vmatprep.subr.mxu0 0.0
        %1774 = vmatpush2.msra.mxu0 0.0
        %1775 = vmatprep.subr.mxu0 0.0
        %1776 = vmatpush2.msra.mxu0 0.0
        %1777 = vmatprep.subr.mxu0 0.0
        %1778 = vmatpush2.msra.mxu0 0.0
        %1779 = vmatprep.subr.mxu0 0.0
        %1780 = vmatpush2.msra.mxu0 0.0
        %1781 = vmatprep.subr.mxu0 0.0
        %1782 = vmatpush2.msra.mxu0 0.0
        %1783 = vmatprep.subr.mxu0 0.0
        %1784 = vmatpush2.msra.mxu0 0.0
        %1785 = vmatprep.subr.mxu0 0.0
        %1786 = vmatpush2.msra.mxu0 0.0
        %1787 = vmatprep.subr.mxu0 0.0
        %1788 = vmatpush2.msra.mxu0 0.0
        %1789 = vmatprep.subr.mxu0 0.0
        %1790 = vmatpush2.msra.mxu0 0.0
        %1791 = vmatprep.subr.mxu0 0.0
        %1792 = vmatpush2.msra.mxu0 0.0
        %1793 = vmatprep.mubr.f32.mxu0 0.0
        %1794 = vmatmul.mubr.f32.gmra.mxu0 %v1727
        %v1795 = vpop.f32.mrf.mxu0
        %v1796 = vadd.f32 %v1724, %v1795
        %v1797 = vpop.f32.mrf.mxu0
        %1798 = vdwg.mxu0
        %v1799 = vmax.f32 %v1796, 0.0
        %v1800 = vld [vmem:[%s7] sm:$0xff]
        %v1801 = vld [vmem:[%s7 + $0x8] sm:$0xff]
        %v1802 = vld [vmem:[%s7 + $0x10] sm:$0xff]
        %v1803 = vld [vmem:[%s7 + $0x18] sm:$0xff]
        %v1804 = vld [vmem:[%s7 + $0x20] sm:$0xff]
        %v1805 = vld [vmem:[%s7 + $0x28] sm:$0xff]
        %v1806 = vld [vmem:[%s7 + $0x30] sm:$0xff]
        %v1807 = vld [vmem:[%s7 + $0x38] sm:$0xff]
        %v1808 = vld [vmem:[%s8] sm:$0x1]
        %v1810 = vlaneseq
        %v1811 = vshrl.u32 %v1810, 7
        %v1812 = vsub.s32 0, %v1811
        %v1813 = vrot.slane %v1808, %v1812
        %vm1815 = vcmask 523264
        %v1817 = vsel %vm1815, %v1799, 0
        %1819 = vmatprep.subr.mxu0 0.0
        %1820 = vmatpush1.msra.mxu0 0.0
        %1821 = vmatprep.subr.mxu0 0.0
        %1822 = vmatpush1.msra.mxu0 0.0
        %1823 = vmatprep.subr.mxu0 0.0
        %1824 = vmatpush1.msra.mxu0 0.0
        %1825 = vmatprep.subr.mxu0 0.0
        %1826 = vmatpush1.msra.mxu0 0.0
        %1827 = vmatprep.subr.mxu0 0.0
        %1828 = vmatpush1.msra.mxu0 0.0
        %1829 = vmatprep.subr.mxu0 0.0
        %1830 = vmatpush1.msra.mxu0 0.0
        %1831 = vmatprep.subr.mxu0 0.0
        %1832 = vmatpush1.msra.mxu0 0.0
        %1833 = vmatprep.subr.mxu0 0.0
        %1834 = vmatpush1.msra.mxu0 0.0
        %1835 = vmatprep.subr.mxu0 0.0
        %1836 = vmatpush1.msra.mxu0 %v1807
        %1837 = vmatprep.subr.mxu0 0.0
        %1838 = vmatpush1.msra.mxu0 %v1806
        %1839 = vmatprep.subr.mxu0 0.0
        %1840 = vmatpush1.msra.mxu0 %v1805
        %1841 = vmatprep.subr.mxu0 0.0
        %1842 = vmatpush1.msra.mxu0 %v1804
        %1843 = vmatprep.subr.mxu0 0.0
        %1844 = vmatpush1.msra.mxu0 %v1803
        %1845 = vmatprep.subr.mxu0 0.0
        %1846 = vmatpush1.msra.mxu0 %v1802
        %1847 = vmatprep.subr.mxu0 0.0
        %1848 = vmatpush1.msra.mxu0 %v1801
        %1849 = vmatprep.subr.mxu0 0.0
        %1850 = vmatpush1.msra.mxu0 %v1800
        %1851 = vmatprep.subr.mxu0 0.0
        %1852 = vmatpush2.msra.mxu0 0.0
        %1853 = vmatprep.subr.mxu0 0.0
        %1854 = vmatpush2.msra.mxu0 0.0
        %1855 = vmatprep.subr.mxu0 0.0
        %1856 = vmatpush2.msra.mxu0 0.0
        %1857 = vmatprep.subr.mxu0 0.0
        %1858 = vmatpush2.msra.mxu0 0.0
        %1859 = vmatprep.subr.mxu0 0.0
        %1860 = vmatpush2.msra.mxu0 0.0
        %1861 = vmatprep.subr.mxu0 0.0
        %1862 = vmatpush2.msra.mxu0 0.0
        %1863 = vmatprep.subr.mxu0 0.0
        %1864 = vmatpush2.msra.mxu0 0.0
        %1865 = vmatprep.subr.mxu0 0.0
        %1866 = vmatpush2.msra.mxu0 0.0
        %1867 = vmatprep.subr.mxu0 0.0
        %1868 = vmatpush2.msra.mxu0 0.0
        %1869 = vmatprep.subr.mxu0 0.0
        %1870 = vmatpush2.msra.mxu0 0.0
        %1871 = vmatprep.subr.mxu0 0.0
        %1872 = vmatpush2.msra.mxu0 0.0
        %1873 = vmatprep.subr.mxu0 0.0
        %1874 = vmatpush2.msra.mxu0 0.0
        %1875 = vmatprep.subr.mxu0 0.0
        %1876 = vmatpush2.msra.mxu0 0.0
        %1877 = vmatprep.subr.mxu0 0.0
        %1878 = vmatpush2.msra.mxu0 0.0
        %1879 = vmatprep.subr.mxu0 0.0
        %1880 = vmatpush2.msra.mxu0 0.0
        %1881 = vmatprep.subr.mxu0 0.0
        %1882 = vmatpush2.msra.mxu0 0.0
        %1883 = vmatprep.mubr.f32.mxu0 0.0
        %1884 = vmatmul.mubr.f32.gmra.mxu0 %v1817
        %v1885 = vpop.f32.mrf.mxu0
        %v1886 = vadd.f32 %v1813, %v1885
        %v1887 = vpop.f32.mrf.mxu0
        %1888 = vdwg.mxu0
        %v1889 = vadd.f32 %v1886, %v1714
        %v1890 = vld [vmem:[%s9] sm:$0x1]
        %v1891 = vld [vmem:[%s10] sm:$0x1]
        %v1892 = vsel %vm407, %v1889, 0.0
        %1893 = vadd.xlane.f32.xlu0 %v1892
        %v1894 = vpop.xlane.xlu0 %1893
        %v1895 = vmul.f32 %v1894, %v1690
        %v1896 = vsub.f32 %v1889, %v1895
        %v1897 = vmul.f32 %v1896, %v1896
        %v1898 = vsel %vm407, %v1897, 0.0
        %1899 = vadd.xlane.f32.xlu0 %v1898
        %v1900 = vpop.xlane.xlu0 %1899
        %v1901 = vmul.f32 %v1900, %v1690
        %v1902 = vadd.f32 %v1901, 1e-06
        %v1903 = vrsqrt.pop %v1902
        %v1904 = vmul.f32 %v1896, %v1903
        %v1906 = vlaneseq
        %v1907 = vshrl.u32 %v1906, 7
        %v1908 = vsub.s32 0, %v1907
        %v1909 = vrot.slane %v1890, %v1908
        %v1911 = vmul.f32 %v1904, %v1909
        %v1913 = vlaneseq
        %v1914 = vshrl.u32 %v1913, 7
        %v1915 = vsub.s32 0, %v1914
        %v1916 = vrot.slane %v1891, %v1915
        %v1918 = vadd.f32 %v1911, %v1916
        %1919 = vst.msk [vmem:[%s401] sm:$0xff] %vm407, %v1918
        %s1920 = sand.u32 %s272, 1
        %s1921 = scalar_lea.sflag [#allocation4], %s1920
        %s1922 = sand.u32 %s272, 1
        %s1923 = smul.addr %s1922, 8
        %s1924 = scalar_lea.vmem [#allocation5], %s1923
        // Predicated region
        $region69: #{forward.5} parent=63 // pred_check
          %p1925 = pneg %p282
        $region70: #{forward.5} parent=63 // pred_check_branch
          %1927 = sbr.rel (%p1925) target = $region72
        $region71: #{forward.5} parent=63 // pred_region
          %s1929 = ssub.s32 128, 128
          %1930 = vsyncadd %s1921, %s1929
          %s1931 = smul.addr %s28, 128
          %s1932 = scalar_lea.hbm %s11, %s1931
          %s1934 = sshll.u32 %s1924, 4
          %s1935 = int_to_ptr.vmem [resolvable:$true] %s1934
          %1937 = dma.vmem_to_hbm [thread:$0]  %s1935, 128, %s1932, %s1921
        $region72: #{forward.5} parent=63 // pred_fallthru
          _
      $region64: #{forward.5} parent=5 // pred_fallthru
        _
      %p1938 = scmp.le.s32.totalorder 2, %s23
      // Predicated region
      $region73: #{forward.5} parent=5 // pred_check
        %p1939 = pneg %p1938
      $region74: #{forward.5} parent=5 // pred_check_branch
        %1941 = sbr.rel (%p1939) target = $region76
      $region75: #{forward.5} parent=5 // pred_region
        %s1942 = ssub.s32 %s23, 2
        // Predicated region
        $region77: #{forward.5} parent=75 // pred_check
          %p1943 = pneg %p288
        $region78: #{forward.5} parent=75 // pred_check_branch
          %1945 = sbr.rel (%p1943) target = $region80
        $region79: #{forward.5} parent=75 // pred_region
          %s1946 = sand.u32 %s273, 1
          %s1947 = scalar_lea.sflag [#allocation4], %s1946
          %s1948 = sand.u32 %s273, 1
          %s1949 = smul.addr %s1948, 8
          %s1950 = scalar_lea.vmem [#allocation5], %s1949
          %1951 = dma.done %s1947, 128
        $region80: #{forward.5} parent=75 // pred_fallthru
          _
      $region76: #{forward.5} parent=5 // pred_fallthru
        _
    $region6: #{forward.5} parent=1 // loop_footer
      %s27 = sadd.s32 1, %s23
    $region7: #{forward.5} parent=1 // loop_footer_branch
      %22 = sbr.rel target = $region3
    $region8: #{forward.5} parent=1 // loop_exit
      _
    %1952 = vsyncpa [#allocation3], 1
    %s1953 = scalar_lea.sflag [#allocation3], 1
    %1954 = vsyncpa %s1953, 1
    %1955 = vsyncpa [#allocation4], 1
    %s1956 = scalar_lea.sflag [#allocation4], 1
    %1957 = vsyncpa %s1956, 1

</llo_original>
